<compile_context>
chip_gen: v7x
topology: tpu7x:2x2x1
jax: 0.10.0
libtpu: 0.0.40
codegen_flags: <defaults>
</compile_context>

<pallas_src>
import functools
import numpy as np
import jax
import jax.numpy as jnp
from jax.experimental import pallas as pl
from jax.experimental.pallas import tpu as pltpu


# ----------------------------------------------------------------------------- #
# Helpers
# ----------------------------------------------------------------------------- #
def _round_up(x, m):
    return (x + m - 1) // m * m


def _pick_th(H):
    """Output-row tile height: aim for >=8 grid steps (megacore balance, deeper
    pipelining, smaller live accumulators)."""
    for g in (8, 4, 2, 1):
        if H % g == 0 and (H // g) % 8 == 0:
            return H // g
    return H


_CPARAMS = pltpu.CompilerParams(
    dimension_semantics=("parallel",),
    vmem_limit_bytes=48 * 1024 * 1024,   # safe on v7x (64 MiB physical per TC)
)


def _cost(flops, bytes_):
    return pl.CostEstimate(flops=int(flops), transcendentals=0,
                           bytes_accessed=int(bytes_))


# ----------------------------------------------------------------------------- #
# One-time feature probes (tiny kernels).  They let us keep the fast path when the
# running JAX/Mosaic supports it and fall back to the previously-validated path
# otherwise, so the script always compiles and runs.
# ----------------------------------------------------------------------------- #
_BUFFERED1_OK = None
_CONCAT_OK = None


def _buffered1_ok():
    """Can a grid-invariant resident block be single-buffered (pl.Buffered(1))?"""
    global _BUFFERED1_OK
    if _BUFFERED1_OK is None:
        try:
            def k(x_ref, o_ref):
                o_ref[...] = x_ref[pl.ds(pl.program_id(0) * 8, 8), :] * 2.0

            f = pl.pallas_call(
                k,
                out_shape=jax.ShapeDtypeStruct((16, 128), jnp.float32),
                grid=(2,),
                in_specs=[pl.BlockSpec((16, 128), lambda i: (0, 0),
                                       pipeline_mode=pl.Buffered(1))],
                out_specs=pl.BlockSpec((8, 128), lambda i: (i, 0)),
            )
            x = jnp.arange(16 * 128, dtype=jnp.float32).reshape(16, 128)
            y = jax.block_until_ready(f(x))
            _BUFFERED1_OK = bool(jnp.allclose(y, 2.0 * x))
        except Exception:
            _BUFFERED1_OK = False
    return _BUFFERED1_OK


def _concat_ok():
    """Can we lane-concatenate 9 bf16 taps (K-packing) inside a kernel?"""
    global _CONCAT_OK
    if _CONCAT_OK is None:
        try:
            def k(x_ref, w_ref, o_ref):
                taps = [x_ref[:, pl.ds(j, 16), :].reshape(128, 32) for j in range(9)]
                packed = jnp.concatenate(taps, axis=-1)
                o_ref[...] = jnp.dot(packed, w_ref[...],
                                     preferred_element_type=jnp.float32)

            kx = jax.random.PRNGKey(123)
            x = jax.random.normal(kx, (8, 24, 32), jnp.float32).astype(jnp.bfloat16)
            w = jax.random.normal(jax.random.fold_in(kx, 1), (288, 32),
                                  jnp.float32).astype(jnp.bfloat16)
            y = pl.pallas_call(
                k, out_shape=jax.ShapeDtypeStruct((128, 32), jnp.float32),
            )(x, w)
            y = jax.block_until_ready(y)
            taps = [x[:, j:j + 16, :].reshape(128, 32) for j in range(9)]
            ref = (jnp.concatenate(taps, axis=-1).astype(jnp.float32)
                   @ w.astype(jnp.float32))
            _CONCAT_OK = bool(jnp.allclose(y, ref, rtol=5e-2, atol=5e-2))
        except Exception:
            _CONCAT_OK = False
    return _CONCAT_OK


def _pack_mode(cin):
    """3x3 tap-packing factor along the contraction (K) dimension."""
    if not _concat_ok():
        return 1                        # fallback: 9 separate K=Cin matmuls
    return 9 if 3 * cin < 256 else 3    # K = 9*Cin (Cin=32/64) or 3*Cin (Cin>=128)


def _pack_weight(w, pack):
    """Host-side reshape of a (9, Cin, Cout) conv weight matching the tap packing."""
    if pack == 1:
        return w
    _, cin, cout = w.shape
    if pack == 9:
        return w.reshape(9 * cin, cout)
    return w.reshape(3, 3 * cin, cout)


def _packed_w_shape(cin, cout, pack):
    if pack == 1:
        return (9, cin, cout)
    if pack == 9:
        return (9 * cin, cout)
    return (3, 3 * cin, cout)


def _const_spec(shape, single_buffer=False):
    """BlockSpec for a grid-invariant (resident) operand."""
    zeros = (0,) * len(shape)
    index_map = lambda i, _z=zeros: _z
    if single_buffer and _buffered1_ok():
        return pl.BlockSpec(shape, index_map, pipeline_mode=pl.Buffered(1))
    return pl.BlockSpec(shape, index_map)


# ----------------------------------------------------------------------------- #
# In-kernel packed 3x3 conv (shared by the conv and BasicBlock kernels)
# ----------------------------------------------------------------------------- #
def _packed_conv3x3(src_ref, w_ref, r0, th, W, d, pack, cin):
    """f32 (th*W, Cout) = dilated 3x3 conv of a row band via K-packed MXU matmuls."""
    M = th * W

    def taps(ki):
        return [src_ref[pl.ds(r0 + ki * d, th), pl.ds(kj * d, W), :].reshape(M, cin)
                for kj in range(3)]

    if pack == 9:                              # K = 9*Cin, single matmul
        packed = jnp.concatenate(taps(0) + taps(1) + taps(2), axis=-1)
        return jnp.dot(packed, w_ref[...], preferred_element_type=jnp.float32)
    if pack == 3:                              # K = 3*Cin, three matmuls
        acc = None
        for ki in range(3):
            part = jnp.dot(jnp.concatenate(taps(ki), axis=-1), w_ref[ki],
                           preferred_element_type=jnp.float32)
            acc = part if acc is None else acc + part
        return acc
    # pack == 1: previously-validated fallback (9 separate K=Cin matmuls)
    cout = w_ref.shape[-1]
    acc = jnp.zeros((M, cout), jnp.float32)
    for ki in range(3):
        t = taps(ki)
        for kj in range(3):
            acc = acc + jnp.dot(t[kj], w_ref[ki * 3 + kj],
                                preferred_element_type=jnp.float32)
    return acc


# ----------------------------------------------------------------------------- #
# Pallas kernels
# ----------------------------------------------------------------------------- #
def _mm_bn_kernel(a_ref, b_ref, s_ref, c_ref, o_ref, *, relu):
    """out = relu?((A @ B) * scale + bias) on one (bm, N) tile (bf16 in, f32 acc)."""
    acc = jnp.dot(a_ref[...], b_ref[...], preferred_element_type=jnp.float32)
    y = acc * s_ref[...] + c_ref[...]
    if relu:
        y = jnp.maximum(y, 0.0)
    o_ref[...] = y.astype(o_ref.dtype)


def _conv3x3_s1_kernel(*refs, th, W, d, pack, relu, has_res, has_head):
    """Stride-1 3x3 conv + BN (+ReLU) (+residual) (+fused 1x1 head) on a row band."""
    x_ref, w_ref, s_ref, b_ref = refs[:4]
    i = 4
    r_ref = wh_ref = None
    if has_res:
        r_ref = refs[i]; i += 1
    if has_head:
        wh_ref = refs[i]; i += 1
    o_ref = refs[i]

    Cin = x_ref.shape[-1]
    Cout = w_ref.shape[-1]
    M = th * W
    r0 = pl.program_id(0) * th
    if th % 8 == 0:
        r0 = pl.multiple_of(r0, 8)

    y = _packed_conv3x3(x_ref, w_ref, r0, th, W, d, pack, Cin)
    y = y * s_ref[...] + b_ref[...]
    if relu:
        y = jnp.maximum(y, 0.0)
    if has_res:
        y = y + r_ref[...].reshape(M, Cout).astype(jnp.float32)
    if has_head:
        y = jnp.dot(y.astype(jnp.bfloat16), wh_ref[...],
                    preferred_element_type=jnp.float32)
    o_ref[...] = y.reshape(th, W, o_ref.shape[-1]).astype(o_ref.dtype)


def _block_kernel(*refs, th, W, d, H, proj, pack1, pack2):
    """Fused stride-1 BasicBlock: conv1+BN+ReLU -> conv2+BN -> + residual.

    The conv1 output (with halo rows/cols for conv2) stays in a VMEM scratch band;
    the residual is the identity (sliced from the resident input) or a fused 1x1
    projection + BN.
    """
    x_ref, w1_ref, s1_ref, b1_ref, w2_ref, s2_ref, b2_ref = refs[:7]
    i = 7
    if proj:
        wd_ref, sd_ref, bd_ref = refs[i:i + 3]
        i += 3
    o_ref, band_ref = refs[i], refs[i + 1]

    Cin = x_ref.shape[-1]
    P = band_ref.shape[-1]
    bh = th + 2 * d                 # conv1 band height (halo rows for conv2)
    W2 = band_ref.shape[1]          # 8-aligned band width (>= W + 2d)
    M = th * W
    r0 = pl.program_id(0) * th
    if th % 8 == 0:
        r0 = pl.multiple_of(r0, 8)

    # ---- conv1 + BN + ReLU over the halo band --------------------------------
    y1 = _packed_conv3x3(x_ref, w1_ref, r0, bh, W2, d, pack1, Cin)
    y1 = jnp.maximum(y1 * s1_ref[...] + b1_ref[...], 0.0).reshape(bh, W2, P)
    # zero the phantom rows/cols (conv2's zero padding); 2-D mask broadcast over P
    rows = jax.lax.broadcasted_iota(jnp.int32, (bh, W2), 0) + (r0 - d)
    cols = jax.lax.broadcasted_iota(jnp.int32, (bh, W2), 1) - d
    valid = ((rows >= 0) & (rows < H) & (cols >= 0) & (cols < W))[:, :, None]
    band_ref[...] = jnp.where(valid, y1, 0.0).astype(band_ref.dtype)

    # ---- conv2 + BN over the central rows ------------------------------------
    y2 = _packed_conv3x3(band_ref, w2_ref, 0, th, W, d, pack2, P)
    y2 = y2 * s2_ref[...] + b2_ref[...]

    # ---- residual (identity or fused 1x1 projection + BN) --------------------
    xc = x_ref[pl.ds(r0 + 2 * d, th), pl.ds(2 * d, W), :].reshape(M, Cin)
    if proj:
        res = jnp.dot(xc, wd_ref[...], preferred_element_type=jnp.float32)
        res = res * sd_ref[...] + bd_ref[...]
    else:
        res = xc.astype(jnp.float32)
    o_ref[...] = (y2 + res).reshape(th, W, P).astype(o_ref.dtype)


def _spp_kernel(x_ref, *refs, ks):
    """All 4 AvgPool branches (+1x1 conv + BN + ReLU) in one pass.

    output_skip is loaded/cast once; the 8x8 average pool is computed directly and
    the 16/32/64 pools are derived hierarchically from its window sums.
    """
    wsb = refs[:3 * len(ks)]
    outs = refs[3 * len(ks):]
    H, W, C = x_ref.shape
    k0 = min(ks)
    x = x_ref[...].astype(jnp.float32)
    s = x.reshape(H // k0, k0, W, C).sum(axis=1)
    s = s.reshape(H // k0, W // k0, k0, C).sum(axis=2)        # 8x8 window sums
    sums = {k0: s}
    kk = k0
    while kk < max(ks):
        kk *= 2
        prev = sums[kk // 2]
        hh, ww = prev.shape[0] // 2, prev.shape[1] // 2
        t = prev.reshape(hh, 2, ww * 2, C).sum(axis=1)
        t = t.reshape(hh, ww, 2, C).sum(axis=2)
        sums[kk] = t
    for idx, k in enumerate(ks):
        w_ref, s_ref, b_ref = wsb[3 * idx:3 * idx + 3]
        o_ref = outs[idx]
        hh, ww = H // k, W // k
        pooled = (sums[k] * (1.0 / (k * k))).reshape(hh * ww, C)
        y = jnp.dot(pooled.astype(jnp.bfloat16), w_ref[...],
                    preferred_element_type=jnp.float32)
        y = jnp.maximum(y * s_ref[...] + b_ref[...], 0.0)
        o_ref[...] = y.astype(o_ref.dtype)


# ----------------------------------------------------------------------------- #
# Cached pallas_call builders (one compile per unique configuration)
# ----------------------------------------------------------------------------- #
@functools.lru_cache(maxsize=None)
def _matmul_bn_call(M, K, N, relu, out_dtype, tm=2048):
    Mp = _round_up(M, 8)
    if Mp > tm:
        Mp = _round_up(M, tm)
        bm = tm
    else:
        bm = Mp
    call = pl.pallas_call(
        functools.partial(_mm_bn_kernel, relu=relu),
        out_shape=jax.ShapeDtypeStruct((Mp, N), out_dtype),
        grid=(Mp // bm,),
        in_specs=[pl.BlockSpec((bm, K), lambda i: (i, 0)),
                  _const_spec((K, N), single_buffer=True),
                  _const_spec((1, N)),
                  _const_spec((1, N))],
        out_specs=pl.BlockSpec((bm, N), lambda i: (i, 0)),
        compiler_params=_CPARAMS,
        cost_estimate=_cost(2 * Mp * K * N, (Mp * K + K * N + Mp * N) * 2),
    )

    def fn(a, b, scale, bias):
        a = a.astype(jnp.bfloat16)
        if Mp != M:
            a = jnp.pad(a, ((0, Mp - M), (0, 0)))
        return call(a, b, scale, bias)[:M]

    return jax.jit(fn)


def matmul_bn(a, b, scale, bias, *, relu=False, out_dtype=jnp.bfloat16):
    M, K = a.shape
    N = b.shape[-1]
    return _matmul_bn_call(M, K, N, relu, out_dtype)(a, b, scale, bias)


@functools.lru_cache(maxsize=None)
def _conv3x3_s1_call(H, W, Cin, Cout, d, relu, has_res, head_c, out_dtype):
    th = _pick_th(H)
    pack = _pack_mode(Cin)
    Cfin = head_c if head_c else Cout
    in_specs = [
        _const_spec((H + 2 * d, W + 2 * d, Cin), single_buffer=True),
        _const_spec(_packed_w_shape(Cin, Cout, pack), single_buffer=True),
        _const_spec((1, Cout)),
        _const_spec((1, Cout)),
    ]
    if has_res:
        in_specs.append(pl.BlockSpec((th, W, Cout), lambda i: (i, 0, 0)))
    if head_c:
        in_specs.append(_const_spec((Cout, head_c), single_buffer=True))
    kernel = functools.partial(_conv3x3_s1_kernel, th=th, W=W, d=d, pack=pack,
                               relu=relu, has_res=has_res, has_head=bool(head_c))
    flops = 2 * H * W * 9 * Cin * Cout + (2 * H * W * Cout * head_c if head_c else 0)
    bytes_ = ((H + 2 * d) * (W + 2 * d) * Cin + H * W * Cfin + 9 * Cin * Cout) * 2
    call = pl.pallas_call(
        kernel,
        out_shape=jax.ShapeDtypeStruct((H, W, Cfin), out_dtype),
        grid=(H // th,),
        in_specs=in_specs,
        out_specs=pl.BlockSpec((th, W, Cfin), lambda i: (i, 0, 0)),
        compiler_params=_CPARAMS,
        cost_estimate=_cost(flops, bytes_),
    )

    def fn(x, w, scale, bias, *extra):
        xp = jnp.pad(x.astype(jnp.bfloat16), ((d, d), (d, d), (0, 0)))
        return call(xp, _pack_weight(w, pack), scale, bias, *extra)

    return jax.jit(fn)


def conv3x3_s1(x, p, *, d, relu, residual=None, head=None, out_dtype=jnp.bfloat16):
    H, W, Cin = x.shape
    Cout = p["w"].shape[-1]
    head_c = int(head.shape[-1]) if head is not None else 0
    fn = _conv3x3_s1_call(H, W, Cin, Cout, d, relu, residual is not None,
                          head_c, out_dtype)
    extra = []
    if residual is not None:
        extra.append(residual.astype(jnp.bfloat16))
    if head is not None:
        extra.append(head)
    return fn(x, p["w"], p["scale"], p["bias"], *extra)


@functools.lru_cache(maxsize=None)
def _block_call(H, W, Cin, P, d, proj):
    th = _pick_th(H)
    W2 = _round_up(W + 2 * d, 8)
    pack1 = _pack_mode(Cin)
    pack2 = _pack_mode(P)
    in_specs = [
        _const_spec((H + 4 * d, W2 + 2 * d, Cin), single_buffer=True),
        _const_spec(_packed_w_shape(Cin, P, pack1), single_buffer=True),
        _const_spec((1, P)),
        _const_spec((1, P)),
        _const_spec(_packed_w_shape(P, P, pack2), single_buffer=True),
        _const_spec((1, P)),
        _const_spec((1, P)),
    ]
    if proj:
        in_specs += [_const_spec((Cin, P), single_buffer=True),
                     _const_spec((1, P)), _const_spec((1, P))]
    kernel = functools.partial(_block_kernel, th=th, W=W, d=d, H=H, proj=proj,
                               pack1=pack1, pack2=pack2)
    flops = 2 * H * W * 9 * (Cin * P + P * P) + (2 * H * W * Cin * P if proj else 0)
    bytes_ = ((H + 4 * d) * (W2 + 2 * d) * Cin + H * W * P + 9 * (Cin + P) * P) * 2
    call = pl.pallas_call(
        kernel,
        out_shape=jax.ShapeDtypeStruct((H, W, P), jnp.bfloat16),
        grid=(H // th,),
        in_specs=in_specs,
        out_specs=pl.BlockSpec((th, W, P), lambda i: (i, 0, 0)),
        scratch_shapes=[pltpu.VMEM((th + 2 * d, W2, P), jnp.bfloat16)],
        compiler_params=_CPARAMS,
        cost_estimate=_cost(flops, bytes_),
    )

    def fn(x, w1, s1, b1, w2, s2, b2, *dwn):
        xp = jnp.pad(x.astype(jnp.bfloat16),
                     ((2 * d, 2 * d), (2 * d, W2 - W), (0, 0)))
        return call(xp, _pack_weight(w1, pack1), s1, b1,
                    _pack_weight(w2, pack2), s2, b2, *dwn)

    return jax.jit(fn)


@functools.lru_cache(maxsize=None)
def _spp_call(H, W, C):
    ks = (64, 32, 16, 8)
    in_specs = [_const_spec((H, W, C), single_buffer=True)]
    out_shapes, out_specs = [], []
    for k in ks:
        in_specs += [_const_spec((C, 32)), _const_spec((1, 32)), _const_spec((1, 32))]
        n = (H // k) * (W // k)
        out_shapes.append(jax.ShapeDtypeStruct((n, 32), jnp.float32))
        out_specs.append(pl.BlockSpec((n, 32), lambda i: (0, 0)))
    call = pl.pallas_call(
        functools.partial(_spp_kernel, ks=ks),
        out_shape=tuple(out_shapes),
        grid=(1,),
        in_specs=in_specs,
        out_specs=tuple(out_specs),
        compiler_params=pltpu.CompilerParams(
            dimension_semantics=("arbitrary",),
            vmem_limit_bytes=48 * 1024 * 1024),
    )
    return jax.jit(call)


# ----------------------------------------------------------------------------- #
# Network building blocks
# ----------------------------------------------------------------------------- #
def _conv3x3_strided(x, p, *, stride, pad, relu):
    """Fallback for the (few) stride-2 3x3 convs: im2col in JAX + fused matmul+BN."""
    H, W, Cin = x.shape
    w = p["w"]
    Cout = w.shape[-1]
    OH = (H + 2 * pad - 3) // stride + 1
    OW = (W + 2 * pad - 3) // stride + 1
    xp = jnp.pad(x.astype(jnp.bfloat16), ((pad, pad), (pad, pad), (0, 0)))
    taps = []
    for i in range(3):
        for j in range(3):
            taps.append(xp[i:i + (OH - 1) * stride + 1:stride,
                           j:j + (OW - 1) * stride + 1:stride, :])
    cols = jnp.concatenate(taps, axis=-1).reshape(OH * OW, 9 * Cin)
    y = matmul_bn(cols, w.reshape(9 * Cin, Cout), p["scale"], p["bias"], relu=relu)
    return y.reshape(OH, OW, Cout)


def _basic_block_stride2(x, p):
    """layer2 block0 (stride 2): unfused conv1 / 1x1 downsample, conv2 fused w/ residual."""
    d = p["dilation"]
    pad = d if d > 1 else p["pad"]
    out = _conv3x3_strided(x, p["conv1"], stride=p["stride"], pad=pad, relu=True)
    dwn = p["downsample"]
    xs = x[::p["stride"], ::p["stride"], :]
    OH, OW, Cin = xs.shape
    P = dwn["w"].shape[-1]
    sc = matmul_bn(xs.reshape(OH * OW, Cin), dwn["w"], dwn["scale"], dwn["bias"],
                   relu=False).reshape(OH, OW, P)
    return conv3x3_s1(out, p["conv2"], d=d, relu=False, residual=sc)


def basic_block(x, p):
    if p["stride"] != 1:
        return _basic_block_stride2(x, p)
    H, W, Cin = x.shape
    P = p["conv1"]["w"].shape[-1]
    proj = p["downsample"] is not None
    fn = _block_call(H, W, Cin, P, p["dilation"], proj)
    args = [p["conv1"]["w"], p["conv1"]["scale"], p["conv1"]["bias"],
            p["conv2"]["w"], p["conv2"]["scale"], p["conv2"]["bias"]]
    if proj:
        args += [p["downsample"]["w"], p["downsample"]["scale"],
                 p["downsample"]["bias"]]
    return fn(x, *args)


def spp_branches(x, params):
    """x: (H, W, 128).  Returns [branch1, branch2, branch3, branch4] pooled+conv maps."""
    H, W, C = x.shape
    ks = (64, 32, 16, 8)
    names = ("branch1", "branch2", "branch3", "branch4")
    args = [x]
    for name in names:
        p = params[name]
        args += [p["w"], p["scale"], p["bias"]]
    outs = _spp_call(H, W, C)(*args)
    return [o.reshape(H // k, W // k, 32) for o, k in zip(outs, ks)]


@functools.lru_cache(maxsize=None)
def _interp_matrix(out_size, in_size):
    """align_corners=False bilinear interpolation weights as a dense (out, in) matrix."""
    s = in_size / out_size
    c = np.maximum((np.arange(out_size) + 0.5) * s - 0.5, 0.0)
    lo = np.minimum(np.floor(c).astype(np.int64), in_size - 1)
    hi = np.minimum(lo + 1, in_size - 1)
    f = (c - lo).astype(np.float32)
    A = np.zeros((out_size, in_size), np.float32)
    A[np.arange(out_size), lo] += 1.0 - f
    A[np.arange(out_size), hi] += f
    return jnp.asarray(A)


def bilinear_upsample(x, out_h, out_w):
    """Bilinear upsample as two dense interpolation matmuls (no gathers).

    Matches F.interpolate(..., mode='bilinear', align_corners=False)."""
    h, w, _ = x.shape
    Ay = _interp_matrix(out_h, h)
    Ax = _interp_matrix(out_w, w)
    t = jnp.einsum('hwc,Ww->hWc', x, Ax)       # tiny column upsample
    return jnp.einsum('Hh,hWc->HWc', Ay, t)    # row upsample: one clean matmul


# ----------------------------------------------------------------------------- #
# Deterministic parameter construction (mirrors the PyTorch module __init__)
# ----------------------------------------------------------------------------- #
class ParamGen:
    def __init__(self, key):
        self.key = key

    def next(self):
        self.key, k = jax.random.split(self.key)
        return k


def make_convbn(pg, cin, cout, k):
    fan_in = cin * k * k
    w = jax.random.normal(pg.next(), (k * k, cin, cout), jnp.float32) * np.sqrt(2.0 / fan_in)
    if k == 1:
        w = w[0]
    gamma = 1.0 + 0.1 * jax.random.normal(pg.next(), (cout,), jnp.float32)
    beta = 0.1 * jax.random.normal(pg.next(), (cout,), jnp.float32)
    # eval-mode BN (running_mean=0, running_var=1, eps=1e-5) folded into scale/bias
    scale = (gamma / np.float32(np.sqrt(1.0 + 1e-5))).reshape(1, cout)
    bias = beta.reshape(1, cout)
    return dict(w=w.astype(jnp.bfloat16), scale=scale, bias=bias)


def make_layer(pg, inplanes, planes, blocks, stride, pad, dilation):
    layer = []
    downsample = None
    if stride != 1 or inplanes != planes:
        downsample = make_convbn(pg, inplanes, planes, 1)
    layer.append(dict(conv1=make_convbn(pg, inplanes, planes, 3),
                      conv2=make_convbn(pg, planes, planes, 3),
                      downsample=downsample,
                      stride=stride, pad=pad, dilation=dilation))
    for _ in range(1, blocks):
        layer.append(dict(conv1=make_convbn(pg, planes, planes, 3),
                          conv2=make_convbn(pg, planes, planes, 3),
                          downsample=None,
                          stride=1, pad=pad, dilation=dilation))
    return layer, planes


def build_params(key):
    pg = ParamGen(key)
    params = {}
    params["firstconv"] = [make_convbn(pg, 3, 32, 3),
                           make_convbn(pg, 32, 32, 3),
                           make_convbn(pg, 32, 32, 3)]
    inplanes = 32
    params["layer1"], inplanes = make_layer(pg, inplanes, 32, 3, 1, 1, 1)
    params["layer2"], inplanes = make_layer(pg, inplanes, 64, 16, 2, 1, 1)
    params["layer3"], inplanes = make_layer(pg, inplanes, 128, 3, 1, 1, 2)
    params["layer4"], inplanes = make_layer(pg, inplanes, 128, 3, 1, 1, 4)
    for name in ("branch1", "branch2", "branch3", "branch4"):
        params[name] = make_convbn(pg, 128, 32, 1)
    params["lastconv"] = [
        make_convbn(pg, 320, 128, 3),
        dict(w=(jax.random.normal(pg.next(), (128, 32), jnp.float32)
                * np.sqrt(2.0 / 128.0)).astype(jnp.bfloat16)),
    ]
    return params


# ----------------------------------------------------------------------------- #
# Forward pass (mirrors feature_extraction.forward)
# ----------------------------------------------------------------------------- #
def _forward_single(params, x):
    fc = params["firstconv"]
    out = _conv3x3_strided(x, fc[0], stride=2, pad=1, relu=True)
    out = conv3x3_s1(out, fc[1], d=1, relu=True)
    out = conv3x3_s1(out, fc[2], d=1, relu=True)

    for bp in params["layer1"]:
        out = basic_block(out, bp)
    for bp in params["layer2"]:
        out = basic_block(out, bp)
    output_raw = out
    for bp in params["layer3"]:
        out = basic_block(out, bp)
    for bp in params["layer4"]:
        out = basic_block(out, bp)
    output_skip = out

    Hs, Ws = output_skip.shape[0], output_skip.shape[1]
    b1, b2, b3, b4 = spp_branches(output_skip, params)          # pool 64/32/16/8
    ups = [bilinear_upsample(b, Hs, Ws) for b in (b4, b3, b2, b1)]

    feat = jnp.concatenate(
        [output_raw.astype(jnp.bfloat16), output_skip.astype(jnp.bfloat16)]
        + [u.astype(jnp.bfloat16) for u in ups], axis=-1)        # 320 channels

    lc = params["lastconv"]
    # 3x3(320->128)+BN+ReLU with the final 1x1(128->32) fused as a second matmul
    y = conv3x3_s1(feat, lc[0], d=1, relu=True, head=lc[1]["w"],
                   out_dtype=jnp.float32)
    return jnp.transpose(y, (2, 0, 1))                            # (32, H/4, W/4)


def feature_extraction_forward(params, x_nchw):
    # TODO(synk): fold the batch dim into the Pallas grids / vmap for N>1; the
    # per-sample loop serializes kernels (irrelevant at the N=1 test size).
    outs = []
    for n in range(x_nchw.shape[0]):
        x = jnp.transpose(x_nchw[n], (1, 2, 0)).astype(jnp.bfloat16)  # HWC
        outs.append(_forward_single(params, x))
    return jnp.stack(outs, axis=0)                                # NCHW


# ----------------------------------------------------------------------------- #
if __name__ == "__main__":
    key = jax.random.PRNGKey(0)
    pkey, xkey = jax.random.split(key)
    params = build_params(pkey)

    # smallest input compatible with the hard-coded 64x64 AvgPool branch
    x = jax.random.normal(xkey, (1, 3, 256, 256), jnp.float32)

    out = feature_extraction_forward(params, x)
    out = jax.block_until_ready(out)

    assert out.shape == (1, 32, 64, 64), out.shape
    assert out.dtype == jnp.float32
    assert bool(jnp.all(jnp.isfinite(out)))
    print("KERNEL_OK")
</pallas_src>

<mosaic_0001>
module attributes {stable_mosaic.version = 11 : i64} {
  func.func @k(%arg0: i32, %arg1: memref<16x128xf32, #tpu.memory_space<vmem>>, %arg2: memref<8x128xf32, #tpu.memory_space<vmem>>) attributes {dimension_semantics = [#tpu.dimension_semantics<arbitrary>], iteration_bounds = array<i64: 2>, scalar_prefetch = 0 : i64, scratch_operands = 0 : i64, tpu.core_type = #tpu.core_type<tc>, window_params = [{pipeline_mode = #tpu.pipeline_mode<synchronous>, transform_indices = @transform_0, window_bounds = array<i64: 16, 128>}, {transform_indices = @transform_1, window_bounds = array<i64: 8, 128>}]} {
    %c8_i32 = arith.constant 8 : i32
    %0 = arith.muli %arg0, %c8_i32 : i32
    %1 = arith.index_cast %0 : i32 to index
    %c0 = arith.constant 0 : index
    %2 = vector.load %arg1[%1, %c0] : memref<16x128xf32, #tpu.memory_space<vmem>>, vector<8x128xf32>
    %cst = arith.constant 2.000000e+00 : f32
    %3 = vector.broadcast %cst : f32 to vector<8x128xf32>
    %4 = arith.mulf %2, %3 : vector<8x128xf32>
    %c0_0 = arith.constant 0 : index
    %c0_1 = arith.constant 0 : index
    %5 = vector.load %arg2[%c0_0, %c0_1] : memref<8x128xf32, #tpu.memory_space<vmem>>, vector<8x128xf32>
    tpu.vector_store %arg2[%c0_0, %c0_1], %4 {strides = array<i32>} : memref<8x128xf32, #tpu.memory_space<vmem>>, vector<8x128xf32>,
    return
  }
  func.func @transform_0(%arg0: i32) -> (i32, i32) {
    %c0_i32 = arith.constant 0 : i32
    %c0_i32_0 = arith.constant 0 : i32
    %c0_i32_1 = arith.constant 0 : i32
    return %c0_i32, %c0_i32_0 : i32, i32
  }
  func.func @transform_1(%arg0: i32) -> (i32, i32) {
    %c0_i32 = arith.constant 0 : i32
    %c0_i32_0 = arith.constant 0 : i32
    return %arg0, %c0_i32 : i32, i32
  }
}

module attributes {stable_mosaic.version = 11 : i64} {
  func.func @_mm_bn_kernel(%arg0: i32, %arg1: memref<2048x27xbf16, #tpu.memory_space<vmem>>, %arg2: memref<27x32xbf16, #tpu.memory_space<vmem>>, %arg3: memref<1x32xf32, #tpu.memory_space<vmem>>, %arg4: memref<1x32xf32, #tpu.memory_space<vmem>>, %arg5: memref<2048x32xbf16, #tpu.memory_space<vmem>>) attributes {dimension_semantics = [#tpu.dimension_semantics<parallel>], iteration_bounds = array<i64: 8>, scalar_prefetch = 0 : i64, scratch_operands = 0 : i64, tpu.core_type = #tpu.core_type<tc>, window_params = [{transform_indices = @transform_0, window_bounds = array<i64: 2048, 27>}, {pipeline_mode = #tpu.pipeline_mode<synchronous>, transform_indices = @transform_1, window_bounds = array<i64: 27, 32>}, {pipeline_mode = #tpu.pipeline_mode<synchronous>, transform_indices = @transform_2, window_bounds = array<i64: 1, 32>}, {pipeline_mode = #tpu.pipeline_mode<synchronous>, transform_indices = @transform_3, window_bounds = array<i64: 1, 32>}, {transform_indices = @transform_4, window_bounds = array<i64: 2048, 32>}]} {
    %c0 = arith.constant 0 : index
    %c0_0 = arith.constant 0 : index
    %0 = vector.load %arg1[%c0, %c0_0] : memref<2048x27xbf16, #tpu.memory_space<vmem>>, vector<2048x27xbf16>
    %c0_1 = arith.constant 0 : index
    %c0_2 = arith.constant 0 : index
    %1 = vector.load %arg2[%c0_1, %c0_2] : memref<27x32xbf16, #tpu.memory_space<vmem>>, vector<27x32xbf16>
    %cst = arith.constant dense<0.000000e+00> : vector<2048x32xf32>
    %2 = tpu.matmul %0, %1, %cst {dimension_numbers = #tpu.dot_dimension_numbers<[1], [0], [0], [1], [0, 0, 1, 1], [], []>} : vector<2048x27xbf16>, vector<27x32xbf16>, vector<2048x32xf32> -> vector<2048x32xf32>
    %c0_3 = arith.constant 0 : index
    %c0_4 = arith.constant 0 : index
    %3 = vector.load %arg3[%c0_3, %c0_4] : memref<1x32xf32, #tpu.memory_space<vmem>>, vector<1x32xf32>
    %4 = vector.broadcast %3 : vector<1x32xf32> to vector<2048x32xf32>
    %5 = arith.mulf %2, %4 : vector<2048x32xf32>
    %c0_5 = arith.constant 0 : index
    %c0_6 = arith.constant 0 : index
    %6 = vector.load %arg4[%c0_5, %c0_6] : memref<1x32xf32, #tpu.memory_space<vmem>>, vector<1x32xf32>
    %7 = vector.broadcast %6 : vector<1x32xf32> to vector<2048x32xf32>
    %8 = arith.addf %5, %7 : vector<2048x32xf32>
    %cst_7 = arith.constant 0.000000e+00 : f32
    %9 = vector.broadcast %cst_7 : f32 to vector<2048x32xf32>
    %10 = arith.maximumf %8, %9 : vector<2048x32xf32>
    %11 = arith.truncf %10 : vector<2048x32xf32> to vector<2048x32xbf16>
    %c0_8 = arith.constant 0 : index
    %c0_9 = arith.constant 0 : index
    %12 = vector.load %arg5[%c0_8, %c0_9] : memref<2048x32xbf16, #tpu.memory_space<vmem>>, vector<2048x32xbf16>
    tpu.vector_store %arg5[%c0_8, %c0_9], %11 {strides = array<i32>} : memref<2048x32xbf16, #tpu.memory_space<vmem>>, vector<2048x32xbf16>,
    return
  }
  func.func @transform_0(%arg0: i32) -> (i32, i32) {
    %c0_i32 = arith.constant 0 : i32
    %c0_i32_0 = arith.constant 0 : i32
    return %arg0, %c0_i32 : i32, i32
  }
  func.func @transform_1(%arg0: i32) -> (i32, i32) {
    %c0_i32 = arith.constant 0 : i32
    %c0_i32_0 = arith.constant 0 : i32
    %c0_i32_1 = arith.constant 0 : i32
    return %c0_i32, %c0_i32_0 : i32, i32
  }
  func.func @transform_2(%arg0: i32) -> (i32, i32) {
    %c0_i32 = arith.constant 0 : i32
    %c0_i32_0 = arith.constant 0 : i32
    %c0_i32_1 = arith.constant 0 : i32
    return %c0_i32, %c0_i32_0 : i32, i32
  }
  func.func @transform_3(%arg0: i32) -> (i32, i32) {
    %c0_i32 = arith.constant 0 : i32
    %c0_i32_0 = arith.constant 0 : i32
    %c0_i32_1 = arith.constant 0 : i32
    return %c0_i32, %c0_i32_0 : i32, i32
  }
  func.func @transform_4(%arg0: i32) -> (i32, i32) {
    %c0_i32 = arith.constant 0 : i32
    %c0_i32_0 = arith.constant 0 : i32
    return %arg0, %c0_i32 : i32, i32
  }
}

</mosaic_0001>

<llo_original>
// kernel: tpu_custom_call.1
$region0: #{tpu_custom_call.1}
  #allocation0 [shape = 'u32[]', space=smem, size = 0x4, offset = 0x4, fixed_abs, tag = 'smem constant byte address 0x4 - core index']
  #allocation1 [shape = 'u32[144,128]{1,0:T(1,128)}', space=vmem, size = 0x12000, scoped, tag = 'internal scratch']
  %s0 = inlined_call_operand.hbm [shape: f32[16,128], index: 0, kind: input, shape index: {}]
  %s1 = inlined_call_operand.hbm [shape: f32[16,128], index: 1, kind: output, shape index: {}]
  %s2 = sld [smem:[#allocation0]]
  $region41: #{tpu_custom_call.1} parent=0
    _
  %s4 = ssub.s32 1, %s2
  %s5 = scalar_select 0, %s4, %s2
  $region1: #{tpu_custom_call.1} parent=0
    #allocation2 [shape = 'u8[8192]{0}', space=vmem, size = 0x2000, scoped, tag = 'input window, operand 0, single buffered']
    #allocation3 [shape = 's32[2]{0}', space=sflag, size = 0x8, scoped, tag = 'scoped memory for tpu_custom_call.1']
    #allocation4 [shape = 's32[2]{0}', space=sflag, size = 0x8, scoped, tag = 'scoped memory for tpu_custom_call.1']
    #allocation5 [shape = 'u8[8192]{0}', space=vmem, size = 0x2000, scoped, tag = 'output window, operand 0']
    %6 = vsyncpa [#allocation3], 0
    %7 = vsyncpa [#allocation4], 0
    %s8 = scalar_lea.sflag [#allocation4], 1
    %9 = vsyncpa %s8, 0
    loop: start=0, step=1, limit=4
    $region2: #{tpu_custom_call.1} parent=1 // loop_pre_header
      _
    $region3: #{tpu_custom_call.1} parent=1 // loop_header
      %s11 = sphi 0, %s15
      %p12 = scmp.ge.s32.totalorder %s11, 4
      %s19 = sphi 0, %s19
      %s21 = sphi 0, %s19
      %s22 = sphi 0, %s21
      %s36 = sphi 0, %s22
      %s42 = sphi 0, %s44
      %s45 = sphi 0, %s42
      %s46 = sphi 0, %s45
      %s62 = sphi 0, %s46
    $region4: #{tpu_custom_call.1} parent=1 // loop_header_branch
      %14 = sbr.rel (%p12) target = $region8
    $region5: #{tpu_custom_call.1} parent=1 // loop_body
      %s16 = ssub.s32 %s11, 1
      %s17 = ssub.s32 %s11, 2
      %s18 = sadd.s32 %s11, 1
      %s20 = sadd.s32 %s19, 1
      %p23 = scmp.eq.s32.totalorder %s11, 1
      %p24 = scmp.ne.s32.totalorder %s19, %s21
      %p25 = scmp.eq.s32.totalorder %s11, 0
      %p26 = por %p24, %p25
      %p27 = scmp.ne.s32.totalorder %s19, %s21
      %p28 = scmp.eq.s32.totalorder %s16, 1
      %p29 = por %p27, %p28
      %p30 = scmp.ne.s32.totalorder %s21, %s22
      %p31 = scmp.eq.s32.totalorder %s16, 0
      %p32 = por %p30, %p31
      %p33 = scmp.ne.s32.totalorder %s21, %s22
      %p34 = scmp.eq.s32.totalorder %s17, 1
      %p35 = por %p33, %p34
      %p37 = scmp.ne.s32.totalorder %s22, %s36
      %p38 = scmp.eq.s32.totalorder %s17, 0
      %p39 = por %p37, %p38
      %s40 = ssub.s32 %s11, %s18
      %p41 = scmp.eq.s32.totalorder %s40, 0
      %s43 = sadd.s32 %s42, 1
      %s44 = scalar_select %p41, %s42, %s43
      %p47 = pneg %p41
      %p48 = scmp.eq.s32.totalorder %s11, 1
      %p49 = por %p47, %p48
      %p50 = scmp.ne.s32.totalorder %s42, %s45
      %p51 = scmp.eq.s32.totalorder %s11, 0
      %p52 = por %p50, %p51
      %p53 = scmp.ne.s32.totalorder %s42, %s45
      %p54 = scmp.eq.s32.totalorder %s16, 1
      %p55 = por %p53, %p54
      %p56 = scmp.ne.s32.totalorder %s45, %s46
      %p57 = scmp.eq.s32.totalorder %s16, 0
      %p58 = por %p56, %p57
      %p59 = scmp.ne.s32.totalorder %s45, %s46
      %p60 = scmp.eq.s32.totalorder %s17, 1
      %p61 = por %p59, %p60
      %p63 = scmp.ne.s32.totalorder %s46, %s62
      %p64 = scmp.eq.s32.totalorder %s17, 0
      %p65 = por %p63, %p64
      %p66 = scmp.le.s32.totalorder 1, %s11
      %p67 = scmp.lt.s32.totalorder %s11, 3
      %p68 = pnand %p66, %p67
      %p69 = pneg %p68
      // Predicated region
      $region9: #{tpu_custom_call.1} parent=5 // pred_check
        _
      $region10: #{tpu_custom_call.1} parent=5 // pred_check_branch
        %71 = sbr.rel (%p68) target = $region12
      $region11: #{tpu_custom_call.1} parent=5 // pred_region
        %s72 = ssub.s32 %s11, 1
        // Predicated region
        $region13: #{tpu_custom_call.1} parent=11 // pred_check
          %p73 = pneg %p32
        $region14: #{tpu_custom_call.1} parent=11 // pred_check_branch
          %75 = sbr.rel (%p73) target = $region16
        $region15: #{tpu_custom_call.1} parent=11 // pred_region
          %s77 = ssub.s32 256, 256
          %78 = vsyncadd [#allocation3], %s77
          %s79 = sshll.u32 [#allocation2], 4
          %s80 = int_to_ptr.vmem [resolvable:$true] %s79
          %85 = dma.hbm_to_vmem [thread:$0]  %s0, 256, %s80, [#allocation3], 128, 128, 8
        $region16: #{tpu_custom_call.1} parent=11 // pred_fallthru
          _
      $region12: #{tpu_custom_call.1} parent=5 // pred_fallthru
        _
      %p86 = scmp.lt.s32.totalorder %s11, 2
      // Predicated region
      $region17: #{tpu_custom_call.1} parent=5 // pred_check
        %p87 = pneg %p86
      $region18: #{tpu_custom_call.1} parent=5 // pred_check_branch
        %89 = sbr.rel (%p87) target = $region20
      $region19: #{tpu_custom_call.1} parent=5 // pred_region
        _
      $region20: #{tpu_custom_call.1} parent=5 // pred_fallthru
        _
      %p90 = scmp.le.s32.totalorder 1, %s11
      %p91 = scmp.lt.s32.totalorder %s11, 3
      %p92 = pnand %p90, %p91
      %p93 = pneg %p92
      // Predicated region
      $region21: #{tpu_custom_call.1} parent=5 // pred_check
        _
      $region22: #{tpu_custom_call.1} parent=5 // pred_check_branch
        %95 = sbr.rel (%p92) target = $region24
      $region23: #{tpu_custom_call.1} parent=5 // pred_region
        %s96 = ssub.s32 %s11, 1
        // Predicated region
        $region25: #{tpu_custom_call.1} parent=23 // pred_check
          %p97 = pneg %p32
        $region26: #{tpu_custom_call.1} parent=23 // pred_check_branch
          %99 = sbr.rel (%p97) target = $region28
        $region27: #{tpu_custom_call.1} parent=23 // pred_region
          %100 = dma.done [#allocation3], 256
        $region28: #{tpu_custom_call.1} parent=23 // pred_fallthru
          _
        %p101 = pneg %p32
        %p102 = pneg %p29
        %p103 = pneg %p58
        %p104 = pneg %p55
        %s105 = sand.u32 %s45, 1
        %s106 = scalar_lea.sflag [#allocation4], %s105
        %s107 = sand.u32 %s45, 1
        %s108 = smul.addr %s107, 8
        %s109 = scalar_lea.vmem [#allocation5], %s108
        %s110 = smul.u32 %s16, 8
        %s111 = scalar_lea.vmem [#allocation2], %s110
        %v112 = vld [vmem:[%s111] sm:$0xff]
        %v113 = vmul.f32 %v112, 2.0
        %114 = vst [vmem:[%s109] sm:$0xff] %v113
        %s115 = sand.u32 %s45, 1
        %s116 = scalar_lea.sflag [#allocation4], %s115
        %s117 = sand.u32 %s45, 1
        %s118 = smul.addr %s117, 8
        %s119 = scalar_lea.vmem [#allocation5], %s118
        // Predicated region
        $region29: #{tpu_custom_call.1} parent=23 // pred_check
          %p120 = pneg %p55
        $region30: #{tpu_custom_call.1} parent=23 // pred_check_branch
          %122 = sbr.rel (%p120) target = $region32
        $region31: #{tpu_custom_call.1} parent=23 // pred_region
          %s124 = ssub.s32 128, 128
          %125 = vsyncadd %s116, %s124
          %s126 = smul.addr %s16, 128
          %s127 = scalar_lea.hbm %s1, %s126
          %s129 = sshll.u32 %s119, 4
          %s130 = int_to_ptr.vmem [resolvable:$true] %s129
          %132 = dma.vmem_to_hbm [thread:$0]  %s130, 128, %s127, %s116
        $region32: #{tpu_custom_call.1} parent=23 // pred_fallthru
          _
      $region24: #{tpu_custom_call.1} parent=5 // pred_fallthru
        _
      %p133 = scmp.le.s32.totalorder 2, %s11
      // Predicated region
      $region33: #{tpu_custom_call.1} parent=5 // pred_check
        %p134 = pneg %p133
      $region34: #{tpu_custom_call.1} parent=5 // pred_check_branch
        %136 = sbr.rel (%p134) target = $region36
      $region35: #{tpu_custom_call.1} parent=5 // pred_region
        %s137 = ssub.s32 %s11, 2
        // Predicated region
        $region37: #{tpu_custom_call.1} parent=35 // pred_check
          %p138 = pneg %p61
        $region38: #{tpu_custom_call.1} parent=35 // pred_check_branch
          %140 = sbr.rel (%p138) target = $region40
        $region39: #{tpu_custom_call.1} parent=35 // pred_region
          %s141 = sand.u32 %s46, 1
          %s142 = scalar_lea.sflag [#allocation4], %s141
          %s143 = sand.u32 %s46, 1
          %s144 = smul.addr %s143, 8
          %s145 = scalar_lea.vmem [#allocation5], %s144
          %146 = dma.done %s142, 128
        $region40: #{tpu_custom_call.1} parent=35 // pred_fallthru
          _
      $region36: #{tpu_custom_call.1} parent=5 // pred_fallthru
        _
    $region6: #{tpu_custom_call.1} parent=1 // loop_footer
      %s15 = sadd.s32 1, %s11
    $region7: #{tpu_custom_call.1} parent=1 // loop_footer_branch
      %10 = sbr.rel target = $region3
    $region8: #{tpu_custom_call.1} parent=1 // loop_exit
      _
    %147 = vsyncpa [#allocation3], 1
    %s148 = scalar_lea.sflag [#allocation3], 1
    %149 = vsyncpa %s148, 1
    %150 = vsyncpa [#allocation4], 1
    %s151 = scalar_lea.sflag [#allocation4], 1
    %152 = vsyncpa %s151, 1

// kernel: fn.1
$region0: #{fn.1}
  #allocation0 [shape = 'u32[]', space=smem, size = 0x4, offset = 0x4, fixed_abs, tag = 'smem constant byte address 0x4 - core index']
  #allocation1 [shape = 'u32[144,128]{1,0:T(1,128)}', space=vmem, size = 0x12000, scoped, tag = 'internal scratch']
  %s0 = inlined_call_operand.vmem [shape: bf16[16384,27], index: 0, kind: input, shape index: {}]
  %s1 = inlined_call_operand.vmem [shape: bf16[27,32], index: 1, kind: input, shape index: {}]
  %s2 = inlined_call_operand.vmem [shape: f32[1,32], index: 2, kind: input, shape index: {}]
  %s3 = inlined_call_operand.vmem [shape: f32[1,32], index: 3, kind: input, shape index: {}]
  %s4 = inlined_call_operand.vmem [shape: bf16[16384,32], index: 4, kind: output, shape index: {}]
  %s5 = sld [smem:[#allocation0]]
  $region49: #{fn.1} parent=0
    _
  %s7 = ssub.s32 1, %s5
  %s8 = scalar_select 0, %s7, %s5
  loop: start=0, step=1, limit=10
  $region2: #{fn.1} parent=0 // loop_pre_header
    _
  $region3: #{fn.1} parent=0 // loop_header
    %s10 = sphi 0, %s14
    %p11 = scmp.ge.s32.totalorder %s10, 10
    %s20 = sphi 0, %s22
    %s23 = sphi 0, %s20
    %s24 = sphi 0, %s23
    %s40 = sphi 0, %s24
    %s44 = sphi 0, %s44
    %s46 = sphi 0, %s44
    %s47 = sphi 0, %s46
    %s61 = sphi 0, %s47
    %s65 = sphi 0, %s65
    %s67 = sphi 0, %s65
    %s68 = sphi 0, %s67
    %s82 = sphi 0, %s68
    %s86 = sphi 0, %s86
    %s88 = sphi 0, %s86
    %s89 = sphi 0, %s88
    %s103 = sphi 0, %s89
    %s109 = sphi 0, %s111
    %s112 = sphi 0, %s109
    %s113 = sphi 0, %s112
    %s129 = sphi 0, %s113
  $region4: #{fn.1} parent=0 // loop_header_branch
    %13 = sbr.rel (%p11) target = $region8
  $region5: #{fn.1} parent=0 // loop_body
    %s15 = ssub.s32 %s10, 1
    %s16 = ssub.s32 %s10, 2
    %s17 = sadd.s32 %s10, 1
    %s18 = ssub.s32 %s10, %s17
    %p19 = scmp.eq.s32.totalorder %s18, 0
    %s21 = sadd.s32 %s20, 1
    %s22 = scalar_select %p19, %s20, %s21
    %p25 = pneg %p19
    %p26 = scmp.eq.s32.totalorder %s10, 7
    %p27 = por %p25, %p26
    %p28 = scmp.ne.s32.totalorder %s20, %s23
    %p29 = scmp.eq.s32.totalorder %s10, 0
    %p30 = por %p28, %p29
    %p31 = scmp.ne.s32.totalorder %s20, %s23
    %p32 = scmp.eq.s32.totalorder %s15, 7
    %p33 = por %p31, %p32
    %p34 = scmp.ne.s32.totalorder %s23, %s24
    %p35 = scmp.eq.s32.totalorder %s15, 0
    %p36 = por %p34, %p35
    %p37 = scmp.ne.s32.totalorder %s23, %s24
    %p38 = scmp.eq.s32.totalorder %s16, 7
    %p39 = por %p37, %p38
    %p41 = scmp.ne.s32.totalorder %s24, %s40
    %p42 = scmp.eq.s32.totalorder %s16, 0
    %p43 = por %p41, %p42
    %s45 = sadd.s32 %s44, 1
    %p48 = scmp.eq.s32.totalorder %s10, 7
    %p49 = scmp.ne.s32.totalorder %s44, %s46
    %p50 = scmp.eq.s32.totalorder %s10, 0
    %p51 = por %p49, %p50
    %p52 = scmp.ne.s32.totalorder %s44, %s46
    %p53 = scmp.eq.s32.totalorder %s15, 7
    %p54 = por %p52, %p53
    %p55 = scmp.ne.s32.totalorder %s46, %s47
    %p56 = scmp.eq.s32.totalorder %s15, 0
    %p57 = por %p55, %p56
    %p58 = scmp.ne.s32.totalorder %s46, %s47
    %p59 = scmp.eq.s32.totalorder %s16, 7
    %p60 = por %p58, %p59
    %p62 = scmp.ne.s32.totalorder %s47, %s61
    %p63 = scmp.eq.s32.totalorder %s16, 0
    %p64 = por %p62, %p63
    %s66 = sadd.s32 %s65, 1
    %p69 = scmp.eq.s32.totalorder %s10, 7
    %p70 = scmp.ne.s32.totalorder %s65, %s67
    %p71 = scmp.eq.s32.totalorder %s10, 0
    %p72 = por %p70, %p71
    %p73 = scmp.ne.s32.totalorder %s65, %s67
    %p74 = scmp.eq.s32.totalorder %s15, 7
    %p75 = por %p73, %p74
    %p76 = scmp.ne.s32.totalorder %s67, %s68
    %p77 = scmp.eq.s32.totalorder %s15, 0
    %p78 = por %p76, %p77
    %p79 = scmp.ne.s32.totalorder %s67, %s68
    %p80 = scmp.eq.s32.totalorder %s16, 7
    %p81 = por %p79, %p80
    %p83 = scmp.ne.s32.totalorder %s68, %s82
    %p84 = scmp.eq.s32.totalorder %s16, 0
    %p85 = por %p83, %p84
    %s87 = sadd.s32 %s86, 1
    %p90 = scmp.eq.s32.totalorder %s10, 7
    %p91 = scmp.ne.s32.totalorder %s86, %s88
    %p92 = scmp.eq.s32.totalorder %s10, 0
    %p93 = por %p91, %p92
    %p94 = scmp.ne.s32.totalorder %s86, %s88
    %p95 = scmp.eq.s32.totalorder %s15, 7
    %p96 = por %p94, %p95
    %p97 = scmp.ne.s32.totalorder %s88, %s89
    %p98 = scmp.eq.s32.totalorder %s15, 0
    %p99 = por %p97, %p98
    %p100 = scmp.ne.s32.totalorder %s88, %s89
    %p101 = scmp.eq.s32.totalorder %s16, 7
    %p102 = por %p100, %p101
    %p104 = scmp.ne.s32.totalorder %s89, %s103
    %p105 = scmp.eq.s32.totalorder %s16, 0
    %p106 = por %p104, %p105
    %s107 = ssub.s32 %s10, %s17
    %p108 = scmp.eq.s32.totalorder %s107, 0
    %s110 = sadd.s32 %s109, 1
    %s111 = scalar_select %p108, %s109, %s110
    %p114 = pneg %p108
    %p115 = scmp.eq.s32.totalorder %s10, 7
    %p116 = por %p114, %p115
    %p117 = scmp.ne.s32.totalorder %s109, %s112
    %p118 = scmp.eq.s32.totalorder %s10, 0
    %p119 = por %p117, %p118
    %p120 = scmp.ne.s32.totalorder %s109, %s112
    %p121 = scmp.eq.s32.totalorder %s15, 7
    %p122 = por %p120, %p121
    %p123 = scmp.ne.s32.totalorder %s112, %s113
    %p124 = scmp.eq.s32.totalorder %s15, 0
    %p125 = por %p123, %p124
    %p126 = scmp.ne.s32.totalorder %s112, %s113
    %p127 = scmp.eq.s32.totalorder %s16, 7
    %p128 = por %p126, %p127
    %p130 = scmp.ne.s32.totalorder %s113, %s129
    %p131 = scmp.eq.s32.totalorder %s16, 0
    %p132 = por %p130, %p131
    %p133 = scmp.le.s32.totalorder 1, %s10
    %p134 = scmp.lt.s32.totalorder %s10, 9
    %p135 = pnand %p133, %p134
    %p136 = pneg %p135
    // Predicated region
    $region9: #{fn.1} parent=5 // pred_check
      _
    $region10: #{fn.1} parent=5 // pred_check_branch
      %138 = sbr.rel (%p135) target = $region12
    $region11: #{fn.1} parent=5 // pred_region
      %s139 = ssub.s32 %s10, 1
      // Predicated region
      $region13: #{fn.1} parent=11 // pred_check
        %p140 = pneg %p57
      $region14: #{fn.1} parent=11 // pred_check_branch
        %142 = sbr.rel (%p140) target = $region16
      $region15: #{fn.1} parent=11 // pred_region
        _
      $region16: #{fn.1} parent=11 // pred_fallthru
        _
      // Predicated region
      $region17: #{fn.1} parent=11 // pred_check
        %p143 = pneg %p78
      $region18: #{fn.1} parent=11 // pred_check_branch
        %145 = sbr.rel (%p143) target = $region20
      $region19: #{fn.1} parent=11 // pred_region
        _
      $region20: #{fn.1} parent=11 // pred_fallthru
        _
      // Predicated region
      $region21: #{fn.1} parent=11 // pred_check
        %p146 = pneg %p99
      $region22: #{fn.1} parent=11 // pred_check_branch
        %148 = sbr.rel (%p146) target = $region24
      $region23: #{fn.1} parent=11 // pred_region
        _
      $region24: #{fn.1} parent=11 // pred_fallthru
        _
    $region12: #{fn.1} parent=5 // pred_fallthru
      _
    %p149 = scmp.lt.s32.totalorder %s10, 8
    // Predicated region
    $region25: #{fn.1} parent=5 // pred_check
      %p150 = pneg %p149
    $region26: #{fn.1} parent=5 // pred_check_branch
      %152 = sbr.rel (%p150) target = $region28
    $region27: #{fn.1} parent=5 // pred_region
      // Predicated region
      $region29: #{fn.1} parent=27 // pred_check
        %p153 = pneg %p30
      $region30: #{fn.1} parent=27 // pred_check_branch
        %155 = sbr.rel (%p153) target = $region32
      $region31: #{fn.1} parent=27 // pred_region
        %s156 = smul.u32 256, %s10
        %p157 = scmp.lt.s32.totalorder %s156, 2047
        %s158 = scalar_select %p157, %s156, 2047
        %s159 = smul.addr %s158, 4
        %s160 = scalar_lea.vmem %s0, %s159
        %s161 = smul.u32 256, %s10
      $region32: #{fn.1} parent=27 // pred_fallthru
        _
    $region28: #{fn.1} parent=5 // pred_fallthru
      _
    %p162 = scmp.le.s32.totalorder 1, %s10
    %p163 = scmp.lt.s32.totalorder %s10, 9
    %p164 = pnand %p162, %p163
    %p165 = pneg %p164
    // Predicated region
    $region33: #{fn.1} parent=5 // pred_check
      _
    $region34: #{fn.1} parent=5 // pred_check_branch
      %167 = sbr.rel (%p164) target = $region36
    $region35: #{fn.1} parent=5 // pred_region
      %s168 = ssub.s32 %s10, 1
      %s169 = smul.u32 256, %s15
      %p170 = scmp.lt.s32.totalorder %s169, 2047
      %s171 = scalar_select %p170, %s169, 2047
      %s172 = smul.addr %s171, 4
      %s173 = scalar_lea.vmem %s0, %s172
      %p174 = pneg %p36
      %p175 = pneg %p33
      %p176 = pneg %p57
      %p177 = pneg %p54
      %p178 = pneg %p78
      %p179 = pneg %p75
      %p180 = pneg %p99
      %p181 = pneg %p96
      %p182 = pneg %p125
      %p183 = pneg %p122
      %s184 = smul.u32 256, %s15
      %p185 = scmp.lt.s32.totalorder %s184, 2047
      %s186 = scalar_select %p185, %s184, 2047
      %s187 = smul.addr %s186, 4
      %s188 = scalar_lea.vmem %s4, %s187
      %s189 = smul.u32 256, %s15
      %p190 = scmp.lt.s32.totalorder %s189, 2047
      %s191 = scalar_select %p190, %s189, 2047
      %s192 = smul.addr %s191, 4
      %s193 = scalar_lea.vmem %s0, %s192
      %s194 = smul.u32 256, %s15
      %s195 = smul.u32 256, %s15
      %p196 = scmp.lt.s32.totalorder %s195, 2047
      %s197 = scalar_select %p196, %s195, 2047
      %s198 = smul.addr %s197, 4
      %s199 = scalar_lea.vmem %s4, %s198
      %s200 = smul.u32 256, %s15
      %v202 = vld [vmem:[%s193] sm:$0xf]
      %v203 = vld [vmem:[%s193 + $0x4] sm:$0xf]
      %v204 = vld [vmem:[%s193 + $0x8] sm:$0xf]
      %v205 = vld [vmem:[%s193 + $0xc] sm:$0xf]
      %v206 = vld [vmem:[%s193 + $0x10] sm:$0xf]
      %v207 = vld [vmem:[%s193 + $0x14] sm:$0xf]
      %v208 = vld [vmem:[%s193 + $0x18] sm:$0xf]
      %v209 = vld [vmem:[%s193 + $0x1c] sm:$0xf]
      %v210 = vld [vmem:[%s193 + $0x20] sm:$0xf]
      %v211 = vld [vmem:[%s193 + $0x24] sm:$0xf]
      %v212 = vld [vmem:[%s193 + $0x28] sm:$0xf]
      %v213 = vld [vmem:[%s193 + $0x2c] sm:$0xf]
      %v214 = vld [vmem:[%s193 + $0x30] sm:$0xf]
      %v215 = vld [vmem:[%s193 + $0x34] sm:$0xf]
      %v216 = vld [vmem:[%s193 + $0x38] sm:$0xf]
      %v217 = vld [vmem:[%s193 + $0x3c] sm:$0xf]
      %v218 = vld [vmem:[%s193 + $0x40] sm:$0xf]
      %v219 = vld [vmem:[%s193 + $0x44] sm:$0xf]
      %v220 = vld [vmem:[%s193 + $0x48] sm:$0xf]
      %v221 = vld [vmem:[%s193 + $0x4c] sm:$0xf]
      %v222 = vld [vmem:[%s193 + $0x50] sm:$0xf]
      %v223 = vld [vmem:[%s193 + $0x54] sm:$0xf]
      %v224 = vld [vmem:[%s193 + $0x58] sm:$0xf]
      %v225 = vld [vmem:[%s193 + $0x5c] sm:$0xf]
      %v226 = vld [vmem:[%s193 + $0x60] sm:$0xf]
      %v227 = vld [vmem:[%s193 + $0x64] sm:$0xf]
      %v228 = vld [vmem:[%s193 + $0x68] sm:$0xf]
      %v229 = vld [vmem:[%s193 + $0x6c] sm:$0xf]
      %v230 = vld [vmem:[%s193 + $0x70] sm:$0xf]
      %v231 = vld [vmem:[%s193 + $0x74] sm:$0xf]
      %v232 = vld [vmem:[%s193 + $0x78] sm:$0xf]
      %v233 = vld [vmem:[%s193 + $0x7c] sm:$0xf]
      %v234 = vld [vmem:[%s193 + $0x80] sm:$0xf]
      %v235 = vld [vmem:[%s193 + $0x84] sm:$0xf]
      %v236 = vld [vmem:[%s193 + $0x88] sm:$0xf]
      %v237 = vld [vmem:[%s193 + $0x8c] sm:$0xf]
      %v238 = vld [vmem:[%s193 + $0x90] sm:$0xf]
      %v239 = vld [vmem:[%s193 + $0x94] sm:$0xf]
      %v240 = vld [vmem:[%s193 + $0x98] sm:$0xf]
      %v241 = vld [vmem:[%s193 + $0x9c] sm:$0xf]
      %v242 = vld [vmem:[%s193 + $0xa0] sm:$0xf]
      %v243 = vld [vmem:[%s193 + $0xa4] sm:$0xf]
      %v244 = vld [vmem:[%s193 + $0xa8] sm:$0xf]
      %v245 = vld [vmem:[%s193 + $0xac] sm:$0xf]
      %v246 = vld [vmem:[%s193 + $0xb0] sm:$0xf]
      %v247 = vld [vmem:[%s193 + $0xb4] sm:$0xf]
      %v248 = vld [vmem:[%s193 + $0xb8] sm:$0xf]
      %v249 = vld [vmem:[%s193 + $0xbc] sm:$0xf]
      %v250 = vld [vmem:[%s193 + $0xc0] sm:$0xf]
      %v251 = vld [vmem:[%s193 + $0xc4] sm:$0xf]
      %v252 = vld [vmem:[%s193 + $0xc8] sm:$0xf]
      %v253 = vld [vmem:[%s193 + $0xcc] sm:$0xf]
      %v254 = vld [vmem:[%s193 + $0xd0] sm:$0xf]
      %v255 = vld [vmem:[%s193 + $0xd4] sm:$0xf]
      %v256 = vld [vmem:[%s193 + $0xd8] sm:$0xf]
      %v257 = vld [vmem:[%s193 + $0xdc] sm:$0xf]
      %v258 = vld [vmem:[%s193 + $0xe0] sm:$0xf]
      %v259 = vld [vmem:[%s193 + $0xe4] sm:$0xf]
      %v260 = vld [vmem:[%s193 + $0xe8] sm:$0xf]
      %v261 = vld [vmem:[%s193 + $0xec] sm:$0xf]
      %v262 = vld [vmem:[%s193 + $0xf0] sm:$0xf]
      %v263 = vld [vmem:[%s193 + $0xf4] sm:$0xf]
      %v264 = vld [vmem:[%s193 + $0xf8] sm:$0xf]
      %v265 = vld [vmem:[%s193 + $0xfc] sm:$0xf]
      %v266 = vld [vmem:[%s193 + $0x100] sm:$0xf]
      %v267 = vld [vmem:[%s193 + $0x104] sm:$0xf]
      %v268 = vld [vmem:[%s193 + $0x108] sm:$0xf]
      %v269 = vld [vmem:[%s193 + $0x10c] sm:$0xf]
      %v270 = vld [vmem:[%s193 + $0x110] sm:$0xf]
      %v271 = vld [vmem:[%s193 + $0x114] sm:$0xf]
      %v272 = vld [vmem:[%s193 + $0x118] sm:$0xf]
      %v273 = vld [vmem:[%s193 + $0x11c] sm:$0xf]
      %v274 = vld [vmem:[%s193 + $0x120] sm:$0xf]
      %v275 = vld [vmem:[%s193 + $0x124] sm:$0xf]
      %v276 = vld [vmem:[%s193 + $0x128] sm:$0xf]
      %v277 = vld [vmem:[%s193 + $0x12c] sm:$0xf]
      %v278 = vld [vmem:[%s193 + $0x130] sm:$0xf]
      %v279 = vld [vmem:[%s193 + $0x134] sm:$0xf]
      %v280 = vld [vmem:[%s193 + $0x138] sm:$0xf]
      %v281 = vld [vmem:[%s193 + $0x13c] sm:$0xf]
      %v282 = vld [vmem:[%s193 + $0x140] sm:$0xf]
      %v283 = vld [vmem:[%s193 + $0x144] sm:$0xf]
      %v284 = vld [vmem:[%s193 + $0x148] sm:$0xf]
      %v285 = vld [vmem:[%s193 + $0x14c] sm:$0xf]
      %v286 = vld [vmem:[%s193 + $0x150] sm:$0xf]
      %v287 = vld [vmem:[%s193 + $0x154] sm:$0xf]
      %v288 = vld [vmem:[%s193 + $0x158] sm:$0xf]
      %v289 = vld [vmem:[%s193 + $0x15c] sm:$0xf]
      %v290 = vld [vmem:[%s193 + $0x160] sm:$0xf]
      %v291 = vld [vmem:[%s193 + $0x164] sm:$0xf]
      %v292 = vld [vmem:[%s193 + $0x168] sm:$0xf]
      %v293 = vld [vmem:[%s193 + $0x16c] sm:$0xf]
      %v294 = vld [vmem:[%s193 + $0x170] sm:$0xf]
      %v295 = vld [vmem:[%s193 + $0x174] sm:$0xf]
      %v296 = vld [vmem:[%s193 + $0x178] sm:$0xf]
      %v297 = vld [vmem:[%s193 + $0x17c] sm:$0xf]
      %v298 = vld [vmem:[%s193 + $0x180] sm:$0xf]
      %v299 = vld [vmem:[%s193 + $0x184] sm:$0xf]
      %v300 = vld [vmem:[%s193 + $0x188] sm:$0xf]
      %v301 = vld [vmem:[%s193 + $0x18c] sm:$0xf]
      %v302 = vld [vmem:[%s193 + $0x190] sm:$0xf]
      %v303 = vld [vmem:[%s193 + $0x194] sm:$0xf]
      %v304 = vld [vmem:[%s193 + $0x198] sm:$0xf]
      %v305 = vld [vmem:[%s193 + $0x19c] sm:$0xf]
      %v306 = vld [vmem:[%s193 + $0x1a0] sm:$0xf]
      %v307 = vld [vmem:[%s193 + $0x1a4] sm:$0xf]
      %v308 = vld [vmem:[%s193 + $0x1a8] sm:$0xf]
      %v309 = vld [vmem:[%s193 + $0x1ac] sm:$0xf]
      %v310 = vld [vmem:[%s193 + $0x1b0] sm:$0xf]
      %v311 = vld [vmem:[%s193 + $0x1b4] sm:$0xf]
      %v312 = vld [vmem:[%s193 + $0x1b8] sm:$0xf]
      %v313 = vld [vmem:[%s193 + $0x1bc] sm:$0xf]
      %v314 = vld [vmem:[%s193 + $0x1c0] sm:$0xf]
      %v315 = vld [vmem:[%s193 + $0x1c4] sm:$0xf]
      %v316 = vld [vmem:[%s193 + $0x1c8] sm:$0xf]
      %v317 = vld [vmem:[%s193 + $0x1cc] sm:$0xf]
      %v318 = vld [vmem:[%s193 + $0x1d0] sm:$0xf]
      %v319 = vld [vmem:[%s193 + $0x1d4] sm:$0xf]
      %v320 = vld [vmem:[%s193 + $0x1d8] sm:$0xf]
      %v321 = vld [vmem:[%s193 + $0x1dc] sm:$0xf]
      %v322 = vld [vmem:[%s193 + $0x1e0] sm:$0xf]
      %v323 = vld [vmem:[%s193 + $0x1e4] sm:$0xf]
      %v324 = vld [vmem:[%s193 + $0x1e8] sm:$0xf]
      %v325 = vld [vmem:[%s193 + $0x1ec] sm:$0xf]
      %v326 = vld [vmem:[%s193 + $0x1f0] sm:$0xf]
      %v327 = vld [vmem:[%s193 + $0x1f4] sm:$0xf]
      %v328 = vld [vmem:[%s193 + $0x1f8] sm:$0xf]
      %v329 = vld [vmem:[%s193 + $0x1fc] sm:$0xf]
      %v330 = vld [vmem:[%s193 + $0x200] sm:$0xf]
      %v331 = vld [vmem:[%s193 + $0x204] sm:$0xf]
      %v332 = vld [vmem:[%s193 + $0x208] sm:$0xf]
      %v333 = vld [vmem:[%s193 + $0x20c] sm:$0xf]
      %v334 = vld [vmem:[%s193 + $0x210] sm:$0xf]
      %v335 = vld [vmem:[%s193 + $0x214] sm:$0xf]
      %v336 = vld [vmem:[%s193 + $0x218] sm:$0xf]
      %v337 = vld [vmem:[%s193 + $0x21c] sm:$0xf]
      %v338 = vld [vmem:[%s193 + $0x220] sm:$0xf]
      %v339 = vld [vmem:[%s193 + $0x224] sm:$0xf]
      %v340 = vld [vmem:[%s193 + $0x228] sm:$0xf]
      %v341 = vld [vmem:[%s193 + $0x22c] sm:$0xf]
      %v342 = vld [vmem:[%s193 + $0x230] sm:$0xf]
      %v343 = vld [vmem:[%s193 + $0x234] sm:$0xf]
      %v344 = vld [vmem:[%s193 + $0x238] sm:$0xf]
      %v345 = vld [vmem:[%s193 + $0x23c] sm:$0xf]
      %v346 = vld [vmem:[%s193 + $0x240] sm:$0xf]
      %v347 = vld [vmem:[%s193 + $0x244] sm:$0xf]
      %v348 = vld [vmem:[%s193 + $0x248] sm:$0xf]
      %v349 = vld [vmem:[%s193 + $0x24c] sm:$0xf]
      %v350 = vld [vmem:[%s193 + $0x250] sm:$0xf]
      %v351 = vld [vmem:[%s193 + $0x254] sm:$0xf]
      %v352 = vld [vmem:[%s193 + $0x258] sm:$0xf]
      %v353 = vld [vmem:[%s193 + $0x25c] sm:$0xf]
      %v354 = vld [vmem:[%s193 + $0x260] sm:$0xf]
      %v355 = vld [vmem:[%s193 + $0x264] sm:$0xf]
      %v356 = vld [vmem:[%s193 + $0x268] sm:$0xf]
      %v357 = vld [vmem:[%s193 + $0x26c] sm:$0xf]
      %v358 = vld [vmem:[%s193 + $0x270] sm:$0xf]
      %v359 = vld [vmem:[%s193 + $0x274] sm:$0xf]
      %v360 = vld [vmem:[%s193 + $0x278] sm:$0xf]
      %v361 = vld [vmem:[%s193 + $0x27c] sm:$0xf]
      %v362 = vld [vmem:[%s193 + $0x280] sm:$0xf]
      %v363 = vld [vmem:[%s193 + $0x284] sm:$0xf]
      %v364 = vld [vmem:[%s193 + $0x288] sm:$0xf]
      %v365 = vld [vmem:[%s193 + $0x28c] sm:$0xf]
      %v366 = vld [vmem:[%s193 + $0x290] sm:$0xf]
      %v367 = vld [vmem:[%s193 + $0x294] sm:$0xf]
      %v368 = vld [vmem:[%s193 + $0x298] sm:$0xf]
      %v369 = vld [vmem:[%s193 + $0x29c] sm:$0xf]
      %v370 = vld [vmem:[%s193 + $0x2a0] sm:$0xf]
      %v371 = vld [vmem:[%s193 + $0x2a4] sm:$0xf]
      %v372 = vld [vmem:[%s193 + $0x2a8] sm:$0xf]
      %v373 = vld [vmem:[%s193 + $0x2ac] sm:$0xf]
      %v374 = vld [vmem:[%s193 + $0x2b0] sm:$0xf]
      %v375 = vld [vmem:[%s193 + $0x2b4] sm:$0xf]
      %v376 = vld [vmem:[%s193 + $0x2b8] sm:$0xf]
      %v377 = vld [vmem:[%s193 + $0x2bc] sm:$0xf]
      %v378 = vld [vmem:[%s193 + $0x2c0] sm:$0xf]
      %v379 = vld [vmem:[%s193 + $0x2c4] sm:$0xf]
      %v380 = vld [vmem:[%s193 + $0x2c8] sm:$0xf]
      %v381 = vld [vmem:[%s193 + $0x2cc] sm:$0xf]
      %v382 = vld [vmem:[%s193 + $0x2d0] sm:$0xf]
      %v383 = vld [vmem:[%s193 + $0x2d4] sm:$0xf]
      %v384 = vld [vmem:[%s193 + $0x2d8] sm:$0xf]
      %v385 = vld [vmem:[%s193 + $0x2dc] sm:$0xf]
      %v386 = vld [vmem:[%s193 + $0x2e0] sm:$0xf]
      %v387 = vld [vmem:[%s193 + $0x2e4] sm:$0xf]
      %v388 = vld [vmem:[%s193 + $0x2e8] sm:$0xf]
      %v389 = vld [vmem:[%s193 + $0x2ec] sm:$0xf]
      %v390 = vld [vmem:[%s193 + $0x2f0] sm:$0xf]
      %v391 = vld [vmem:[%s193 + $0x2f4] sm:$0xf]
      %v392 = vld [vmem:[%s193 + $0x2f8] sm:$0xf]
      %v393 = vld [vmem:[%s193 + $0x2fc] sm:$0xf]
      %v394 = vld [vmem:[%s193 + $0x300] sm:$0xf]
      %v395 = vld [vmem:[%s193 + $0x304] sm:$0xf]
      %v396 = vld [vmem:[%s193 + $0x308] sm:$0xf]
      %v397 = vld [vmem:[%s193 + $0x30c] sm:$0xf]
      %v398 = vld [vmem:[%s193 + $0x310] sm:$0xf]
      %v399 = vld [vmem:[%s193 + $0x314] sm:$0xf]
      %v400 = vld [vmem:[%s193 + $0x318] sm:$0xf]
      %v401 = vld [vmem:[%s193 + $0x31c] sm:$0xf]
      %v402 = vld [vmem:[%s193 + $0x320] sm:$0xf]
      %v403 = vld [vmem:[%s193 + $0x324] sm:$0xf]
      %v404 = vld [vmem:[%s193 + $0x328] sm:$0xf]
      %v405 = vld [vmem:[%s193 + $0x32c] sm:$0xf]
      %v406 = vld [vmem:[%s193 + $0x330] sm:$0xf]
      %v407 = vld [vmem:[%s193 + $0x334] sm:$0xf]
      %v408 = vld [vmem:[%s193 + $0x338] sm:$0xf]
      %v409 = vld [vmem:[%s193 + $0x33c] sm:$0xf]
      %v410 = vld [vmem:[%s193 + $0x340] sm:$0xf]
      %v411 = vld [vmem:[%s193 + $0x344] sm:$0xf]
      %v412 = vld [vmem:[%s193 + $0x348] sm:$0xf]
      %v413 = vld [vmem:[%s193 + $0x34c] sm:$0xf]
      %v414 = vld [vmem:[%s193 + $0x350] sm:$0xf]
      %v415 = vld [vmem:[%s193 + $0x354] sm:$0xf]
      %v416 = vld [vmem:[%s193 + $0x358] sm:$0xf]
      %v417 = vld [vmem:[%s193 + $0x35c] sm:$0xf]
      %v418 = vld [vmem:[%s193 + $0x360] sm:$0xf]
      %v419 = vld [vmem:[%s193 + $0x364] sm:$0xf]
      %v420 = vld [vmem:[%s193 + $0x368] sm:$0xf]
      %v421 = vld [vmem:[%s193 + $0x36c] sm:$0xf]
      %v422 = vld [vmem:[%s193 + $0x370] sm:$0xf]
      %v423 = vld [vmem:[%s193 + $0x374] sm:$0xf]
      %v424 = vld [vmem:[%s193 + $0x378] sm:$0xf]
      %v425 = vld [vmem:[%s193 + $0x37c] sm:$0xf]
      %v426 = vld [vmem:[%s193 + $0x380] sm:$0xf]
      %v427 = vld [vmem:[%s193 + $0x384] sm:$0xf]
      %v428 = vld [vmem:[%s193 + $0x388] sm:$0xf]
      %v429 = vld [vmem:[%s193 + $0x38c] sm:$0xf]
      %v430 = vld [vmem:[%s193 + $0x390] sm:$0xf]
      %v431 = vld [vmem:[%s193 + $0x394] sm:$0xf]
      %v432 = vld [vmem:[%s193 + $0x398] sm:$0xf]
      %v433 = vld [vmem:[%s193 + $0x39c] sm:$0xf]
      %v434 = vld [vmem:[%s193 + $0x3a0] sm:$0xf]
      %v435 = vld [vmem:[%s193 + $0x3a4] sm:$0xf]
      %v436 = vld [vmem:[%s193 + $0x3a8] sm:$0xf]
      %v437 = vld [vmem:[%s193 + $0x3ac] sm:$0xf]
      %v438 = vld [vmem:[%s193 + $0x3b0] sm:$0xf]
      %v439 = vld [vmem:[%s193 + $0x3b4] sm:$0xf]
      %v440 = vld [vmem:[%s193 + $0x3b8] sm:$0xf]
      %v441 = vld [vmem:[%s193 + $0x3bc] sm:$0xf]
      %v442 = vld [vmem:[%s193 + $0x3c0] sm:$0xf]
      %v443 = vld [vmem:[%s193 + $0x3c4] sm:$0xf]
      %v444 = vld [vmem:[%s193 + $0x3c8] sm:$0xf]
      %v445 = vld [vmem:[%s193 + $0x3cc] sm:$0xf]
      %v446 = vld [vmem:[%s193 + $0x3d0] sm:$0xf]
      %v447 = vld [vmem:[%s193 + $0x3d4] sm:$0xf]
      %v448 = vld [vmem:[%s193 + $0x3d8] sm:$0xf]
      %v449 = vld [vmem:[%s193 + $0x3dc] sm:$0xf]
      %v450 = vld [vmem:[%s193 + $0x3e0] sm:$0xf]
      %v451 = vld [vmem:[%s193 + $0x3e4] sm:$0xf]
      %v452 = vld [vmem:[%s193 + $0x3e8] sm:$0xf]
      %v453 = vld [vmem:[%s193 + $0x3ec] sm:$0xf]
      %v454 = vld [vmem:[%s193 + $0x3f0] sm:$0xf]
      %v455 = vld [vmem:[%s193 + $0x3f4] sm:$0xf]
      %v456 = vld [vmem:[%s193 + $0x3f8] sm:$0xf]
      %v457 = vld [vmem:[%s193 + $0x3fc] sm:$0xf]
      %v458 = vld [vmem:[%s1] sm:$0xf]
      %v459 = vld [vmem:[%s1 + $0x4] sm:$0xf]
      %v460 = vld [vmem:[%s1 + $0x8] sm:$0xf]
      %v461 = vld [vmem:[%s1 + $0xc] sm:$0x3]
      %v718 = vunpack.c.l.b16 %v202
      %v719 = vunpack.c.l.b16 %v203
      %v720 = vunpack.c.l.b16 %v204
      %v721 = vunpack.c.l.b16 %v205
      %v722 = vunpack.c.l.b16 %v206
      %v723 = vunpack.c.l.b16 %v207
      %v724 = vunpack.c.l.b16 %v208
      %v725 = vunpack.c.l.b16 %v209
      %v726 = vunpack.c.l.b16 %v210
      %v727 = vunpack.c.l.b16 %v211
      %v728 = vunpack.c.l.b16 %v212
      %v729 = vunpack.c.l.b16 %v213
      %v730 = vunpack.c.l.b16 %v214
      %v731 = vunpack.c.l.b16 %v215
      %v732 = vunpack.c.l.b16 %v216
      %v733 = vunpack.c.l.b16 %v217
      %v734 = vunpack.c.l.b16 %v218
      %v735 = vunpack.c.l.b16 %v219
      %v736 = vunpack.c.l.b16 %v220
      %v737 = vunpack.c.l.b16 %v221
      %v738 = vunpack.c.l.b16 %v222
      %v739 = vunpack.c.l.b16 %v223
      %v740 = vunpack.c.l.b16 %v224
      %v741 = vunpack.c.l.b16 %v225
      %v742 = vunpack.c.l.b16 %v226
      %v743 = vunpack.c.l.b16 %v227
      %v744 = vunpack.c.l.b16 %v228
      %v745 = vunpack.c.l.b16 %v229
      %v746 = vunpack.c.l.b16 %v230
      %v747 = vunpack.c.l.b16 %v231
      %v748 = vunpack.c.l.b16 %v232
      %v749 = vunpack.c.l.b16 %v233
      %v750 = vunpack.c.l.b16 %v234
      %v751 = vunpack.c.l.b16 %v235
      %v752 = vunpack.c.l.b16 %v236
      %v753 = vunpack.c.l.b16 %v237
      %v754 = vunpack.c.l.b16 %v238
      %v755 = vunpack.c.l.b16 %v239
      %v756 = vunpack.c.l.b16 %v240
      %v757 = vunpack.c.l.b16 %v241
      %v758 = vunpack.c.l.b16 %v242
      %v759 = vunpack.c.l.b16 %v243
      %v760 = vunpack.c.l.b16 %v244
      %v761 = vunpack.c.l.b16 %v245
      %v762 = vunpack.c.l.b16 %v246
      %v763 = vunpack.c.l.b16 %v247
      %v764 = vunpack.c.l.b16 %v248
      %v765 = vunpack.c.l.b16 %v249
      %v766 = vunpack.c.l.b16 %v250
      %v767 = vunpack.c.l.b16 %v251
      %v768 = vunpack.c.l.b16 %v252
      %v769 = vunpack.c.l.b16 %v253
      %v770 = vunpack.c.l.b16 %v254
      %v771 = vunpack.c.l.b16 %v255
      %v772 = vunpack.c.l.b16 %v256
      %v773 = vunpack.c.l.b16 %v257
      %v774 = vunpack.c.l.b16 %v258
      %v775 = vunpack.c.l.b16 %v259
      %v776 = vunpack.c.l.b16 %v260
      %v777 = vunpack.c.l.b16 %v261
      %v778 = vunpack.c.l.b16 %v262
      %v779 = vunpack.c.l.b16 %v263
      %v780 = vunpack.c.l.b16 %v264
      %v781 = vunpack.c.l.b16 %v265
      %v782 = vunpack.c.l.b16 %v266
      %v783 = vunpack.c.l.b16 %v267
      %v784 = vunpack.c.l.b16 %v268
      %v785 = vunpack.c.l.b16 %v269
      %v786 = vunpack.c.l.b16 %v270
      %v787 = vunpack.c.l.b16 %v271
      %v788 = vunpack.c.l.b16 %v272
      %v789 = vunpack.c.l.b16 %v273
      %v790 = vunpack.c.l.b16 %v274
      %v791 = vunpack.c.l.b16 %v275
      %v792 = vunpack.c.l.b16 %v276
      %v793 = vunpack.c.l.b16 %v277
      %v794 = vunpack.c.l.b16 %v278
      %v795 = vunpack.c.l.b16 %v279
      %v796 = vunpack.c.l.b16 %v280
      %v797 = vunpack.c.l.b16 %v281
      %v798 = vunpack.c.l.b16 %v282
      %v799 = vunpack.c.l.b16 %v283
      %v800 = vunpack.c.l.b16 %v284
      %v801 = vunpack.c.l.b16 %v285
      %v802 = vunpack.c.l.b16 %v286
      %v803 = vunpack.c.l.b16 %v287
      %v804 = vunpack.c.l.b16 %v288
      %v805 = vunpack.c.l.b16 %v289
      %v806 = vunpack.c.l.b16 %v290
      %v807 = vunpack.c.l.b16 %v291
      %v808 = vunpack.c.l.b16 %v292
      %v809 = vunpack.c.l.b16 %v293
      %v810 = vunpack.c.l.b16 %v294
      %v811 = vunpack.c.l.b16 %v295
      %v812 = vunpack.c.l.b16 %v296
      %v813 = vunpack.c.l.b16 %v297
      %v814 = vunpack.c.l.b16 %v298
      %v815 = vunpack.c.l.b16 %v299
      %v816 = vunpack.c.l.b16 %v300
      %v817 = vunpack.c.l.b16 %v301
      %v818 = vunpack.c.l.b16 %v302
      %v819 = vunpack.c.l.b16 %v303
      %v820 = vunpack.c.l.b16 %v304
      %v821 = vunpack.c.l.b16 %v305
      %v822 = vunpack.c.l.b16 %v306
      %v823 = vunpack.c.l.b16 %v307
      %v824 = vunpack.c.l.b16 %v308
      %v825 = vunpack.c.l.b16 %v309
      %v826 = vunpack.c.l.b16 %v310
      %v827 = vunpack.c.l.b16 %v311
      %v828 = vunpack.c.l.b16 %v312
      %v829 = vunpack.c.l.b16 %v313
      %v830 = vunpack.c.l.b16 %v314
      %v831 = vunpack.c.l.b16 %v315
      %v832 = vunpack.c.l.b16 %v316
      %v833 = vunpack.c.l.b16 %v317
      %v834 = vunpack.c.l.b16 %v318
      %v835 = vunpack.c.l.b16 %v319
      %v836 = vunpack.c.l.b16 %v320
      %v837 = vunpack.c.l.b16 %v321
      %v838 = vunpack.c.l.b16 %v322
      %v839 = vunpack.c.l.b16 %v323
      %v840 = vunpack.c.l.b16 %v324
      %v841 = vunpack.c.l.b16 %v325
      %v842 = vunpack.c.l.b16 %v326
      %v843 = vunpack.c.l.b16 %v327
      %v844 = vunpack.c.l.b16 %v328
      %v845 = vunpack.c.l.b16 %v329
      %v846 = vunpack.c.l.b16 %v330
      %v847 = vunpack.c.l.b16 %v331
      %v848 = vunpack.c.l.b16 %v332
      %v849 = vunpack.c.l.b16 %v333
      %v850 = vunpack.c.l.b16 %v334
      %v851 = vunpack.c.l.b16 %v335
      %v852 = vunpack.c.l.b16 %v336
      %v853 = vunpack.c.l.b16 %v337
      %v854 = vunpack.c.l.b16 %v338
      %v855 = vunpack.c.l.b16 %v339
      %v856 = vunpack.c.l.b16 %v340
      %v857 = vunpack.c.l.b16 %v341
      %v858 = vunpack.c.l.b16 %v342
      %v859 = vunpack.c.l.b16 %v343
      %v860 = vunpack.c.l.b16 %v344
      %v861 = vunpack.c.l.b16 %v345
      %v862 = vunpack.c.l.b16 %v346
      %v863 = vunpack.c.l.b16 %v347
      %v864 = vunpack.c.l.b16 %v348
      %v865 = vunpack.c.l.b16 %v349
      %v866 = vunpack.c.l.b16 %v350
      %v867 = vunpack.c.l.b16 %v351
      %v868 = vunpack.c.l.b16 %v352
      %v869 = vunpack.c.l.b16 %v353
      %v870 = vunpack.c.l.b16 %v354
      %v871 = vunpack.c.l.b16 %v355
      %v872 = vunpack.c.l.b16 %v356
      %v873 = vunpack.c.l.b16 %v357
      %v874 = vunpack.c.l.b16 %v358
      %v875 = vunpack.c.l.b16 %v359
      %v876 = vunpack.c.l.b16 %v360
      %v877 = vunpack.c.l.b16 %v361
      %v878 = vunpack.c.l.b16 %v362
      %v879 = vunpack.c.l.b16 %v363
      %v880 = vunpack.c.l.b16 %v364
      %v881 = vunpack.c.l.b16 %v365
      %v882 = vunpack.c.l.b16 %v366
      %v883 = vunpack.c.l.b16 %v367
      %v884 = vunpack.c.l.b16 %v368
      %v885 = vunpack.c.l.b16 %v369
      %v886 = vunpack.c.l.b16 %v370
      %v887 = vunpack.c.l.b16 %v371
      %v888 = vunpack.c.l.b16 %v372
      %v889 = vunpack.c.l.b16 %v373
      %v890 = vunpack.c.l.b16 %v374
      %v891 = vunpack.c.l.b16 %v375
      %v892 = vunpack.c.l.b16 %v376
      %v893 = vunpack.c.l.b16 %v377
      %v894 = vunpack.c.l.b16 %v378
      %v895 = vunpack.c.l.b16 %v379
      %v896 = vunpack.c.l.b16 %v380
      %v897 = vunpack.c.l.b16 %v381
      %v898 = vunpack.c.l.b16 %v382
      %v899 = vunpack.c.l.b16 %v383
      %v900 = vunpack.c.l.b16 %v384
      %v901 = vunpack.c.l.b16 %v385
      %v902 = vunpack.c.l.b16 %v386
      %v903 = vunpack.c.l.b16 %v387
      %v904 = vunpack.c.l.b16 %v388
      %v905 = vunpack.c.l.b16 %v389
      %v906 = vunpack.c.l.b16 %v390
      %v907 = vunpack.c.l.b16 %v391
      %v908 = vunpack.c.l.b16 %v392
      %v909 = vunpack.c.l.b16 %v393
      %v910 = vunpack.c.l.b16 %v394
      %v911 = vunpack.c.l.b16 %v395
      %v912 = vunpack.c.l.b16 %v396
      %v913 = vunpack.c.l.b16 %v397
      %v914 = vunpack.c.l.b16 %v398
      %v915 = vunpack.c.l.b16 %v399
      %v916 = vunpack.c.l.b16 %v400
      %v917 = vunpack.c.l.b16 %v401
      %v918 = vunpack.c.l.b16 %v402
      %v919 = vunpack.c.l.b16 %v403
      %v920 = vunpack.c.l.b16 %v404
      %v921 = vunpack.c.l.b16 %v405
      %v922 = vunpack.c.l.b16 %v406
      %v923 = vunpack.c.l.b16 %v407
      %v924 = vunpack.c.l.b16 %v408
      %v925 = vunpack.c.l.b16 %v409
      %v926 = vunpack.c.l.b16 %v410
      %v927 = vunpack.c.l.b16 %v411
      %v928 = vunpack.c.l.b16 %v412
      %v929 = vunpack.c.l.b16 %v413
      %v930 = vunpack.c.l.b16 %v414
      %v931 = vunpack.c.l.b16 %v415
      %v932 = vunpack.c.l.b16 %v416
      %v933 = vunpack.c.l.b16 %v417
      %v934 = vunpack.c.l.b16 %v418
      %v935 = vunpack.c.l.b16 %v419
      %v936 = vunpack.c.l.b16 %v420
      %v937 = vunpack.c.l.b16 %v421
      %v938 = vunpack.c.l.b16 %v422
      %v939 = vunpack.c.l.b16 %v423
      %v940 = vunpack.c.l.b16 %v424
      %v941 = vunpack.c.l.b16 %v425
      %v942 = vunpack.c.l.b16 %v426
      %v943 = vunpack.c.l.b16 %v427
      %v944 = vunpack.c.l.b16 %v428
      %v945 = vunpack.c.l.b16 %v429
      %v946 = vunpack.c.l.b16 %v430
      %v947 = vunpack.c.l.b16 %v431
      %v948 = vunpack.c.l.b16 %v432
      %v949 = vunpack.c.l.b16 %v433
      %v950 = vunpack.c.l.b16 %v434
      %v951 = vunpack.c.l.b16 %v435
      %v952 = vunpack.c.l.b16 %v436
      %v953 = vunpack.c.l.b16 %v437
      %v954 = vunpack.c.l.b16 %v438
      %v955 = vunpack.c.l.b16 %v439
      %v956 = vunpack.c.l.b16 %v440
      %v957 = vunpack.c.l.b16 %v441
      %v958 = vunpack.c.l.b16 %v442
      %v959 = vunpack.c.l.b16 %v443
      %v960 = vunpack.c.l.b16 %v444
      %v961 = vunpack.c.l.b16 %v445
      %v962 = vunpack.c.l.b16 %v446
      %v963 = vunpack.c.l.b16 %v447
      %v964 = vunpack.c.l.b16 %v448
      %v965 = vunpack.c.l.b16 %v449
      %v966 = vunpack.c.l.b16 %v450
      %v967 = vunpack.c.l.b16 %v451
      %v968 = vunpack.c.l.b16 %v452
      %v969 = vunpack.c.l.b16 %v453
      %v970 = vunpack.c.l.b16 %v454
      %v971 = vunpack.c.l.b16 %v455
      %v972 = vunpack.c.l.b16 %v456
      %v973 = vunpack.c.l.b16 %v457
      %v974 = vpack.c.b16 %v719, %v718
      %v975 = vpack.c.b16 %v721, %v720
      %v976 = vpack.c.b16 %v723, %v722
      %v977 = vpack.c.b16 %v725, %v724
      %v978 = vpack.c.b16 %v727, %v726
      %v979 = vpack.c.b16 %v729, %v728
      %v980 = vpack.c.b16 %v731, %v730
      %v981 = vpack.c.b16 %v733, %v732
      %v982 = vpack.c.b16 %v735, %v734
      %v983 = vpack.c.b16 %v737, %v736
      %v984 = vpack.c.b16 %v739, %v738
      %v985 = vpack.c.b16 %v741, %v740
      %v986 = vpack.c.b16 %v743, %v742
      %v987 = vpack.c.b16 %v745, %v744
      %v988 = vpack.c.b16 %v747, %v746
      %v989 = vpack.c.b16 %v749, %v748
      %v990 = vpack.c.b16 %v751, %v750
      %v991 = vpack.c.b16 %v753, %v752
      %v992 = vpack.c.b16 %v755, %v754
      %v993 = vpack.c.b16 %v757, %v756
      %v994 = vpack.c.b16 %v759, %v758
      %v995 = vpack.c.b16 %v761, %v760
      %v996 = vpack.c.b16 %v763, %v762
      %v997 = vpack.c.b16 %v765, %v764
      %v998 = vpack.c.b16 %v767, %v766
      %v999 = vpack.c.b16 %v769, %v768
      %v1000 = vpack.c.b16 %v771, %v770
      %v1001 = vpack.c.b16 %v773, %v772
      %v1002 = vpack.c.b16 %v775, %v774
      %v1003 = vpack.c.b16 %v777, %v776
      %v1004 = vpack.c.b16 %v779, %v778
      %v1005 = vpack.c.b16 %v781, %v780
      %v1006 = vpack.c.b16 %v783, %v782
      %v1007 = vpack.c.b16 %v785, %v784
      %v1008 = vpack.c.b16 %v787, %v786
      %v1009 = vpack.c.b16 %v789, %v788
      %v1010 = vpack.c.b16 %v791, %v790
      %v1011 = vpack.c.b16 %v793, %v792
      %v1012 = vpack.c.b16 %v795, %v794
      %v1013 = vpack.c.b16 %v797, %v796
      %v1014 = vpack.c.b16 %v799, %v798
      %v1015 = vpack.c.b16 %v801, %v800
      %v1016 = vpack.c.b16 %v803, %v802
      %v1017 = vpack.c.b16 %v805, %v804
      %v1018 = vpack.c.b16 %v807, %v806
      %v1019 = vpack.c.b16 %v809, %v808
      %v1020 = vpack.c.b16 %v811, %v810
      %v1021 = vpack.c.b16 %v813, %v812
      %v1022 = vpack.c.b16 %v815, %v814
      %v1023 = vpack.c.b16 %v817, %v816
      %v1024 = vpack.c.b16 %v819, %v818
      %v1025 = vpack.c.b16 %v821, %v820
      %v1026 = vpack.c.b16 %v823, %v822
      %v1027 = vpack.c.b16 %v825, %v824
      %v1028 = vpack.c.b16 %v827, %v826
      %v1029 = vpack.c.b16 %v829, %v828
      %v1030 = vpack.c.b16 %v831, %v830
      %v1031 = vpack.c.b16 %v833, %v832
      %v1032 = vpack.c.b16 %v835, %v834
      %v1033 = vpack.c.b16 %v837, %v836
      %v1034 = vpack.c.b16 %v839, %v838
      %v1035 = vpack.c.b16 %v841, %v840
      %v1036 = vpack.c.b16 %v843, %v842
      %v1037 = vpack.c.b16 %v845, %v844
      %v1038 = vpack.c.b16 %v847, %v846
      %v1039 = vpack.c.b16 %v849, %v848
      %v1040 = vpack.c.b16 %v851, %v850
      %v1041 = vpack.c.b16 %v853, %v852
      %v1042 = vpack.c.b16 %v855, %v854
      %v1043 = vpack.c.b16 %v857, %v856
      %v1044 = vpack.c.b16 %v859, %v858
      %v1045 = vpack.c.b16 %v861, %v860
      %v1046 = vpack.c.b16 %v863, %v862
      %v1047 = vpack.c.b16 %v865, %v864
      %v1048 = vpack.c.b16 %v867, %v866
      %v1049 = vpack.c.b16 %v869, %v868
      %v1050 = vpack.c.b16 %v871, %v870
      %v1051 = vpack.c.b16 %v873, %v872
      %v1052 = vpack.c.b16 %v875, %v874
      %v1053 = vpack.c.b16 %v877, %v876
      %v1054 = vpack.c.b16 %v879, %v878
      %v1055 = vpack.c.b16 %v881, %v880
      %v1056 = vpack.c.b16 %v883, %v882
      %v1057 = vpack.c.b16 %v885, %v884
      %v1058 = vpack.c.b16 %v887, %v886
      %v1059 = vpack.c.b16 %v889, %v888
      %v1060 = vpack.c.b16 %v891, %v890
      %v1061 = vpack.c.b16 %v893, %v892
      %v1062 = vpack.c.b16 %v895, %v894
      %v1063 = vpack.c.b16 %v897, %v896
      %v1064 = vpack.c.b16 %v899, %v898
      %v1065 = vpack.c.b16 %v901, %v900
      %v1066 = vpack.c.b16 %v903, %v902
      %v1067 = vpack.c.b16 %v905, %v904
      %v1068 = vpack.c.b16 %v907, %v906
      %v1069 = vpack.c.b16 %v909, %v908
      %v1070 = vpack.c.b16 %v911, %v910
      %v1071 = vpack.c.b16 %v913, %v912
      %v1072 = vpack.c.b16 %v915, %v914
      %v1073 = vpack.c.b16 %v917, %v916
      %v1074 = vpack.c.b16 %v919, %v918
      %v1075 = vpack.c.b16 %v921, %v920
      %v1076 = vpack.c.b16 %v923, %v922
      %v1077 = vpack.c.b16 %v925, %v924
      %v1078 = vpack.c.b16 %v927, %v926
      %v1079 = vpack.c.b16 %v929, %v928
      %v1080 = vpack.c.b16 %v931, %v930
      %v1081 = vpack.c.b16 %v933, %v932
      %v1082 = vpack.c.b16 %v935, %v934
      %v1083 = vpack.c.b16 %v937, %v936
      %v1084 = vpack.c.b16 %v939, %v938
      %v1085 = vpack.c.b16 %v941, %v940
      %v1086 = vpack.c.b16 %v943, %v942
      %v1087 = vpack.c.b16 %v945, %v944
      %v1088 = vpack.c.b16 %v947, %v946
      %v1089 = vpack.c.b16 %v949, %v948
      %v1090 = vpack.c.b16 %v951, %v950
      %v1091 = vpack.c.b16 %v953, %v952
      %v1092 = vpack.c.b16 %v955, %v954
      %v1093 = vpack.c.b16 %v957, %v956
      %v1094 = vpack.c.b16 %v959, %v958
      %v1095 = vpack.c.b16 %v961, %v960
      %v1096 = vpack.c.b16 %v963, %v962
      %v1097 = vpack.c.b16 %v965, %v964
      %v1098 = vpack.c.b16 %v967, %v966
      %v1099 = vpack.c.b16 %v969, %v968
      %v1100 = vpack.c.b16 %v971, %v970
      %v1101 = vpack.c.b16 %v973, %v972
      %v1106 = vunpack.c.l.b16 %v458
      %v1107 = vunpack.c.l.b16 %v459
      %v1108 = vunpack.c.l.b16 %v460
      %v1109 = vunpack.c.l.b16 %v461
      %v1110 = vpack.c.b16 %v1107, %v1106
      %v1111 = vpack.c.b16 %v1109, %v1108
      %vm1113 = vcmask 220160
      %v1115 = vsel %vm1113, %v974, 0
      %v1118 = vsel %vm1113, %v975, 0
      %v1121 = vsel %vm1113, %v976, 0
      %v1124 = vsel %vm1113, %v977, 0
      %v1127 = vsel %vm1113, %v978, 0
      %v1130 = vsel %vm1113, %v979, 0
      %v1133 = vsel %vm1113, %v980, 0
      %v1136 = vsel %vm1113, %v981, 0
      %v1139 = vsel %vm1113, %v982, 0
      %v1142 = vsel %vm1113, %v983, 0
      %v1145 = vsel %vm1113, %v984, 0
      %v1148 = vsel %vm1113, %v985, 0
      %v1151 = vsel %vm1113, %v986, 0
      %v1154 = vsel %vm1113, %v987, 0
      %v1157 = vsel %vm1113, %v988, 0
      %v1160 = vsel %vm1113, %v989, 0
      %v1163 = vsel %vm1113, %v990, 0
      %v1166 = vsel %vm1113, %v991, 0
      %v1169 = vsel %vm1113, %v992, 0
      %v1172 = vsel %vm1113, %v993, 0
      %v1175 = vsel %vm1113, %v994, 0
      %v1178 = vsel %vm1113, %v995, 0
      %v1181 = vsel %vm1113, %v996, 0
      %v1184 = vsel %vm1113, %v997, 0
      %v1187 = vsel %vm1113, %v998, 0
      %v1190 = vsel %vm1113, %v999, 0
      %v1193 = vsel %vm1113, %v1000, 0
      %v1196 = vsel %vm1113, %v1001, 0
      %v1199 = vsel %vm1113, %v1002, 0
      %v1202 = vsel %vm1113, %v1003, 0
      %v1205 = vsel %vm1113, %v1004, 0
      %v1208 = vsel %vm1113, %v1005, 0
      %v1211 = vsel %vm1113, %v1006, 0
      %v1214 = vsel %vm1113, %v1007, 0
      %v1217 = vsel %vm1113, %v1008, 0
      %v1220 = vsel %vm1113, %v1009, 0
      %v1223 = vsel %vm1113, %v1010, 0
      %v1226 = vsel %vm1113, %v1011, 0
      %v1229 = vsel %vm1113, %v1012, 0
      %v1232 = vsel %vm1113, %v1013, 0
      %v1235 = vsel %vm1113, %v1014, 0
      %v1238 = vsel %vm1113, %v1015, 0
      %v1241 = vsel %vm1113, %v1016, 0
      %v1244 = vsel %vm1113, %v1017, 0
      %v1247 = vsel %vm1113, %v1018, 0
      %v1250 = vsel %vm1113, %v1019, 0
      %v1253 = vsel %vm1113, %v1020, 0
      %v1256 = vsel %vm1113, %v1021, 0
      %v1259 = vsel %vm1113, %v1022, 0
      %v1262 = vsel %vm1113, %v1023, 0
      %v1265 = vsel %vm1113, %v1024, 0
      %v1268 = vsel %vm1113, %v1025, 0
      %v1271 = vsel %vm1113, %v1026, 0
      %v1274 = vsel %vm1113, %v1027, 0
      %v1277 = vsel %vm1113, %v1028, 0
      %v1280 = vsel %vm1113, %v1029, 0
      %v1283 = vsel %vm1113, %v1030, 0
      %v1286 = vsel %vm1113, %v1031, 0
      %v1289 = vsel %vm1113, %v1032, 0
      %v1292 = vsel %vm1113, %v1033, 0
      %v1295 = vsel %vm1113, %v1034, 0
      %v1298 = vsel %vm1113, %v1035, 0
      %v1301 = vsel %vm1113, %v1036, 0
      %v1304 = vsel %vm1113, %v1037, 0
      %v1307 = vsel %vm1113, %v1038, 0
      %v1310 = vsel %vm1113, %v1039, 0
      %v1313 = vsel %vm1113, %v1040, 0
      %v1316 = vsel %vm1113, %v1041, 0
      %v1319 = vsel %vm1113, %v1042, 0
      %v1322 = vsel %vm1113, %v1043, 0
      %v1325 = vsel %vm1113, %v1044, 0
      %v1328 = vsel %vm1113, %v1045, 0
      %v1331 = vsel %vm1113, %v1046, 0
      %v1334 = vsel %vm1113, %v1047, 0
      %v1337 = vsel %vm1113, %v1048, 0
      %v1340 = vsel %vm1113, %v1049, 0
      %v1343 = vsel %vm1113, %v1050, 0
      %v1346 = vsel %vm1113, %v1051, 0
      %v1349 = vsel %vm1113, %v1052, 0
      %v1352 = vsel %vm1113, %v1053, 0
      %v1355 = vsel %vm1113, %v1054, 0
      %v1358 = vsel %vm1113, %v1055, 0
      %v1361 = vsel %vm1113, %v1056, 0
      %v1364 = vsel %vm1113, %v1057, 0
      %v1367 = vsel %vm1113, %v1058, 0
      %v1370 = vsel %vm1113, %v1059, 0
      %v1373 = vsel %vm1113, %v1060, 0
      %v1376 = vsel %vm1113, %v1061, 0
      %v1379 = vsel %vm1113, %v1062, 0
      %v1382 = vsel %vm1113, %v1063, 0
      %v1385 = vsel %vm1113, %v1064, 0
      %v1388 = vsel %vm1113, %v1065, 0
      %v1391 = vsel %vm1113, %v1066, 0
      %v1394 = vsel %vm1113, %v1067, 0
      %v1397 = vsel %vm1113, %v1068, 0
      %v1400 = vsel %vm1113, %v1069, 0
      %v1403 = vsel %vm1113, %v1070, 0
      %v1406 = vsel %vm1113, %v1071, 0
      %v1409 = vsel %vm1113, %v1072, 0
      %v1412 = vsel %vm1113, %v1073, 0
      %v1415 = vsel %vm1113, %v1074, 0
      %v1418 = vsel %vm1113, %v1075, 0
      %v1421 = vsel %vm1113, %v1076, 0
      %v1424 = vsel %vm1113, %v1077, 0
      %v1427 = vsel %vm1113, %v1078, 0
      %v1430 = vsel %vm1113, %v1079, 0
      %v1433 = vsel %vm1113, %v1080, 0
      %v1436 = vsel %vm1113, %v1081, 0
      %v1439 = vsel %vm1113, %v1082, 0
      %v1442 = vsel %vm1113, %v1083, 0
      %v1445 = vsel %vm1113, %v1084, 0
      %v1448 = vsel %vm1113, %v1085, 0
      %v1451 = vsel %vm1113, %v1086, 0
      %v1454 = vsel %vm1113, %v1087, 0
      %v1457 = vsel %vm1113, %v1088, 0
      %v1460 = vsel %vm1113, %v1089, 0
      %v1463 = vsel %vm1113, %v1090, 0
      %v1466 = vsel %vm1113, %v1091, 0
      %v1469 = vsel %vm1113, %v1092, 0
      %v1472 = vsel %vm1113, %v1093, 0
      %v1475 = vsel %vm1113, %v1094, 0
      %v1478 = vsel %vm1113, %v1095, 0
      %v1481 = vsel %vm1113, %v1096, 0
      %v1484 = vsel %vm1113, %v1097, 0
      %v1487 = vsel %vm1113, %v1098, 0
      %v1490 = vsel %vm1113, %v1099, 0
      %v1493 = vsel %vm1113, %v1100, 0
      %v1496 = vsel %vm1113, %v1101, 0
      %vm1498 = vcmask 1044480
      %vm1499 = vcmask 1045504
      %v1500 = vsel %vm1498, 4294967295, 65535
      %v1501 = vsel %vm1499, %v1500, 0
      %v1503 = vand.u32 %v1111, %v1501
      %1505 = vmatprep.subr.bf16.mxu0 0
      %1506 = vmatpush1.bf16.msra.mxu0 %v1110
      %1507 = vmatprep.subr.bf16.mxu0 0
      %1508 = vmatpush1.bf16.msra.mxu0 %v1503
      %1509 = vmatprep.subr.bf16.mxu0 0
      %1510 = vmatpush1.bf16.msra.mxu0 0
      %1511 = vmatprep.subr.bf16.mxu0 0
      %1512 = vmatpush1.bf16.msra.mxu0 0
      %1513 = vmatprep.subr.bf16.mxu0 0
      %1514 = vmatpush1.bf16.msra.mxu0 0
      %1515 = vmatprep.subr.bf16.mxu0 0
      %1516 = vmatpush1.bf16.msra.mxu0 0
      %1517 = vmatprep.subr.bf16.mxu0 0
      %1518 = vmatpush1.bf16.msra.mxu0 0
      %1519 = vmatprep.subr.bf16.mxu0 0
      %1520 = vmatpush1.bf16.msra.mxu0 0
      %1521 = vmatprep.subr.bf16.mxu0 0
      %1522 = vmatpush1.bf16.msra.mxu0 0
      %1523 = vmatprep.subr.bf16.mxu0 0
      %1524 = vmatpush1.bf16.msra.mxu0 0
      %1525 = vmatprep.subr.bf16.mxu0 0
      %1526 = vmatpush1.bf16.msra.mxu0 0
      %1527 = vmatprep.subr.bf16.mxu0 0
      %1528 = vmatpush1.bf16.msra.mxu0 0
      %1529 = vmatprep.subr.bf16.mxu0 0
      %1530 = vmatpush1.bf16.msra.mxu0 0
      %1531 = vmatprep.subr.bf16.mxu0 0
      %1532 = vmatpush1.bf16.msra.mxu0 0
      %1533 = vmatprep.subr.bf16.mxu0 0
      %1534 = vmatpush1.bf16.msra.mxu0 0
      %1535 = vmatprep.subr.bf16.mxu0 0
      %1536 = vmatpush1.bf16.msra.mxu0 0
      %1537 = vmatprep.mubr.bf16.mxu0 0
      %1538 = vmatmul.mubr.bf16.gmra.mrb[0].mxu0 %v1115
      %v1539 = vpop.f32.mrb[0].mxu0
      %v1540 = vadd.f32 0.0, %v1539
      %v1541 = vpop.f32.mrb[0].mxu0
      %v1542 = vpop.f32.mrb[0].mxu0
      %v1543 = vadd.f32 0.0, %v1542
      %v1544 = vpop.f32.mrb[0].mxu0
      %1545 = vmatprep.mubr.bf16.mxu0 0
      %1546 = vmatmul.mubr.bf16.gmra.mrb[0].mxu0 %v1118
      %v1547 = vpop.f32.mrb[0].mxu0
      %v1548 = vadd.f32 0.0, %v1547
      %v1549 = vpop.f32.mrb[0].mxu0
      %v1550 = vpop.f32.mrb[0].mxu0
      %v1551 = vadd.f32 0.0, %v1550
      %v1552 = vpop.f32.mrb[0].mxu0
      %1553 = vmatprep.mubr.bf16.mxu0 0
      %1554 = vmatmul.mubr.bf16.gmra.mrb[0].mxu0 %v1121
      %v1555 = vpop.f32.mrb[0].mxu0
      %v1556 = vadd.f32 0.0, %v1555
      %v1557 = vpop.f32.mrb[0].mxu0
      %v1558 = vpop.f32.mrb[0].mxu0
      %v1559 = vadd.f32 0.0, %v1558
      %v1560 = vpop.f32.mrb[0].mxu0
      %1561 = vmatprep.mubr.bf16.mxu0 0
      %1562 = vmatmul.mubr.bf16.gmra.mrb[0].mxu0 %v1124
      %v1563 = vpop.f32.mrb[0].mxu0
      %v1564 = vadd.f32 0.0, %v1563
      %v1565 = vpop.f32.mrb[0].mxu0
      %v1566 = vpop.f32.mrb[0].mxu0
      %v1567 = vadd.f32 0.0, %v1566
      %v1568 = vpop.f32.mrb[0].mxu0
      %1569 = vmatprep.mubr.bf16.mxu0 0
      %1570 = vmatmul.mubr.bf16.gmra.mrb[0].mxu0 %v1127
      %v1571 = vpop.f32.mrb[0].mxu0
      %v1572 = vadd.f32 0.0, %v1571
      %v1573 = vpop.f32.mrb[0].mxu0
      %v1574 = vpop.f32.mrb[0].mxu0
      %v1575 = vadd.f32 0.0, %v1574
      %v1576 = vpop.f32.mrb[0].mxu0
      %1577 = vmatprep.mubr.bf16.mxu0 0
      %1578 = vmatmul.mubr.bf16.gmra.mrb[0].mxu0 %v1130
      %v1579 = vpop.f32.mrb[0].mxu0
      %v1580 = vadd.f32 0.0, %v1579
      %v1581 = vpop.f32.mrb[0].mxu0
      %v1582 = vpop.f32.mrb[0].mxu0
      %v1583 = vadd.f32 0.0, %v1582
      %v1584 = vpop.f32.mrb[0].mxu0
      %1585 = vmatprep.mubr.bf16.mxu0 0
      %1586 = vmatmul.mubr.bf16.gmra.mrb[0].mxu0 %v1133
      %v1587 = vpop.f32.mrb[0].mxu0
      %v1588 = vadd.f32 0.0, %v1587
      %v1589 = vpop.f32.mrb[0].mxu0
      %v1590 = vpop.f32.mrb[0].mxu0
      %v1591 = vadd.f32 0.0, %v1590
      %v1592 = vpop.f32.mrb[0].mxu0
      %1593 = vmatprep.mubr.bf16.mxu0 0
      %1594 = vmatmul.mubr.bf16.gmra.mrb[0].mxu0 %v1136
      %v1595 = vpop.f32.mrb[0].mxu0
      %v1596 = vadd.f32 0.0, %v1595
      %v1597 = vpop.f32.mrb[0].mxu0
      %v1598 = vpop.f32.mrb[0].mxu0
      %v1599 = vadd.f32 0.0, %v1598
      %v1600 = vpop.f32.mrb[0].mxu0
      %1601 = vmatprep.mubr.bf16.mxu0 0
      %1602 = vmatmul.mubr.bf16.gmra.mrb[0].mxu0 %v1139
      %v1603 = vpop.f32.mrb[0].mxu0
      %v1604 = vadd.f32 0.0, %v1603
      %v1605 = vpop.f32.mrb[0].mxu0
      %v1606 = vpop.f32.mrb[0].mxu0
      %v1607 = vadd.f32 0.0, %v1606
      %v1608 = vpop.f32.mrb[0].mxu0
      %1609 = vmatprep.mubr.bf16.mxu0 0
      %1610 = vmatmul.mubr.bf16.gmra.mrb[0].mxu0 %v1142
      %v1611 = vpop.f32.mrb[0].mxu0
      %v1612 = vadd.f32 0.0, %v1611
      %v1613 = vpop.f32.mrb[0].mxu0
      %v1614 = vpop.f32.mrb[0].mxu0
      %v1615 = vadd.f32 0.0, %v1614
      %v1616 = vpop.f32.mrb[0].mxu0
      %1617 = vmatprep.mubr.bf16.mxu0 0
      %1618 = vmatmul.mubr.bf16.gmra.mrb[0].mxu0 %v1145
      %v1619 = vpop.f32.mrb[0].mxu0
      %v1620 = vadd.f32 0.0, %v1619
      %v1621 = vpop.f32.mrb[0].mxu0
      %v1622 = vpop.f32.mrb[0].mxu0
      %v1623 = vadd.f32 0.0, %v1622
      %v1624 = vpop.f32.mrb[0].mxu0
      %1625 = vmatprep.mubr.bf16.mxu0 0
      %1626 = vmatmul.mubr.bf16.gmra.mrb[0].mxu0 %v1148
      %v1627 = vpop.f32.mrb[0].mxu0
      %v1628 = vadd.f32 0.0, %v1627
      %v1629 = vpop.f32.mrb[0].mxu0
      %v1630 = vpop.f32.mrb[0].mxu0
      %v1631 = vadd.f32 0.0, %v1630
      %v1632 = vpop.f32.mrb[0].mxu0
      %1633 = vmatprep.mubr.bf16.mxu0 0
      %1634 = vmatmul.mubr.bf16.gmra.mrb[0].mxu0 %v1151
      %v1635 = vpop.f32.mrb[0].mxu0
      %v1636 = vadd.f32 0.0, %v1635
      %v1637 = vpop.f32.mrb[0].mxu0
      %v1638 = vpop.f32.mrb[0].mxu0
      %v1639 = vadd.f32 0.0, %v1638
      %v1640 = vpop.f32.mrb[0].mxu0
      %1641 = vmatprep.mubr.bf16.mxu0 0
      %1642 = vmatmul.mubr.bf16.gmra.mrb[0].mxu0 %v1154
      %v1643 = vpop.f32.mrb[0].mxu0
      %v1644 = vadd.f32 0.0, %v1643
      %v1645 = vpop.f32.mrb[0].mxu0
      %v1646 = vpop.f32.mrb[0].mxu0
      %v1647 = vadd.f32 0.0, %v1646
      %v1648 = vpop.f32.mrb[0].mxu0
      %1649 = vmatprep.mubr.bf16.mxu0 0
      %1650 = vmatmul.mubr.bf16.gmra.mrb[0].mxu0 %v1157
      %v1651 = vpop.f32.mrb[0].mxu0
      %v1652 = vadd.f32 0.0, %v1651
      %v1653 = vpop.f32.mrb[0].mxu0
      %v1654 = vpop.f32.mrb[0].mxu0
      %v1655 = vadd.f32 0.0, %v1654
      %v1656 = vpop.f32.mrb[0].mxu0
      %1657 = vmatprep.mubr.bf16.mxu0 0
      %1658 = vmatmul.mubr.bf16.gmra.mrb[0].mxu0 %v1160
      %v1659 = vpop.f32.mrb[0].mxu0
      %v1660 = vadd.f32 0.0, %v1659
      %v1661 = vpop.f32.mrb[0].mxu0
      %v1662 = vpop.f32.mrb[0].mxu0
      %v1663 = vadd.f32 0.0, %v1662
      %v1664 = vpop.f32.mrb[0].mxu0
      %1665 = vmatprep.mubr.bf16.mxu0 0
      %1666 = vmatmul.mubr.bf16.gmra.mrb[0].mxu0 %v1163
      %v1667 = vpop.f32.mrb[0].mxu0
      %v1668 = vadd.f32 0.0, %v1667
      %v1669 = vpop.f32.mrb[0].mxu0
      %v1670 = vpop.f32.mrb[0].mxu0
      %v1671 = vadd.f32 0.0, %v1670
      %v1672 = vpop.f32.mrb[0].mxu0
      %1673 = vmatprep.mubr.bf16.mxu0 0
      %1674 = vmatmul.mubr.bf16.gmra.mrb[0].mxu0 %v1166
      %v1675 = vpop.f32.mrb[0].mxu0
      %v1676 = vadd.f32 0.0, %v1675
      %v1677 = vpop.f32.mrb[0].mxu0
      %v1678 = vpop.f32.mrb[0].mxu0
      %v1679 = vadd.f32 0.0, %v1678
      %v1680 = vpop.f32.mrb[0].mxu0
      %1681 = vmatprep.mubr.bf16.mxu0 0
      %1682 = vmatmul.mubr.bf16.gmra.mrb[0].mxu0 %v1169
      %v1683 = vpop.f32.mrb[0].mxu0
      %v1684 = vadd.f32 0.0, %v1683
      %v1685 = vpop.f32.mrb[0].mxu0
      %v1686 = vpop.f32.mrb[0].mxu0
      %v1687 = vadd.f32 0.0, %v1686
      %v1688 = vpop.f32.mrb[0].mxu0
      %1689 = vmatprep.mubr.bf16.mxu0 0
      %1690 = vmatmul.mubr.bf16.gmra.mrb[0].mxu0 %v1172
      %v1691 = vpop.f32.mrb[0].mxu0
      %v1692 = vadd.f32 0.0, %v1691
      %v1693 = vpop.f32.mrb[0].mxu0
      %v1694 = vpop.f32.mrb[0].mxu0
      %v1695 = vadd.f32 0.0, %v1694
      %v1696 = vpop.f32.mrb[0].mxu0
      %1697 = vmatprep.mubr.bf16.mxu0 0
      %1698 = vmatmul.mubr.bf16.gmra.mrb[0].mxu0 %v1175
      %v1699 = vpop.f32.mrb[0].mxu0
      %v1700 = vadd.f32 0.0, %v1699
      %v1701 = vpop.f32.mrb[0].mxu0
      %v1702 = vpop.f32.mrb[0].mxu0
      %v1703 = vadd.f32 0.0, %v1702
      %v1704 = vpop.f32.mrb[0].mxu0
      %1705 = vmatprep.mubr.bf16.mxu0 0
      %1706 = vmatmul.mubr.bf16.gmra.mrb[0].mxu0 %v1178
      %v1707 = vpop.f32.mrb[0].mxu0
      %v1708 = vadd.f32 0.0, %v1707
      %v1709 = vpop.f32.mrb[0].mxu0
      %v1710 = vpop.f32.mrb[0].mxu0
      %v1711 = vadd.f32 0.0, %v1710
      %v1712 = vpop.f32.mrb[0].mxu0
      %1713 = vmatprep.mubr.bf16.mxu0 0
      %1714 = vmatmul.mubr.bf16.gmra.mrb[0].mxu0 %v1181
      %v1715 = vpop.f32.mrb[0].mxu0
      %v1716 = vadd.f32 0.0, %v1715
      %v1717 = vpop.f32.mrb[0].mxu0
      %v1718 = vpop.f32.mrb[0].mxu0
      %v1719 = vadd.f32 0.0, %v1718
      %v1720 = vpop.f32.mrb[0].mxu0
      %1721 = vmatprep.mubr.bf16.mxu0 0
      %1722 = vmatmul.mubr.bf16.gmra.mrb[0].mxu0 %v1184
      %v1723 = vpop.f32.mrb[0].mxu0
      %v1724 = vadd.f32 0.0, %v1723
      %v1725 = vpop.f32.mrb[0].mxu0
      %v1726 = vpop.f32.mrb[0].mxu0
      %v1727 = vadd.f32 0.0, %v1726
      %v1728 = vpop.f32.mrb[0].mxu0
      %1729 = vmatprep.mubr.bf16.mxu0 0
      %1730 = vmatmul.mubr.bf16.gmra.mrb[0].mxu0 %v1187
      %v1731 = vpop.f32.mrb[0].mxu0
      %v1732 = vadd.f32 0.0, %v1731
      %v1733 = vpop.f32.mrb[0].mxu0
      %v1734 = vpop.f32.mrb[0].mxu0
      %v1735 = vadd.f32 0.0, %v1734
      %v1736 = vpop.f32.mrb[0].mxu0
      %1737 = vmatprep.mubr.bf16.mxu0 0
      %1738 = vmatmul.mubr.bf16.gmra.mrb[0].mxu0 %v1190
      %v1739 = vpop.f32.mrb[0].mxu0
      %v1740 = vadd.f32 0.0, %v1739
      %v1741 = vpop.f32.mrb[0].mxu0
      %v1742 = vpop.f32.mrb[0].mxu0
      %v1743 = vadd.f32 0.0, %v1742
      %v1744 = vpop.f32.mrb[0].mxu0
      %1745 = vmatprep.mubr.bf16.mxu0 0
      %1746 = vmatmul.mubr.bf16.gmra.mrb[0].mxu0 %v1193
      %v1747 = vpop.f32.mrb[0].mxu0
      %v1748 = vadd.f32 0.0, %v1747
      %v1749 = vpop.f32.mrb[0].mxu0
      %v1750 = vpop.f32.mrb[0].mxu0
      %v1751 = vadd.f32 0.0, %v1750
      %v1752 = vpop.f32.mrb[0].mxu0
      %1753 = vmatprep.mubr.bf16.mxu0 0
      %1754 = vmatmul.mubr.bf16.gmra.mrb[0].mxu0 %v1196
      %v1755 = vpop.f32.mrb[0].mxu0
      %v1756 = vadd.f32 0.0, %v1755
      %v1757 = vpop.f32.mrb[0].mxu0
      %v1758 = vpop.f32.mrb[0].mxu0
      %v1759 = vadd.f32 0.0, %v1758
      %v1760 = vpop.f32.mrb[0].mxu0
      %1761 = vmatprep.mubr.bf16.mxu0 0
      %1762 = vmatmul.mubr.bf16.gmra.mrb[0].mxu0 %v1199
      %v1763 = vpop.f32.mrb[0].mxu0
      %v1764 = vadd.f32 0.0, %v1763
      %v1765 = vpop.f32.mrb[0].mxu0
      %v1766 = vpop.f32.mrb[0].mxu0
      %v1767 = vadd.f32 0.0, %v1766
      %v1768 = vpop.f32.mrb[0].mxu0
      %1769 = vmatprep.mubr.bf16.mxu0 0
      %1770 = vmatmul.mubr.bf16.gmra.mrb[0].mxu0 %v1202
      %v1771 = vpop.f32.mrb[0].mxu0
      %v1772 = vadd.f32 0.0, %v1771
      %v1773 = vpop.f32.mrb[0].mxu0
      %v1774 = vpop.f32.mrb[0].mxu0
      %v1775 = vadd.f32 0.0, %v1774
      %v1776 = vpop.f32.mrb[0].mxu0
      %1777 = vmatprep.mubr.bf16.mxu0 0
      %1778 = vmatmul.mubr.bf16.gmra.mrb[0].mxu0 %v1205
      %v1779 = vpop.f32.mrb[0].mxu0
      %v1780 = vadd.f32 0.0, %v1779
      %v1781 = vpop.f32.mrb[0].mxu0
      %v1782 = vpop.f32.mrb[0].mxu0
      %v1783 = vadd.f32 0.0, %v1782
      %v1784 = vpop.f32.mrb[0].mxu0
      %1785 = vmatprep.mubr.bf16.mxu0 0
      %1786 = vmatmul.mubr.bf16.gmra.mrb[0].mxu0 %v1208
      %v1787 = vpop.f32.mrb[0].mxu0
      %v1788 = vadd.f32 0.0, %v1787
      %v1789 = vpop.f32.mrb[0].mxu0
      %v1790 = vpop.f32.mrb[0].mxu0
      %v1791 = vadd.f32 0.0, %v1790
      %v1792 = vpop.f32.mrb[0].mxu0
      %1793 = vmatprep.mubr.bf16.mxu0 0
      %1794 = vmatmul.mubr.bf16.gmra.mrb[0].mxu0 %v1211
      %v1795 = vpop.f32.mrb[0].mxu0
      %v1796 = vadd.f32 0.0, %v1795
      %v1797 = vpop.f32.mrb[0].mxu0
      %v1798 = vpop.f32.mrb[0].mxu0
      %v1799 = vadd.f32 0.0, %v1798
      %v1800 = vpop.f32.mrb[0].mxu0
      %1801 = vmatprep.mubr.bf16.mxu0 0
      %1802 = vmatmul.mubr.bf16.gmra.mrb[0].mxu0 %v1214
      %v1803 = vpop.f32.mrb[0].mxu0
      %v1804 = vadd.f32 0.0, %v1803
      %v1805 = vpop.f32.mrb[0].mxu0
      %v1806 = vpop.f32.mrb[0].mxu0
      %v1807 = vadd.f32 0.0, %v1806
      %v1808 = vpop.f32.mrb[0].mxu0
      %1809 = vmatprep.mubr.bf16.mxu0 0
      %1810 = vmatmul.mubr.bf16.gmra.mrb[0].mxu0 %v1217
      %v1811 = vpop.f32.mrb[0].mxu0
      %v1812 = vadd.f32 0.0, %v1811
      %v1813 = vpop.f32.mrb[0].mxu0
      %v1814 = vpop.f32.mrb[0].mxu0
      %v1815 = vadd.f32 0.0, %v1814
      %v1816 = vpop.f32.mrb[0].mxu0
      %1817 = vmatprep.mubr.bf16.mxu0 0
      %1818 = vmatmul.mubr.bf16.gmra.mrb[0].mxu0 %v1220
      %v1819 = vpop.f32.mrb[0].mxu0
      %v1820 = vadd.f32 0.0, %v1819
      %v1821 = vpop.f32.mrb[0].mxu0
      %v1822 = vpop.f32.mrb[0].mxu0
      %v1823 = vadd.f32 0.0, %v1822
      %v1824 = vpop.f32.mrb[0].mxu0
      %1825 = vmatprep.mubr.bf16.mxu0 0
      %1826 = vmatmul.mubr.bf16.gmra.mrb[0].mxu0 %v1223
      %v1827 = vpop.f32.mrb[0].mxu0
      %v1828 = vadd.f32 0.0, %v1827
      %v1829 = vpop.f32.mrb[0].mxu0
      %v1830 = vpop.f32.mrb[0].mxu0
      %v1831 = vadd.f32 0.0, %v1830
      %v1832 = vpop.f32.mrb[0].mxu0
      %1833 = vmatprep.mubr.bf16.mxu0 0
      %1834 = vmatmul.mubr.bf16.gmra.mrb[0].mxu0 %v1226
      %v1835 = vpop.f32.mrb[0].mxu0
      %v1836 = vadd.f32 0.0, %v1835
      %v1837 = vpop.f32.mrb[0].mxu0
      %v1838 = vpop.f32.mrb[0].mxu0
      %v1839 = vadd.f32 0.0, %v1838
      %v1840 = vpop.f32.mrb[0].mxu0
      %1841 = vmatprep.mubr.bf16.mxu0 0
      %1842 = vmatmul.mubr.bf16.gmra.mrb[0].mxu0 %v1229
      %v1843 = vpop.f32.mrb[0].mxu0
      %v1844 = vadd.f32 0.0, %v1843
      %v1845 = vpop.f32.mrb[0].mxu0
      %v1846 = vpop.f32.mrb[0].mxu0
      %v1847 = vadd.f32 0.0, %v1846
      %v1848 = vpop.f32.mrb[0].mxu0
      %1849 = vmatprep.mubr.bf16.mxu0 0
      %1850 = vmatmul.mubr.bf16.gmra.mrb[0].mxu0 %v1232
      %v1851 = vpop.f32.mrb[0].mxu0
      %v1852 = vadd.f32 0.0, %v1851
      %v1853 = vpop.f32.mrb[0].mxu0
      %v1854 = vpop.f32.mrb[0].mxu0
      %v1855 = vadd.f32 0.0, %v1854
      %v1856 = vpop.f32.mrb[0].mxu0
      %1857 = vmatprep.mubr.bf16.mxu0 0
      %1858 = vmatmul.mubr.bf16.gmra.mrb[0].mxu0 %v1235
      %v1859 = vpop.f32.mrb[0].mxu0
      %v1860 = vadd.f32 0.0, %v1859
      %v1861 = vpop.f32.mrb[0].mxu0
      %v1862 = vpop.f32.mrb[0].mxu0
      %v1863 = vadd.f32 0.0, %v1862
      %v1864 = vpop.f32.mrb[0].mxu0
      %1865 = vmatprep.mubr.bf16.mxu0 0
      %1866 = vmatmul.mubr.bf16.gmra.mrb[0].mxu0 %v1238
      %v1867 = vpop.f32.mrb[0].mxu0
      %v1868 = vadd.f32 0.0, %v1867
      %v1869 = vpop.f32.mrb[0].mxu0
      %v1870 = vpop.f32.mrb[0].mxu0
      %v1871 = vadd.f32 0.0, %v1870
      %v1872 = vpop.f32.mrb[0].mxu0
      %1873 = vmatprep.mubr.bf16.mxu0 0
      %1874 = vmatmul.mubr.bf16.gmra.mrb[0].mxu0 %v1241
      %v1875 = vpop.f32.mrb[0].mxu0
      %v1876 = vadd.f32 0.0, %v1875
      %v1877 = vpop.f32.mrb[0].mxu0
      %v1878 = vpop.f32.mrb[0].mxu0
      %v1879 = vadd.f32 0.0, %v1878
      %v1880 = vpop.f32.mrb[0].mxu0
      %1881 = vmatprep.mubr.bf16.mxu0 0
      %1882 = vmatmul.mubr.bf16.gmra.mrb[0].mxu0 %v1244
      %v1883 = vpop.f32.mrb[0].mxu0
      %v1884 = vadd.f32 0.0, %v1883
      %v1885 = vpop.f32.mrb[0].mxu0
      %v1886 = vpop.f32.mrb[0].mxu0
      %v1887 = vadd.f32 0.0, %v1886
      %v1888 = vpop.f32.mrb[0].mxu0
      %1889 = vmatprep.mubr.bf16.mxu0 0
      %1890 = vmatmul.mubr.bf16.gmra.mrb[0].mxu0 %v1247
      %v1891 = vpop.f32.mrb[0].mxu0
      %v1892 = vadd.f32 0.0, %v1891
      %v1893 = vpop.f32.mrb[0].mxu0
      %v1894 = vpop.f32.mrb[0].mxu0
      %v1895 = vadd.f32 0.0, %v1894
      %v1896 = vpop.f32.mrb[0].mxu0
      %1897 = vmatprep.mubr.bf16.mxu0 0
      %1898 = vmatmul.mubr.bf16.gmra.mrb[0].mxu0 %v1250
      %v1899 = vpop.f32.mrb[0].mxu0
      %v1900 = vadd.f32 0.0, %v1899
      %v1901 = vpop.f32.mrb[0].mxu0
      %v1902 = vpop.f32.mrb[0].mxu0
      %v1903 = vadd.f32 0.0, %v1902
      %v1904 = vpop.f32.mrb[0].mxu0
      %1905 = vmatprep.mubr.bf16.mxu0 0
      %1906 = vmatmul.mubr.bf16.gmra.mrb[0].mxu0 %v1253
      %v1907 = vpop.f32.mrb[0].mxu0
      %v1908 = vadd.f32 0.0, %v1907
      %v1909 = vpop.f32.mrb[0].mxu0
      %v1910 = vpop.f32.mrb[0].mxu0
      %v1911 = vadd.f32 0.0, %v1910
      %v1912 = vpop.f32.mrb[0].mxu0
      %1913 = vmatprep.mubr.bf16.mxu0 0
      %1914 = vmatmul.mubr.bf16.gmra.mrb[0].mxu0 %v1256
      %v1915 = vpop.f32.mrb[0].mxu0
      %v1916 = vadd.f32 0.0, %v1915
      %v1917 = vpop.f32.mrb[0].mxu0
      %v1918 = vpop.f32.mrb[0].mxu0
      %v1919 = vadd.f32 0.0, %v1918
      %v1920 = vpop.f32.mrb[0].mxu0
      %1921 = vmatprep.mubr.bf16.mxu0 0
      %1922 = vmatmul.mubr.bf16.gmra.mrb[0].mxu0 %v1259
      %v1923 = vpop.f32.mrb[0].mxu0
      %v1924 = vadd.f32 0.0, %v1923
      %v1925 = vpop.f32.mrb[0].mxu0
      %v1926 = vpop.f32.mrb[0].mxu0
      %v1927 = vadd.f32 0.0, %v1926
      %v1928 = vpop.f32.mrb[0].mxu0
      %1929 = vmatprep.mubr.bf16.mxu0 0
      %1930 = vmatmul.mubr.bf16.gmra.mrb[0].mxu0 %v1262
      %v1931 = vpop.f32.mrb[0].mxu0
      %v1932 = vadd.f32 0.0, %v1931
      %v1933 = vpop.f32.mrb[0].mxu0
      %v1934 = vpop.f32.mrb[0].mxu0
      %v1935 = vadd.f32 0.0, %v1934
      %v1936 = vpop.f32.mrb[0].mxu0
      %1937 = vmatprep.mubr.bf16.mxu0 0
      %1938 = vmatmul.mubr.bf16.gmra.mrb[0].mxu0 %v1265
      %v1939 = vpop.f32.mrb[0].mxu0
      %v1940 = vadd.f32 0.0, %v1939
      %v1941 = vpop.f32.mrb[0].mxu0
      %v1942 = vpop.f32.mrb[0].mxu0
      %v1943 = vadd.f32 0.0, %v1942
      %v1944 = vpop.f32.mrb[0].mxu0
      %1945 = vmatprep.mubr.bf16.mxu0 0
      %1946 = vmatmul.mubr.bf16.gmra.mrb[0].mxu0 %v1268
      %v1947 = vpop.f32.mrb[0].mxu0
      %v1948 = vadd.f32 0.0, %v1947
      %v1949 = vpop.f32.mrb[0].mxu0
      %v1950 = vpop.f32.mrb[0].mxu0
      %v1951 = vadd.f32 0.0, %v1950
      %v1952 = vpop.f32.mrb[0].mxu0
      %1953 = vmatprep.mubr.bf16.mxu0 0
      %1954 = vmatmul.mubr.bf16.gmra.mrb[0].mxu0 %v1271
      %v1955 = vpop.f32.mrb[0].mxu0
      %v1956 = vadd.f32 0.0, %v1955
      %v1957 = vpop.f32.mrb[0].mxu0
      %v1958 = vpop.f32.mrb[0].mxu0
      %v1959 = vadd.f32 0.0, %v1958
      %v1960 = vpop.f32.mrb[0].mxu0
      %1961 = vmatprep.mubr.bf16.mxu0 0
      %1962 = vmatmul.mubr.bf16.gmra.mrb[0].mxu0 %v1274
      %v1963 = vpop.f32.mrb[0].mxu0
      %v1964 = vadd.f32 0.0, %v1963
      %v1965 = vpop.f32.mrb[0].mxu0
      %v1966 = vpop.f32.mrb[0].mxu0
      %v1967 = vadd.f32 0.0, %v1966
      %v1968 = vpop.f32.mrb[0].mxu0
      %1969 = vmatprep.mubr.bf16.mxu0 0
      %1970 = vmatmul.mubr.bf16.gmra.mrb[0].mxu0 %v1277
      %v1971 = vpop.f32.mrb[0].mxu0
      %v1972 = vadd.f32 0.0, %v1971
      %v1973 = vpop.f32.mrb[0].mxu0
      %v1974 = vpop.f32.mrb[0].mxu0
      %v1975 = vadd.f32 0.0, %v1974
      %v1976 = vpop.f32.mrb[0].mxu0
      %1977 = vmatprep.mubr.bf16.mxu0 0
      %1978 = vmatmul.mubr.bf16.gmra.mrb[0].mxu0 %v1280
      %v1979 = vpop.f32.mrb[0].mxu0
      %v1980 = vadd.f32 0.0, %v1979
      %v1981 = vpop.f32.mrb[0].mxu0
      %v1982 = vpop.f32.mrb[0].mxu0
      %v1983 = vadd.f32 0.0, %v1982
      %v1984 = vpop.f32.mrb[0].mxu0
      %1985 = vmatprep.mubr.bf16.mxu0 0
      %1986 = vmatmul.mubr.bf16.gmra.mrb[0].mxu0 %v1283
      %v1987 = vpop.f32.mrb[0].mxu0
      %v1988 = vadd.f32 0.0, %v1987
      %v1989 = vpop.f32.mrb[0].mxu0
      %v1990 = vpop.f32.mrb[0].mxu0
      %v1991 = vadd.f32 0.0, %v1990
      %v1992 = vpop.f32.mrb[0].mxu0
      %1993 = vmatprep.mubr.bf16.mxu0 0
      %1994 = vmatmul.mubr.bf16.gmra.mrb[0].mxu0 %v1286
      %v1995 = vpop.f32.mrb[0].mxu0
      %v1996 = vadd.f32 0.0, %v1995
      %v1997 = vpop.f32.mrb[0].mxu0
      %v1998 = vpop.f32.mrb[0].mxu0
      %v1999 = vadd.f32 0.0, %v1998
      %v2000 = vpop.f32.mrb[0].mxu0
      %2001 = vmatprep.mubr.bf16.mxu0 0
      %2002 = vmatmul.mubr.bf16.gmra.mrb[0].mxu0 %v1289
      %v2003 = vpop.f32.mrb[0].mxu0
      %v2004 = vadd.f32 0.0, %v2003
      %v2005 = vpop.f32.mrb[0].mxu0
      %v2006 = vpop.f32.mrb[0].mxu0
      %v2007 = vadd.f32 0.0, %v2006
      %v2008 = vpop.f32.mrb[0].mxu0
      %2009 = vmatprep.mubr.bf16.mxu0 0
      %2010 = vmatmul.mubr.bf16.gmra.mrb[0].mxu0 %v1292
      %v2011 = vpop.f32.mrb[0].mxu0
      %v2012 = vadd.f32 0.0, %v2011
      %v2013 = vpop.f32.mrb[0].mxu0
      %v2014 = vpop.f32.mrb[0].mxu0
      %v2015 = vadd.f32 0.0, %v2014
      %v2016 = vpop.f32.mrb[0].mxu0
      %2017 = vmatprep.mubr.bf16.mxu0 0
      %2018 = vmatmul.mubr.bf16.gmra.mrb[0].mxu0 %v1295
      %v2019 = vpop.f32.mrb[0].mxu0
      %v2020 = vadd.f32 0.0, %v2019
      %v2021 = vpop.f32.mrb[0].mxu0
      %v2022 = vpop.f32.mrb[0].mxu0
      %v2023 = vadd.f32 0.0, %v2022
      %v2024 = vpop.f32.mrb[0].mxu0
      %2025 = vmatprep.mubr.bf16.mxu0 0
      %2026 = vmatmul.mubr.bf16.gmra.mrb[0].mxu0 %v1298
      %v2027 = vpop.f32.mrb[0].mxu0
      %v2028 = vadd.f32 0.0, %v2027
      %v2029 = vpop.f32.mrb[0].mxu0
      %v2030 = vpop.f32.mrb[0].mxu0
      %v2031 = vadd.f32 0.0, %v2030
      %v2032 = vpop.f32.mrb[0].mxu0
      %2033 = vmatprep.mubr.bf16.mxu0 0
      %2034 = vmatmul.mubr.bf16.gmra.mrb[0].mxu0 %v1301
      %v2035 = vpop.f32.mrb[0].mxu0
      %v2036 = vadd.f32 0.0, %v2035
      %v2037 = vpop.f32.mrb[0].mxu0
      %v2038 = vpop.f32.mrb[0].mxu0
      %v2039 = vadd.f32 0.0, %v2038
      %v2040 = vpop.f32.mrb[0].mxu0
      %2041 = vmatprep.mubr.bf16.mxu0 0
      %2042 = vmatmul.mubr.bf16.gmra.mrb[0].mxu0 %v1304
      %v2043 = vpop.f32.mrb[0].mxu0
      %v2044 = vadd.f32 0.0, %v2043
      %v2045 = vpop.f32.mrb[0].mxu0
      %v2046 = vpop.f32.mrb[0].mxu0
      %v2047 = vadd.f32 0.0, %v2046
      %v2048 = vpop.f32.mrb[0].mxu0
      %2049 = vmatprep.mubr.bf16.mxu0 0
      %2050 = vmatmul.mubr.bf16.gmra.mrb[0].mxu0 %v1307
      %v2051 = vpop.f32.mrb[0].mxu0
      %v2052 = vadd.f32 0.0, %v2051
      %v2053 = vpop.f32.mrb[0].mxu0
      %v2054 = vpop.f32.mrb[0].mxu0
      %v2055 = vadd.f32 0.0, %v2054
      %v2056 = vpop.f32.mrb[0].mxu0
      %2057 = vmatprep.mubr.bf16.mxu0 0
      %2058 = vmatmul.mubr.bf16.gmra.mrb[0].mxu0 %v1310
      %v2059 = vpop.f32.mrb[0].mxu0
      %v2060 = vadd.f32 0.0, %v2059
      %v2061 = vpop.f32.mrb[0].mxu0
      %v2062 = vpop.f32.mrb[0].mxu0
      %v2063 = vadd.f32 0.0, %v2062
      %v2064 = vpop.f32.mrb[0].mxu0
      %2065 = vmatprep.mubr.bf16.mxu0 0
      %2066 = vmatmul.mubr.bf16.gmra.mrb[0].mxu0 %v1313
      %v2067 = vpop.f32.mrb[0].mxu0
      %v2068 = vadd.f32 0.0, %v2067
      %v2069 = vpop.f32.mrb[0].mxu0
      %v2070 = vpop.f32.mrb[0].mxu0
      %v2071 = vadd.f32 0.0, %v2070
      %v2072 = vpop.f32.mrb[0].mxu0
      %2073 = vmatprep.mubr.bf16.mxu0 0
      %2074 = vmatmul.mubr.bf16.gmra.mrb[0].mxu0 %v1316
      %v2075 = vpop.f32.mrb[0].mxu0
      %v2076 = vadd.f32 0.0, %v2075
      %v2077 = vpop.f32.mrb[0].mxu0
      %v2078 = vpop.f32.mrb[0].mxu0
      %v2079 = vadd.f32 0.0, %v2078
      %v2080 = vpop.f32.mrb[0].mxu0
      %2081 = vmatprep.mubr.bf16.mxu0 0
      %2082 = vmatmul.mubr.bf16.gmra.mrb[0].mxu0 %v1319
      %v2083 = vpop.f32.mrb[0].mxu0
      %v2084 = vadd.f32 0.0, %v2083
      %v2085 = vpop.f32.mrb[0].mxu0
      %v2086 = vpop.f32.mrb[0].mxu0
      %v2087 = vadd.f32 0.0, %v2086
      %v2088 = vpop.f32.mrb[0].mxu0
      %2089 = vmatprep.mubr.bf16.mxu0 0
      %2090 = vmatmul.mubr.bf16.gmra.mrb[0].mxu0 %v1322
      %v2091 = vpop.f32.mrb[0].mxu0
      %v2092 = vadd.f32 0.0, %v2091
      %v2093 = vpop.f32.mrb[0].mxu0
      %v2094 = vpop.f32.mrb[0].mxu0
      %v2095 = vadd.f32 0.0, %v2094
      %v2096 = vpop.f32.mrb[0].mxu0
      %2097 = vmatprep.mubr.bf16.mxu0 0
      %2098 = vmatmul.mubr.bf16.gmra.mrb[0].mxu0 %v1325
      %v2099 = vpop.f32.mrb[0].mxu0
      %v2100 = vadd.f32 0.0, %v2099
      %v2101 = vpop.f32.mrb[0].mxu0
      %v2102 = vpop.f32.mrb[0].mxu0
      %v2103 = vadd.f32 0.0, %v2102
      %v2104 = vpop.f32.mrb[0].mxu0
      %2105 = vmatprep.mubr.bf16.mxu0 0
      %2106 = vmatmul.mubr.bf16.gmra.mrb[0].mxu0 %v1328
      %v2107 = vpop.f32.mrb[0].mxu0
      %v2108 = vadd.f32 0.0, %v2107
      %v2109 = vpop.f32.mrb[0].mxu0
      %v2110 = vpop.f32.mrb[0].mxu0
      %v2111 = vadd.f32 0.0, %v2110
      %v2112 = vpop.f32.mrb[0].mxu0
      %2113 = vmatprep.mubr.bf16.mxu0 0
      %2114 = vmatmul.mubr.bf16.gmra.mrb[0].mxu0 %v1331
      %v2115 = vpop.f32.mrb[0].mxu0
      %v2116 = vadd.f32 0.0, %v2115
      %v2117 = vpop.f32.mrb[0].mxu0
      %v2118 = vpop.f32.mrb[0].mxu0
      %v2119 = vadd.f32 0.0, %v2118
      %v2120 = vpop.f32.mrb[0].mxu0
      %2121 = vmatprep.mubr.bf16.mxu0 0
      %2122 = vmatmul.mubr.bf16.gmra.mrb[0].mxu0 %v1334
      %v2123 = vpop.f32.mrb[0].mxu0
      %v2124 = vadd.f32 0.0, %v2123
      %v2125 = vpop.f32.mrb[0].mxu0
      %v2126 = vpop.f32.mrb[0].mxu0
      %v2127 = vadd.f32 0.0, %v2126
      %v2128 = vpop.f32.mrb[0].mxu0
      %2129 = vmatprep.mubr.bf16.mxu0 0
      %2130 = vmatmul.mubr.bf16.gmra.mrb[0].mxu0 %v1337
      %v2131 = vpop.f32.mrb[0].mxu0
      %v2132 = vadd.f32 0.0, %v2131
      %v2133 = vpop.f32.mrb[0].mxu0
      %v2134 = vpop.f32.mrb[0].mxu0
      %v2135 = vadd.f32 0.0, %v2134
      %v2136 = vpop.f32.mrb[0].mxu0
      %2137 = vmatprep.mubr.bf16.mxu0 0
      %2138 = vmatmul.mubr.bf16.gmra.mrb[0].mxu0 %v1340
      %v2139 = vpop.f32.mrb[0].mxu0
      %v2140 = vadd.f32 0.0, %v2139
      %v2141 = vpop.f32.mrb[0].mxu0
      %v2142 = vpop.f32.mrb[0].mxu0
      %v2143 = vadd.f32 0.0, %v2142
      %v2144 = vpop.f32.mrb[0].mxu0
      %2145 = vmatprep.mubr.bf16.mxu0 0
      %2146 = vmatmul.mubr.bf16.gmra.mrb[0].mxu0 %v1343
      %v2147 = vpop.f32.mrb[0].mxu0
      %v2148 = vadd.f32 0.0, %v2147
      %v2149 = vpop.f32.mrb[0].mxu0
      %v2150 = vpop.f32.mrb[0].mxu0
      %v2151 = vadd.f32 0.0, %v2150
      %v2152 = vpop.f32.mrb[0].mxu0
      %2153 = vmatprep.mubr.bf16.mxu0 0
      %2154 = vmatmul.mubr.bf16.gmra.mrb[0].mxu0 %v1346
      %v2155 = vpop.f32.mrb[0].mxu0
      %v2156 = vadd.f32 0.0, %v2155
      %v2157 = vpop.f32.mrb[0].mxu0
      %v2158 = vpop.f32.mrb[0].mxu0
      %v2159 = vadd.f32 0.0, %v2158
      %v2160 = vpop.f32.mrb[0].mxu0
      %2161 = vmatprep.mubr.bf16.mxu0 0
      %2162 = vmatmul.mubr.bf16.gmra.mrb[0].mxu0 %v1349
      %v2163 = vpop.f32.mrb[0].mxu0
      %v2164 = vadd.f32 0.0, %v2163
      %v2165 = vpop.f32.mrb[0].mxu0
      %v2166 = vpop.f32.mrb[0].mxu0
      %v2167 = vadd.f32 0.0, %v2166
      %v2168 = vpop.f32.mrb[0].mxu0
      %2169 = vmatprep.mubr.bf16.mxu0 0
      %2170 = vmatmul.mubr.bf16.gmra.mrb[0].mxu0 %v1352
      %v2171 = vpop.f32.mrb[0].mxu0
      %v2172 = vadd.f32 0.0, %v2171
      %v2173 = vpop.f32.mrb[0].mxu0
      %v2174 = vpop.f32.mrb[0].mxu0
      %v2175 = vadd.f32 0.0, %v2174
      %v2176 = vpop.f32.mrb[0].mxu0
      %2177 = vmatprep.mubr.bf16.mxu0 0
      %2178 = vmatmul.mubr.bf16.gmra.mrb[0].mxu0 %v1355
      %v2179 = vpop.f32.mrb[0].mxu0
      %v2180 = vadd.f32 0.0, %v2179
      %v2181 = vpop.f32.mrb[0].mxu0
      %v2182 = vpop.f32.mrb[0].mxu0
      %v2183 = vadd.f32 0.0, %v2182
      %v2184 = vpop.f32.mrb[0].mxu0
      %2185 = vmatprep.mubr.bf16.mxu0 0
      %2186 = vmatmul.mubr.bf16.gmra.mrb[0].mxu0 %v1358
      %v2187 = vpop.f32.mrb[0].mxu0
      %v2188 = vadd.f32 0.0, %v2187
      %v2189 = vpop.f32.mrb[0].mxu0
      %v2190 = vpop.f32.mrb[0].mxu0
      %v2191 = vadd.f32 0.0, %v2190
      %v2192 = vpop.f32.mrb[0].mxu0
      %2193 = vmatprep.mubr.bf16.mxu0 0
      %2194 = vmatmul.mubr.bf16.gmra.mrb[0].mxu0 %v1361
      %v2195 = vpop.f32.mrb[0].mxu0
      %v2196 = vadd.f32 0.0, %v2195
      %v2197 = vpop.f32.mrb[0].mxu0
      %v2198 = vpop.f32.mrb[0].mxu0
      %v2199 = vadd.f32 0.0, %v2198
      %v2200 = vpop.f32.mrb[0].mxu0
      %2201 = vmatprep.mubr.bf16.mxu0 0
      %2202 = vmatmul.mubr.bf16.gmra.mrb[0].mxu0 %v1364
      %v2203 = vpop.f32.mrb[0].mxu0
      %v2204 = vadd.f32 0.0, %v2203
      %v2205 = vpop.f32.mrb[0].mxu0
      %v2206 = vpop.f32.mrb[0].mxu0
      %v2207 = vadd.f32 0.0, %v2206
      %v2208 = vpop.f32.mrb[0].mxu0
      %2209 = vmatprep.mubr.bf16.mxu0 0
      %2210 = vmatmul.mubr.bf16.gmra.mrb[0].mxu0 %v1367
      %v2211 = vpop.f32.mrb[0].mxu0
      %v2212 = vadd.f32 0.0, %v2211
      %v2213 = vpop.f32.mrb[0].mxu0
      %v2214 = vpop.f32.mrb[0].mxu0
      %v2215 = vadd.f32 0.0, %v2214
      %v2216 = vpop.f32.mrb[0].mxu0
      %2217 = vmatprep.mubr.bf16.mxu0 0
      %2218 = vmatmul.mubr.bf16.gmra.mrb[0].mxu0 %v1370
      %v2219 = vpop.f32.mrb[0].mxu0
      %v2220 = vadd.f32 0.0, %v2219
      %v2221 = vpop.f32.mrb[0].mxu0
      %v2222 = vpop.f32.mrb[0].mxu0
      %v2223 = vadd.f32 0.0, %v2222
      %v2224 = vpop.f32.mrb[0].mxu0
      %2225 = vmatprep.mubr.bf16.mxu0 0
      %2226 = vmatmul.mubr.bf16.gmra.mrb[0].mxu0 %v1373
      %v2227 = vpop.f32.mrb[0].mxu0
      %v2228 = vadd.f32 0.0, %v2227
      %v2229 = vpop.f32.mrb[0].mxu0
      %v2230 = vpop.f32.mrb[0].mxu0
      %v2231 = vadd.f32 0.0, %v2230
      %v2232 = vpop.f32.mrb[0].mxu0
      %2233 = vmatprep.mubr.bf16.mxu0 0
      %2234 = vmatmul.mubr.bf16.gmra.mrb[0].mxu0 %v1376
      %v2235 = vpop.f32.mrb[0].mxu0
      %v2236 = vadd.f32 0.0, %v2235
      %v2237 = vpop.f32.mrb[0].mxu0
      %v2238 = vpop.f32.mrb[0].mxu0
      %v2239 = vadd.f32 0.0, %v2238
      %v2240 = vpop.f32.mrb[0].mxu0
      %2241 = vmatprep.mubr.bf16.mxu0 0
      %2242 = vmatmul.mubr.bf16.gmra.mrb[0].mxu0 %v1379
      %v2243 = vpop.f32.mrb[0].mxu0
      %v2244 = vadd.f32 0.0, %v2243
      %v2245 = vpop.f32.mrb[0].mxu0
      %v2246 = vpop.f32.mrb[0].mxu0
      %v2247 = vadd.f32 0.0, %v2246
      %v2248 = vpop.f32.mrb[0].mxu0
      %2249 = vmatprep.mubr.bf16.mxu0 0
      %2250 = vmatmul.mubr.bf16.gmra.mrb[0].mxu0 %v1382
      %v2251 = vpop.f32.mrb[0].mxu0
      %v2252 = vadd.f32 0.0, %v2251
      %v2253 = vpop.f32.mrb[0].mxu0
      %v2254 = vpop.f32.mrb[0].mxu0
      %v2255 = vadd.f32 0.0, %v2254
      %v2256 = vpop.f32.mrb[0].mxu0
      %2257 = vmatprep.mubr.bf16.mxu0 0
      %2258 = vmatmul.mubr.bf16.gmra.mrb[0].mxu0 %v1385
      %v2259 = vpop.f32.mrb[0].mxu0
      %v2260 = vadd.f32 0.0, %v2259
      %v2261 = vpop.f32.mrb[0].mxu0
      %v2262 = vpop.f32.mrb[0].mxu0
      %v2263 = vadd.f32 0.0, %v2262
      %v2264 = vpop.f32.mrb[0].mxu0
      %2265 = vmatprep.mubr.bf16.mxu0 0
      %2266 = vmatmul.mubr.bf16.gmra.mrb[0].mxu0 %v1388
      %v2267 = vpop.f32.mrb[0].mxu0
      %v2268 = vadd.f32 0.0, %v2267
      %v2269 = vpop.f32.mrb[0].mxu0
      %v2270 = vpop.f32.mrb[0].mxu0
      %v2271 = vadd.f32 0.0, %v2270
      %v2272 = vpop.f32.mrb[0].mxu0
      %2273 = vmatprep.mubr.bf16.mxu0 0
      %2274 = vmatmul.mubr.bf16.gmra.mrb[0].mxu0 %v1391
      %v2275 = vpop.f32.mrb[0].mxu0
      %v2276 = vadd.f32 0.0, %v2275
      %v2277 = vpop.f32.mrb[0].mxu0
      %v2278 = vpop.f32.mrb[0].mxu0
      %v2279 = vadd.f32 0.0, %v2278
      %v2280 = vpop.f32.mrb[0].mxu0
      %2281 = vmatprep.mubr.bf16.mxu0 0
      %2282 = vmatmul.mubr.bf16.gmra.mrb[0].mxu0 %v1394
      %v2283 = vpop.f32.mrb[0].mxu0
      %v2284 = vadd.f32 0.0, %v2283
      %v2285 = vpop.f32.mrb[0].mxu0
      %v2286 = vpop.f32.mrb[0].mxu0
      %v2287 = vadd.f32 0.0, %v2286
      %v2288 = vpop.f32.mrb[0].mxu0
      %2289 = vmatprep.mubr.bf16.mxu0 0
      %2290 = vmatmul.mubr.bf16.gmra.mrb[0].mxu0 %v1397
      %v2291 = vpop.f32.mrb[0].mxu0
      %v2292 = vadd.f32 0.0, %v2291
      %v2293 = vpop.f32.mrb[0].mxu0
      %v2294 = vpop.f32.mrb[0].mxu0
      %v2295 = vadd.f32 0.0, %v2294
      %v2296 = vpop.f32.mrb[0].mxu0
      %2297 = vmatprep.mubr.bf16.mxu0 0
      %2298 = vmatmul.mubr.bf16.gmra.mrb[0].mxu0 %v1400
      %v2299 = vpop.f32.mrb[0].mxu0
      %v2300 = vadd.f32 0.0, %v2299
      %v2301 = vpop.f32.mrb[0].mxu0
      %v2302 = vpop.f32.mrb[0].mxu0
      %v2303 = vadd.f32 0.0, %v2302
      %v2304 = vpop.f32.mrb[0].mxu0
      %2305 = vmatprep.mubr.bf16.mxu0 0
      %2306 = vmatmul.mubr.bf16.gmra.mrb[0].mxu0 %v1403
      %v2307 = vpop.f32.mrb[0].mxu0
      %v2308 = vadd.f32 0.0, %v2307
      %v2309 = vpop.f32.mrb[0].mxu0
      %v2310 = vpop.f32.mrb[0].mxu0
      %v2311 = vadd.f32 0.0, %v2310
      %v2312 = vpop.f32.mrb[0].mxu0
      %2313 = vmatprep.mubr.bf16.mxu0 0
      %2314 = vmatmul.mubr.bf16.gmra.mrb[0].mxu0 %v1406
      %v2315 = vpop.f32.mrb[0].mxu0
      %v2316 = vadd.f32 0.0, %v2315
      %v2317 = vpop.f32.mrb[0].mxu0
      %v2318 = vpop.f32.mrb[0].mxu0
      %v2319 = vadd.f32 0.0, %v2318
      %v2320 = vpop.f32.mrb[0].mxu0
      %2321 = vmatprep.mubr.bf16.mxu0 0
      %2322 = vmatmul.mubr.bf16.gmra.mrb[0].mxu0 %v1409
      %v2323 = vpop.f32.mrb[0].mxu0
      %v2324 = vadd.f32 0.0, %v2323
      %v2325 = vpop.f32.mrb[0].mxu0
      %v2326 = vpop.f32.mrb[0].mxu0
      %v2327 = vadd.f32 0.0, %v2326
      %v2328 = vpop.f32.mrb[0].mxu0
      %2329 = vmatprep.mubr.bf16.mxu0 0
      %2330 = vmatmul.mubr.bf16.gmra.mrb[0].mxu0 %v1412
      %v2331 = vpop.f32.mrb[0].mxu0
      %v2332 = vadd.f32 0.0, %v2331
      %v2333 = vpop.f32.mrb[0].mxu0
      %v2334 = vpop.f32.mrb[0].mxu0
      %v2335 = vadd.f32 0.0, %v2334
      %v2336 = vpop.f32.mrb[0].mxu0
      %2337 = vmatprep.mubr.bf16.mxu0 0
      %2338 = vmatmul.mubr.bf16.gmra.mrb[0].mxu0 %v1415
      %v2339 = vpop.f32.mrb[0].mxu0
      %v2340 = vadd.f32 0.0, %v2339
      %v2341 = vpop.f32.mrb[0].mxu0
      %v2342 = vpop.f32.mrb[0].mxu0
      %v2343 = vadd.f32 0.0, %v2342
      %v2344 = vpop.f32.mrb[0].mxu0
      %2345 = vmatprep.mubr.bf16.mxu0 0
      %2346 = vmatmul.mubr.bf16.gmra.mrb[0].mxu0 %v1418
      %v2347 = vpop.f32.mrb[0].mxu0
      %v2348 = vadd.f32 0.0, %v2347
      %v2349 = vpop.f32.mrb[0].mxu0
      %v2350 = vpop.f32.mrb[0].mxu0
      %v2351 = vadd.f32 0.0, %v2350
      %v2352 = vpop.f32.mrb[0].mxu0
      %2353 = vmatprep.mubr.bf16.mxu0 0
      %2354 = vmatmul.mubr.bf16.gmra.mrb[0].mxu0 %v1421
      %v2355 = vpop.f32.mrb[0].mxu0
      %v2356 = vadd.f32 0.0, %v2355
      %v2357 = vpop.f32.mrb[0].mxu0
      %v2358 = vpop.f32.mrb[0].mxu0
      %v2359 = vadd.f32 0.0, %v2358
      %v2360 = vpop.f32.mrb[0].mxu0
      %2361 = vmatprep.mubr.bf16.mxu0 0
      %2362 = vmatmul.mubr.bf16.gmra.mrb[0].mxu0 %v1424
      %v2363 = vpop.f32.mrb[0].mxu0
      %v2364 = vadd.f32 0.0, %v2363
      %v2365 = vpop.f32.mrb[0].mxu0
      %v2366 = vpop.f32.mrb[0].mxu0
      %v2367 = vadd.f32 0.0, %v2366
      %v2368 = vpop.f32.mrb[0].mxu0
      %2369 = vmatprep.mubr.bf16.mxu0 0
      %2370 = vmatmul.mubr.bf16.gmra.mrb[0].mxu0 %v1427
      %v2371 = vpop.f32.mrb[0].mxu0
      %v2372 = vadd.f32 0.0, %v2371
      %v2373 = vpop.f32.mrb[0].mxu0
      %v2374 = vpop.f32.mrb[0].mxu0
      %v2375 = vadd.f32 0.0, %v2374
      %v2376 = vpop.f32.mrb[0].mxu0
      %2377 = vmatprep.mubr.bf16.mxu0 0
      %2378 = vmatmul.mubr.bf16.gmra.mrb[0].mxu0 %v1430
      %v2379 = vpop.f32.mrb[0].mxu0
      %v2380 = vadd.f32 0.0, %v2379
      %v2381 = vpop.f32.mrb[0].mxu0
      %v2382 = vpop.f32.mrb[0].mxu0
      %v2383 = vadd.f32 0.0, %v2382
      %v2384 = vpop.f32.mrb[0].mxu0
      %2385 = vmatprep.mubr.bf16.mxu0 0
      %2386 = vmatmul.mubr.bf16.gmra.mrb[0].mxu0 %v1433
      %v2387 = vpop.f32.mrb[0].mxu0
      %v2388 = vadd.f32 0.0, %v2387
      %v2389 = vpop.f32.mrb[0].mxu0
      %v2390 = vpop.f32.mrb[0].mxu0
      %v2391 = vadd.f32 0.0, %v2390
      %v2392 = vpop.f32.mrb[0].mxu0
      %2393 = vmatprep.mubr.bf16.mxu0 0
      %2394 = vmatmul.mubr.bf16.gmra.mrb[0].mxu0 %v1436
      %v2395 = vpop.f32.mrb[0].mxu0
      %v2396 = vadd.f32 0.0, %v2395
      %v2397 = vpop.f32.mrb[0].mxu0
      %v2398 = vpop.f32.mrb[0].mxu0
      %v2399 = vadd.f32 0.0, %v2398
      %v2400 = vpop.f32.mrb[0].mxu0
      %2401 = vmatprep.mubr.bf16.mxu0 0
      %2402 = vmatmul.mubr.bf16.gmra.mrb[0].mxu0 %v1439
      %v2403 = vpop.f32.mrb[0].mxu0
      %v2404 = vadd.f32 0.0, %v2403
      %v2405 = vpop.f32.mrb[0].mxu0
      %v2406 = vpop.f32.mrb[0].mxu0
      %v2407 = vadd.f32 0.0, %v2406
      %v2408 = vpop.f32.mrb[0].mxu0
      %2409 = vmatprep.mubr.bf16.mxu0 0
      %2410 = vmatmul.mubr.bf16.gmra.mrb[0].mxu0 %v1442
      %v2411 = vpop.f32.mrb[0].mxu0
      %v2412 = vadd.f32 0.0, %v2411
      %v2413 = vpop.f32.mrb[0].mxu0
      %v2414 = vpop.f32.mrb[0].mxu0
      %v2415 = vadd.f32 0.0, %v2414
      %v2416 = vpop.f32.mrb[0].mxu0
      %2417 = vmatprep.mubr.bf16.mxu0 0
      %2418 = vmatmul.mubr.bf16.gmra.mrb[0].mxu0 %v1445
      %v2419 = vpop.f32.mrb[0].mxu0
      %v2420 = vadd.f32 0.0, %v2419
      %v2421 = vpop.f32.mrb[0].mxu0
      %v2422 = vpop.f32.mrb[0].mxu0
      %v2423 = vadd.f32 0.0, %v2422
      %v2424 = vpop.f32.mrb[0].mxu0
      %2425 = vmatprep.mubr.bf16.mxu0 0
      %2426 = vmatmul.mubr.bf16.gmra.mrb[0].mxu0 %v1448
      %v2427 = vpop.f32.mrb[0].mxu0
      %v2428 = vadd.f32 0.0, %v2427
      %v2429 = vpop.f32.mrb[0].mxu0
      %v2430 = vpop.f32.mrb[0].mxu0
      %v2431 = vadd.f32 0.0, %v2430
      %v2432 = vpop.f32.mrb[0].mxu0
      %2433 = vmatprep.mubr.bf16.mxu0 0
      %2434 = vmatmul.mubr.bf16.gmra.mrb[0].mxu0 %v1451
      %v2435 = vpop.f32.mrb[0].mxu0
      %v2436 = vadd.f32 0.0, %v2435
      %v2437 = vpop.f32.mrb[0].mxu0
      %v2438 = vpop.f32.mrb[0].mxu0
      %v2439 = vadd.f32 0.0, %v2438
      %v2440 = vpop.f32.mrb[0].mxu0
      %2441 = vmatprep.mubr.bf16.mxu0 0
      %2442 = vmatmul.mubr.bf16.gmra.mrb[0].mxu0 %v1454
      %v2443 = vpop.f32.mrb[0].mxu0
      %v2444 = vadd.f32 0.0, %v2443
      %v2445 = vpop.f32.mrb[0].mxu0
      %v2446 = vpop.f32.mrb[0].mxu0
      %v2447 = vadd.f32 0.0, %v2446
      %v2448 = vpop.f32.mrb[0].mxu0
      %2449 = vmatprep.mubr.bf16.mxu0 0
      %2450 = vmatmul.mubr.bf16.gmra.mrb[0].mxu0 %v1457
      %v2451 = vpop.f32.mrb[0].mxu0
      %v2452 = vadd.f32 0.0, %v2451
      %v2453 = vpop.f32.mrb[0].mxu0
      %v2454 = vpop.f32.mrb[0].mxu0
      %v2455 = vadd.f32 0.0, %v2454
      %v2456 = vpop.f32.mrb[0].mxu0
      %2457 = vmatprep.mubr.bf16.mxu0 0
      %2458 = vmatmul.mubr.bf16.gmra.mrb[0].mxu0 %v1460
      %v2459 = vpop.f32.mrb[0].mxu0
      %v2460 = vadd.f32 0.0, %v2459
      %v2461 = vpop.f32.mrb[0].mxu0
      %v2462 = vpop.f32.mrb[0].mxu0
      %v2463 = vadd.f32 0.0, %v2462
      %v2464 = vpop.f32.mrb[0].mxu0
      %2465 = vmatprep.mubr.bf16.mxu0 0
      %2466 = vmatmul.mubr.bf16.gmra.mrb[0].mxu0 %v1463
      %v2467 = vpop.f32.mrb[0].mxu0
      %v2468 = vadd.f32 0.0, %v2467
      %v2469 = vpop.f32.mrb[0].mxu0
      %v2470 = vpop.f32.mrb[0].mxu0
      %v2471 = vadd.f32 0.0, %v2470
      %v2472 = vpop.f32.mrb[0].mxu0
      %2473 = vmatprep.mubr.bf16.mxu0 0
      %2474 = vmatmul.mubr.bf16.gmra.mrb[0].mxu0 %v1466
      %v2475 = vpop.f32.mrb[0].mxu0
      %v2476 = vadd.f32 0.0, %v2475
      %v2477 = vpop.f32.mrb[0].mxu0
      %v2478 = vpop.f32.mrb[0].mxu0
      %v2479 = vadd.f32 0.0, %v2478
      %v2480 = vpop.f32.mrb[0].mxu0
      %2481 = vmatprep.mubr.bf16.mxu0 0
      %2482 = vmatmul.mubr.bf16.gmra.mrb[0].mxu0 %v1469
      %v2483 = vpop.f32.mrb[0].mxu0
      %v2484 = vadd.f32 0.0, %v2483
      %v2485 = vpop.f32.mrb[0].mxu0
      %v2486 = vpop.f32.mrb[0].mxu0
      %v2487 = vadd.f32 0.0, %v2486
      %v2488 = vpop.f32.mrb[0].mxu0
      %2489 = vmatprep.mubr.bf16.mxu0 0
      %2490 = vmatmul.mubr.bf16.gmra.mrb[0].mxu0 %v1472
      %v2491 = vpop.f32.mrb[0].mxu0
      %v2492 = vadd.f32 0.0, %v2491
      %v2493 = vpop.f32.mrb[0].mxu0
      %v2494 = vpop.f32.mrb[0].mxu0
      %v2495 = vadd.f32 0.0, %v2494
      %v2496 = vpop.f32.mrb[0].mxu0
      %2497 = vmatprep.mubr.bf16.mxu0 0
      %2498 = vmatmul.mubr.bf16.gmra.mrb[0].mxu0 %v1475
      %v2499 = vpop.f32.mrb[0].mxu0
      %v2500 = vadd.f32 0.0, %v2499
      %v2501 = vpop.f32.mrb[0].mxu0
      %v2502 = vpop.f32.mrb[0].mxu0
      %v2503 = vadd.f32 0.0, %v2502
      %v2504 = vpop.f32.mrb[0].mxu0
      %2505 = vmatprep.mubr.bf16.mxu0 0
      %2506 = vmatmul.mubr.bf16.gmra.mrb[0].mxu0 %v1478
      %v2507 = vpop.f32.mrb[0].mxu0
      %v2508 = vadd.f32 0.0, %v2507
      %v2509 = vpop.f32.mrb[0].mxu0
      %v2510 = vpop.f32.mrb[0].mxu0
      %v2511 = vadd.f32 0.0, %v2510
      %v2512 = vpop.f32.mrb[0].mxu0
      %2513 = vmatprep.mubr.bf16.mxu0 0
      %2514 = vmatmul.mubr.bf16.gmra.mrb[0].mxu0 %v1481
      %v2515 = vpop.f32.mrb[0].mxu0
      %v2516 = vadd.f32 0.0, %v2515
      %v2517 = vpop.f32.mrb[0].mxu0
      %v2518 = vpop.f32.mrb[0].mxu0
      %v2519 = vadd.f32 0.0, %v2518
      %v2520 = vpop.f32.mrb[0].mxu0
      %2521 = vmatprep.mubr.bf16.mxu0 0
      %2522 = vmatmul.mubr.bf16.gmra.mrb[0].mxu0 %v1484
      %v2523 = vpop.f32.mrb[0].mxu0
      %v2524 = vadd.f32 0.0, %v2523
      %v2525 = vpop.f32.mrb[0].mxu0
      %v2526 = vpop.f32.mrb[0].mxu0
      %v2527 = vadd.f32 0.0, %v2526
      %v2528 = vpop.f32.mrb[0].mxu0
      %2529 = vmatprep.mubr.bf16.mxu0 0
      %2530 = vmatmul.mubr.bf16.gmra.mrb[0].mxu0 %v1487
      %v2531 = vpop.f32.mrb[0].mxu0
      %v2532 = vadd.f32 0.0, %v2531
      %v2533 = vpop.f32.mrb[0].mxu0
      %v2534 = vpop.f32.mrb[0].mxu0
      %v2535 = vadd.f32 0.0, %v2534
      %v2536 = vpop.f32.mrb[0].mxu0
      %2537 = vmatprep.mubr.bf16.mxu0 0
      %2538 = vmatmul.mubr.bf16.gmra.mrb[0].mxu0 %v1490
      %v2539 = vpop.f32.mrb[0].mxu0
      %v2540 = vadd.f32 0.0, %v2539
      %v2541 = vpop.f32.mrb[0].mxu0
      %v2542 = vpop.f32.mrb[0].mxu0
      %v2543 = vadd.f32 0.0, %v2542
      %v2544 = vpop.f32.mrb[0].mxu0
      %2545 = vmatprep.mubr.bf16.mxu0 0
      %2546 = vmatmul.mubr.bf16.gmra.mrb[0].mxu0 %v1493
      %v2547 = vpop.f32.mrb[0].mxu0
      %v2548 = vadd.f32 0.0, %v2547
      %v2549 = vpop.f32.mrb[0].mxu0
      %v2550 = vpop.f32.mrb[0].mxu0
      %v2551 = vadd.f32 0.0, %v2550
      %v2552 = vpop.f32.mrb[0].mxu0
      %2553 = vmatprep.mubr.bf16.mxu0 0
      %2554 = vmatmul.mubr.bf16.gmra.mrb[0].mxu0 %v1496
      %v2555 = vpop.f32.mrb[0].mxu0
      %v2556 = vadd.f32 0.0, %v2555
      %v2557 = vpop.f32.mrb[0].mxu0
      %v2558 = vpop.f32.mrb[0].mxu0
      %v2559 = vadd.f32 0.0, %v2558
      %v2560 = vpop.f32.mrb[0].mxu0
      %2561 = vdwg.mxu0
      %v2562 = vld [vmem:[%s2] sm:$0x1]
      %v2564 = vlaneseq
      %v2565 = vshrl.u32 %v2564, 7
      %v2566 = vsub.s32 0, %v2565
      %v2567 = vrot.slane %v2562, %v2566
      %v2569 = vmul.f32 %v1540, %v2567
      %v2570 = vmul.f32 %v1543, %v2567
      %v2571 = vmul.f32 %v1548, %v2567
      %v2572 = vmul.f32 %v1551, %v2567
      %v2573 = vmul.f32 %v1556, %v2567
      %v2574 = vmul.f32 %v1559, %v2567
      %v2575 = vmul.f32 %v1564, %v2567
      %v2576 = vmul.f32 %v1567, %v2567
      %v2577 = vmul.f32 %v1572, %v2567
      %v2578 = vmul.f32 %v1575, %v2567
      %v2579 = vmul.f32 %v1580, %v2567
      %v2580 = vmul.f32 %v1583, %v2567
      %v2581 = vmul.f32 %v1588, %v2567
      %v2582 = vmul.f32 %v1591, %v2567
      %v2583 = vmul.f32 %v1596, %v2567
      %v2584 = vmul.f32 %v1599, %v2567
      %v2585 = vmul.f32 %v1604, %v2567
      %v2586 = vmul.f32 %v1607, %v2567
      %v2587 = vmul.f32 %v1612, %v2567
      %v2588 = vmul.f32 %v1615, %v2567
      %v2589 = vmul.f32 %v1620, %v2567
      %v2590 = vmul.f32 %v1623, %v2567
      %v2591 = vmul.f32 %v1628, %v2567
      %v2592 = vmul.f32 %v1631, %v2567
      %v2593 = vmul.f32 %v1636, %v2567
      %v2594 = vmul.f32 %v1639, %v2567
      %v2595 = vmul.f32 %v1644, %v2567
      %v2596 = vmul.f32 %v1647, %v2567
      %v2597 = vmul.f32 %v1652, %v2567
      %v2598 = vmul.f32 %v1655, %v2567
      %v2599 = vmul.f32 %v1660, %v2567
      %v2600 = vmul.f32 %v1663, %v2567
      %v2601 = vmul.f32 %v1668, %v2567
      %v2602 = vmul.f32 %v1671, %v2567
      %v2603 = vmul.f32 %v1676, %v2567
      %v2604 = vmul.f32 %v1679, %v2567
      %v2605 = vmul.f32 %v1684, %v2567
      %v2606 = vmul.f32 %v1687, %v2567
      %v2607 = vmul.f32 %v1692, %v2567
      %v2608 = vmul.f32 %v1695, %v2567
      %v2609 = vmul.f32 %v1700, %v2567
      %v2610 = vmul.f32 %v1703, %v2567
      %v2611 = vmul.f32 %v1708, %v2567
      %v2612 = vmul.f32 %v1711, %v2567
      %v2613 = vmul.f32 %v1716, %v2567
      %v2614 = vmul.f32 %v1719, %v2567
      %v2615 = vmul.f32 %v1724, %v2567
      %v2616 = vmul.f32 %v1727, %v2567
      %v2617 = vmul.f32 %v1732, %v2567
      %v2618 = vmul.f32 %v1735, %v2567
      %v2619 = vmul.f32 %v1740, %v2567
      %v2620 = vmul.f32 %v1743, %v2567
      %v2621 = vmul.f32 %v1748, %v2567
      %v2622 = vmul.f32 %v1751, %v2567
      %v2623 = vmul.f32 %v1756, %v2567
      %v2624 = vmul.f32 %v1759, %v2567
      %v2625 = vmul.f32 %v1764, %v2567
      %v2626 = vmul.f32 %v1767, %v2567
      %v2627 = vmul.f32 %v1772, %v2567
      %v2628 = vmul.f32 %v1775, %v2567
      %v2629 = vmul.f32 %v1780, %v2567
      %v2630 = vmul.f32 %v1783, %v2567
      %v2631 = vmul.f32 %v1788, %v2567
      %v2632 = vmul.f32 %v1791, %v2567
      %v2633 = vmul.f32 %v1796, %v2567
      %v2634 = vmul.f32 %v1799, %v2567
      %v2635 = vmul.f32 %v1804, %v2567
      %v2636 = vmul.f32 %v1807, %v2567
      %v2637 = vmul.f32 %v1812, %v2567
      %v2638 = vmul.f32 %v1815, %v2567
      %v2639 = vmul.f32 %v1820, %v2567
      %v2640 = vmul.f32 %v1823, %v2567
      %v2641 = vmul.f32 %v1828, %v2567
      %v2642 = vmul.f32 %v1831, %v2567
      %v2643 = vmul.f32 %v1836, %v2567
      %v2644 = vmul.f32 %v1839, %v2567
      %v2645 = vmul.f32 %v1844, %v2567
      %v2646 = vmul.f32 %v1847, %v2567
      %v2647 = vmul.f32 %v1852, %v2567
      %v2648 = vmul.f32 %v1855, %v2567
      %v2649 = vmul.f32 %v1860, %v2567
      %v2650 = vmul.f32 %v1863, %v2567
      %v2651 = vmul.f32 %v1868, %v2567
      %v2652 = vmul.f32 %v1871, %v2567
      %v2653 = vmul.f32 %v1876, %v2567
      %v2654 = vmul.f32 %v1879, %v2567
      %v2655 = vmul.f32 %v1884, %v2567
      %v2656 = vmul.f32 %v1887, %v2567
      %v2657 = vmul.f32 %v1892, %v2567
      %v2658 = vmul.f32 %v1895, %v2567
      %v2659 = vmul.f32 %v1900, %v2567
      %v2660 = vmul.f32 %v1903, %v2567
      %v2661 = vmul.f32 %v1908, %v2567
      %v2662 = vmul.f32 %v1911, %v2567
      %v2663 = vmul.f32 %v1916, %v2567
      %v2664 = vmul.f32 %v1919, %v2567
      %v2665 = vmul.f32 %v1924, %v2567
      %v2666 = vmul.f32 %v1927, %v2567
      %v2667 = vmul.f32 %v1932, %v2567
      %v2668 = vmul.f32 %v1935, %v2567
      %v2669 = vmul.f32 %v1940, %v2567
      %v2670 = vmul.f32 %v1943, %v2567
      %v2671 = vmul.f32 %v1948, %v2567
      %v2672 = vmul.f32 %v1951, %v2567
      %v2673 = vmul.f32 %v1956, %v2567
      %v2674 = vmul.f32 %v1959, %v2567
      %v2675 = vmul.f32 %v1964, %v2567
      %v2676 = vmul.f32 %v1967, %v2567
      %v2677 = vmul.f32 %v1972, %v2567
      %v2678 = vmul.f32 %v1975, %v2567
      %v2679 = vmul.f32 %v1980, %v2567
      %v2680 = vmul.f32 %v1983, %v2567
      %v2681 = vmul.f32 %v1988, %v2567
      %v2682 = vmul.f32 %v1991, %v2567
      %v2683 = vmul.f32 %v1996, %v2567
      %v2684 = vmul.f32 %v1999, %v2567
      %v2685 = vmul.f32 %v2004, %v2567
      %v2686 = vmul.f32 %v2007, %v2567
      %v2687 = vmul.f32 %v2012, %v2567
      %v2688 = vmul.f32 %v2015, %v2567
      %v2689 = vmul.f32 %v2020, %v2567
      %v2690 = vmul.f32 %v2023, %v2567
      %v2691 = vmul.f32 %v2028, %v2567
      %v2692 = vmul.f32 %v2031, %v2567
      %v2693 = vmul.f32 %v2036, %v2567
      %v2694 = vmul.f32 %v2039, %v2567
      %v2695 = vmul.f32 %v2044, %v2567
      %v2696 = vmul.f32 %v2047, %v2567
      %v2697 = vmul.f32 %v2052, %v2567
      %v2698 = vmul.f32 %v2055, %v2567
      %v2699 = vmul.f32 %v2060, %v2567
      %v2700 = vmul.f32 %v2063, %v2567
      %v2701 = vmul.f32 %v2068, %v2567
      %v2702 = vmul.f32 %v2071, %v2567
      %v2703 = vmul.f32 %v2076, %v2567
      %v2704 = vmul.f32 %v2079, %v2567
      %v2705 = vmul.f32 %v2084, %v2567
      %v2706 = vmul.f32 %v2087, %v2567
      %v2707 = vmul.f32 %v2092, %v2567
      %v2708 = vmul.f32 %v2095, %v2567
      %v2709 = vmul.f32 %v2100, %v2567
      %v2710 = vmul.f32 %v2103, %v2567
      %v2711 = vmul.f32 %v2108, %v2567
      %v2712 = vmul.f32 %v2111, %v2567
      %v2713 = vmul.f32 %v2116, %v2567
      %v2714 = vmul.f32 %v2119, %v2567
      %v2715 = vmul.f32 %v2124, %v2567
      %v2716 = vmul.f32 %v2127, %v2567
      %v2717 = vmul.f32 %v2132, %v2567
      %v2718 = vmul.f32 %v2135, %v2567
      %v2719 = vmul.f32 %v2140, %v2567
      %v2720 = vmul.f32 %v2143, %v2567
      %v2721 = vmul.f32 %v2148, %v2567
      %v2722 = vmul.f32 %v2151, %v2567
      %v2723 = vmul.f32 %v2156, %v2567
      %v2724 = vmul.f32 %v2159, %v2567
      %v2725 = vmul.f32 %v2164, %v2567
      %v2726 = vmul.f32 %v2167, %v2567
      %v2727 = vmul.f32 %v2172, %v2567
      %v2728 = vmul.f32 %v2175, %v2567
      %v2729 = vmul.f32 %v2180, %v2567
      %v2730 = vmul.f32 %v2183, %v2567
      %v2731 = vmul.f32 %v2188, %v2567
      %v2732 = vmul.f32 %v2191, %v2567
      %v2733 = vmul.f32 %v2196, %v2567
      %v2734 = vmul.f32 %v2199, %v2567
      %v2735 = vmul.f32 %v2204, %v2567
      %v2736 = vmul.f32 %v2207, %v2567
      %v2737 = vmul.f32 %v2212, %v2567
      %v2738 = vmul.f32 %v2215, %v2567
      %v2739 = vmul.f32 %v2220, %v2567
      %v2740 = vmul.f32 %v2223, %v2567
      %v2741 = vmul.f32 %v2228, %v2567
      %v2742 = vmul.f32 %v2231, %v2567
      %v2743 = vmul.f32 %v2236, %v2567
      %v2744 = vmul.f32 %v2239, %v2567
      %v2745 = vmul.f32 %v2244, %v2567
      %v2746 = vmul.f32 %v2247, %v2567
      %v2747 = vmul.f32 %v2252, %v2567
      %v2748 = vmul.f32 %v2255, %v2567
      %v2749 = vmul.f32 %v2260, %v2567
      %v2750 = vmul.f32 %v2263, %v2567
      %v2751 = vmul.f32 %v2268, %v2567
      %v2752 = vmul.f32 %v2271, %v2567
      %v2753 = vmul.f32 %v2276, %v2567
      %v2754 = vmul.f32 %v2279, %v2567
      %v2755 = vmul.f32 %v2284, %v2567
      %v2756 = vmul.f32 %v2287, %v2567
      %v2757 = vmul.f32 %v2292, %v2567
      %v2758 = vmul.f32 %v2295, %v2567
      %v2759 = vmul.f32 %v2300, %v2567
      %v2760 = vmul.f32 %v2303, %v2567
      %v2761 = vmul.f32 %v2308, %v2567
      %v2762 = vmul.f32 %v2311, %v2567
      %v2763 = vmul.f32 %v2316, %v2567
      %v2764 = vmul.f32 %v2319, %v2567
      %v2765 = vmul.f32 %v2324, %v2567
      %v2766 = vmul.f32 %v2327, %v2567
      %v2767 = vmul.f32 %v2332, %v2567
      %v2768 = vmul.f32 %v2335, %v2567
      %v2769 = vmul.f32 %v2340, %v2567
      %v2770 = vmul.f32 %v2343, %v2567
      %v2771 = vmul.f32 %v2348, %v2567
      %v2772 = vmul.f32 %v2351, %v2567
      %v2773 = vmul.f32 %v2356, %v2567
      %v2774 = vmul.f32 %v2359, %v2567
      %v2775 = vmul.f32 %v2364, %v2567
      %v2776 = vmul.f32 %v2367, %v2567
      %v2777 = vmul.f32 %v2372, %v2567
      %v2778 = vmul.f32 %v2375, %v2567
      %v2779 = vmul.f32 %v2380, %v2567
      %v2780 = vmul.f32 %v2383, %v2567
      %v2781 = vmul.f32 %v2388, %v2567
      %v2782 = vmul.f32 %v2391, %v2567
      %v2783 = vmul.f32 %v2396, %v2567
      %v2784 = vmul.f32 %v2399, %v2567
      %v2785 = vmul.f32 %v2404, %v2567
      %v2786 = vmul.f32 %v2407, %v2567
      %v2787 = vmul.f32 %v2412, %v2567
      %v2788 = vmul.f32 %v2415, %v2567
      %v2789 = vmul.f32 %v2420, %v2567
      %v2790 = vmul.f32 %v2423, %v2567
      %v2791 = vmul.f32 %v2428, %v2567
      %v2792 = vmul.f32 %v2431, %v2567
      %v2793 = vmul.f32 %v2436, %v2567
      %v2794 = vmul.f32 %v2439, %v2567
      %v2795 = vmul.f32 %v2444, %v2567
      %v2796 = vmul.f32 %v2447, %v2567
      %v2797 = vmul.f32 %v2452, %v2567
      %v2798 = vmul.f32 %v2455, %v2567
      %v2799 = vmul.f32 %v2460, %v2567
      %v2800 = vmul.f32 %v2463, %v2567
      %v2801 = vmul.f32 %v2468, %v2567
      %v2802 = vmul.f32 %v2471, %v2567
      %v2803 = vmul.f32 %v2476, %v2567
      %v2804 = vmul.f32 %v2479, %v2567
      %v2805 = vmul.f32 %v2484, %v2567
      %v2806 = vmul.f32 %v2487, %v2567
      %v2807 = vmul.f32 %v2492, %v2567
      %v2808 = vmul.f32 %v2495, %v2567
      %v2809 = vmul.f32 %v2500, %v2567
      %v2810 = vmul.f32 %v2503, %v2567
      %v2811 = vmul.f32 %v2508, %v2567
      %v2812 = vmul.f32 %v2511, %v2567
      %v2813 = vmul.f32 %v2516, %v2567
      %v2814 = vmul.f32 %v2519, %v2567
      %v2815 = vmul.f32 %v2524, %v2567
      %v2816 = vmul.f32 %v2527, %v2567
      %v2817 = vmul.f32 %v2532, %v2567
      %v2818 = vmul.f32 %v2535, %v2567
      %v2819 = vmul.f32 %v2540, %v2567
      %v2820 = vmul.f32 %v2543, %v2567
      %v2821 = vmul.f32 %v2548, %v2567
      %v2822 = vmul.f32 %v2551, %v2567
      %v2823 = vmul.f32 %v2556, %v2567
      %v2824 = vmul.f32 %v2559, %v2567
      %v2825 = vld [vmem:[%s3] sm:$0x1]
      %v2827 = vlaneseq
      %v2828 = vshrl.u32 %v2827, 7
      %v2829 = vsub.s32 0, %v2828
      %v2830 = vrot.slane %v2825, %v2829
      %v2832 = vadd.f32 %v2569, %v2830
      %v2833 = vadd.f32 %v2570, %v2830
      %v2834 = vadd.f32 %v2571, %v2830
      %v2835 = vadd.f32 %v2572, %v2830
      %v2836 = vadd.f32 %v2573, %v2830
      %v2837 = vadd.f32 %v2574, %v2830
      %v2838 = vadd.f32 %v2575, %v2830
      %v2839 = vadd.f32 %v2576, %v2830
      %v2840 = vadd.f32 %v2577, %v2830
      %v2841 = vadd.f32 %v2578, %v2830
      %v2842 = vadd.f32 %v2579, %v2830
      %v2843 = vadd.f32 %v2580, %v2830
      %v2844 = vadd.f32 %v2581, %v2830
      %v2845 = vadd.f32 %v2582, %v2830
      %v2846 = vadd.f32 %v2583, %v2830
      %v2847 = vadd.f32 %v2584, %v2830
      %v2848 = vadd.f32 %v2585, %v2830
      %v2849 = vadd.f32 %v2586, %v2830
      %v2850 = vadd.f32 %v2587, %v2830
      %v2851 = vadd.f32 %v2588, %v2830
      %v2852 = vadd.f32 %v2589, %v2830
      %v2853 = vadd.f32 %v2590, %v2830
      %v2854 = vadd.f32 %v2591, %v2830
      %v2855 = vadd.f32 %v2592, %v2830
      %v2856 = vadd.f32 %v2593, %v2830
      %v2857 = vadd.f32 %v2594, %v2830
      %v2858 = vadd.f32 %v2595, %v2830
      %v2859 = vadd.f32 %v2596, %v2830
      %v2860 = vadd.f32 %v2597, %v2830
      %v2861 = vadd.f32 %v2598, %v2830
      %v2862 = vadd.f32 %v2599, %v2830
      %v2863 = vadd.f32 %v2600, %v2830
      %v2864 = vadd.f32 %v2601, %v2830
      %v2865 = vadd.f32 %v2602, %v2830
      %v2866 = vadd.f32 %v2603, %v2830
      %v2867 = vadd.f32 %v2604, %v2830
      %v2868 = vadd.f32 %v2605, %v2830
      %v2869 = vadd.f32 %v2606, %v2830
      %v2870 = vadd.f32 %v2607, %v2830
      %v2871 = vadd.f32 %v2608, %v2830
      %v2872 = vadd.f32 %v2609, %v2830
      %v2873 = vadd.f32 %v2610, %v2830
      %v2874 = vadd.f32 %v2611, %v2830
      %v2875 = vadd.f32 %v2612, %v2830
      %v2876 = vadd.f32 %v2613, %v2830
      %v2877 = vadd.f32 %v2614, %v2830
      %v2878 = vadd.f32 %v2615, %v2830
      %v2879 = vadd.f32 %v2616, %v2830
      %v2880 = vadd.f32 %v2617, %v2830
      %v2881 = vadd.f32 %v2618, %v2830
      %v2882 = vadd.f32 %v2619, %v2830
      %v2883 = vadd.f32 %v2620, %v2830
      %v2884 = vadd.f32 %v2621, %v2830
      %v2885 = vadd.f32 %v2622, %v2830
      %v2886 = vadd.f32 %v2623, %v2830
      %v2887 = vadd.f32 %v2624, %v2830
      %v2888 = vadd.f32 %v2625, %v2830
      %v2889 = vadd.f32 %v2626, %v2830
      %v2890 = vadd.f32 %v2627, %v2830
      %v2891 = vadd.f32 %v2628, %v2830
      %v2892 = vadd.f32 %v2629, %v2830
      %v2893 = vadd.f32 %v2630, %v2830
      %v2894 = vadd.f32 %v2631, %v2830
      %v2895 = vadd.f32 %v2632, %v2830
      %v2896 = vadd.f32 %v2633, %v2830
      %v2897 = vadd.f32 %v2634, %v2830
      %v2898 = vadd.f32 %v2635, %v2830
      %v2899 = vadd.f32 %v2636, %v2830
      %v2900 = vadd.f32 %v2637, %v2830
      %v2901 = vadd.f32 %v2638, %v2830
      %v2902 = vadd.f32 %v2639, %v2830
      %v2903 = vadd.f32 %v2640, %v2830
      %v2904 = vadd.f32 %v2641, %v2830
      %v2905 = vadd.f32 %v2642, %v2830
      %v2906 = vadd.f32 %v2643, %v2830
      %v2907 = vadd.f32 %v2644, %v2830
      %v2908 = vadd.f32 %v2645, %v2830
      %v2909 = vadd.f32 %v2646, %v2830
      %v2910 = vadd.f32 %v2647, %v2830
      %v2911 = vadd.f32 %v2648, %v2830
      %v2912 = vadd.f32 %v2649, %v2830
      %v2913 = vadd.f32 %v2650, %v2830
      %v2914 = vadd.f32 %v2651, %v2830
      %v2915 = vadd.f32 %v2652, %v2830
      %v2916 = vadd.f32 %v2653, %v2830
      %v2917 = vadd.f32 %v2654, %v2830
      %v2918 = vadd.f32 %v2655, %v2830
      %v2919 = vadd.f32 %v2656, %v2830
      %v2920 = vadd.f32 %v2657, %v2830
      %v2921 = vadd.f32 %v2658, %v2830
      %v2922 = vadd.f32 %v2659, %v2830
      %v2923 = vadd.f32 %v2660, %v2830
      %v2924 = vadd.f32 %v2661, %v2830
      %v2925 = vadd.f32 %v2662, %v2830
      %v2926 = vadd.f32 %v2663, %v2830
      %v2927 = vadd.f32 %v2664, %v2830
      %v2928 = vadd.f32 %v2665, %v2830
      %v2929 = vadd.f32 %v2666, %v2830
      %v2930 = vadd.f32 %v2667, %v2830
      %v2931 = vadd.f32 %v2668, %v2830
      %v2932 = vadd.f32 %v2669, %v2830
      %v2933 = vadd.f32 %v2670, %v2830
      %v2934 = vadd.f32 %v2671, %v2830
      %v2935 = vadd.f32 %v2672, %v2830
      %v2936 = vadd.f32 %v2673, %v2830
      %v2937 = vadd.f32 %v2674, %v2830
      %v2938 = vadd.f32 %v2675, %v2830
      %v2939 = vadd.f32 %v2676, %v2830
      %v2940 = vadd.f32 %v2677, %v2830
      %v2941 = vadd.f32 %v2678, %v2830
      %v2942 = vadd.f32 %v2679, %v2830
      %v2943 = vadd.f32 %v2680, %v2830
      %v2944 = vadd.f32 %v2681, %v2830
      %v2945 = vadd.f32 %v2682, %v2830
      %v2946 = vadd.f32 %v2683, %v2830
      %v2947 = vadd.f32 %v2684, %v2830
      %v2948 = vadd.f32 %v2685, %v2830
      %v2949 = vadd.f32 %v2686, %v2830
      %v2950 = vadd.f32 %v2687, %v2830
      %v2951 = vadd.f32 %v2688, %v2830
      %v2952 = vadd.f32 %v2689, %v2830
      %v2953 = vadd.f32 %v2690, %v2830
      %v2954 = vadd.f32 %v2691, %v2830
      %v2955 = vadd.f32 %v2692, %v2830
      %v2956 = vadd.f32 %v2693, %v2830
      %v2957 = vadd.f32 %v2694, %v2830
      %v2958 = vadd.f32 %v2695, %v2830
      %v2959 = vadd.f32 %v2696, %v2830
      %v2960 = vadd.f32 %v2697, %v2830
      %v2961 = vadd.f32 %v2698, %v2830
      %v2962 = vadd.f32 %v2699, %v2830
      %v2963 = vadd.f32 %v2700, %v2830
      %v2964 = vadd.f32 %v2701, %v2830
      %v2965 = vadd.f32 %v2702, %v2830
      %v2966 = vadd.f32 %v2703, %v2830
      %v2967 = vadd.f32 %v2704, %v2830
      %v2968 = vadd.f32 %v2705, %v2830
      %v2969 = vadd.f32 %v2706, %v2830
      %v2970 = vadd.f32 %v2707, %v2830
      %v2971 = vadd.f32 %v2708, %v2830
      %v2972 = vadd.f32 %v2709, %v2830
      %v2973 = vadd.f32 %v2710, %v2830
      %v2974 = vadd.f32 %v2711, %v2830
      %v2975 = vadd.f32 %v2712, %v2830
      %v2976 = vadd.f32 %v2713, %v2830
      %v2977 = vadd.f32 %v2714, %v2830
      %v2978 = vadd.f32 %v2715, %v2830
      %v2979 = vadd.f32 %v2716, %v2830
      %v2980 = vadd.f32 %v2717, %v2830
      %v2981 = vadd.f32 %v2718, %v2830
      %v2982 = vadd.f32 %v2719, %v2830
      %v2983 = vadd.f32 %v2720, %v2830
      %v2984 = vadd.f32 %v2721, %v2830
      %v2985 = vadd.f32 %v2722, %v2830
      %v2986 = vadd.f32 %v2723, %v2830
      %v2987 = vadd.f32 %v2724, %v2830
      %v2988 = vadd.f32 %v2725, %v2830
      %v2989 = vadd.f32 %v2726, %v2830
      %v2990 = vadd.f32 %v2727, %v2830
      %v2991 = vadd.f32 %v2728, %v2830
      %v2992 = vadd.f32 %v2729, %v2830
      %v2993 = vadd.f32 %v2730, %v2830
      %v2994 = vadd.f32 %v2731, %v2830
      %v2995 = vadd.f32 %v2732, %v2830
      %v2996 = vadd.f32 %v2733, %v2830
      %v2997 = vadd.f32 %v2734, %v2830
      %v2998 = vadd.f32 %v2735, %v2830
      %v2999 = vadd.f32 %v2736, %v2830
      %v3000 = vadd.f32 %v2737, %v2830
      %v3001 = vadd.f32 %v2738, %v2830
      %v3002 = vadd.f32 %v2739, %v2830
      %v3003 = vadd.f32 %v2740, %v2830
      %v3004 = vadd.f32 %v2741, %v2830
      %v3005 = vadd.f32 %v2742, %v2830
      %v3006 = vadd.f32 %v2743, %v2830
      %v3007 = vadd.f32 %v2744, %v2830
      %v3008 = vadd.f32 %v2745, %v2830
      %v3009 = vadd.f32 %v2746, %v2830
      %v3010 = vadd.f32 %v2747, %v2830
      %v3011 = vadd.f32 %v2748, %v2830
      %v3012 = vadd.f32 %v2749, %v2830
      %v3013 = vadd.f32 %v2750, %v2830
      %v3014 = vadd.f32 %v2751, %v2830
      %v3015 = vadd.f32 %v2752, %v2830
      %v3016 = vadd.f32 %v2753, %v2830
      %v3017 = vadd.f32 %v2754, %v2830
      %v3018 = vadd.f32 %v2755, %v2830
      %v3019 = vadd.f32 %v2756, %v2830
      %v3020 = vadd.f32 %v2757, %v2830
      %v3021 = vadd.f32 %v2758, %v2830
      %v3022 = vadd.f32 %v2759, %v2830
      %v3023 = vadd.f32 %v2760, %v2830
      %v3024 = vadd.f32 %v2761, %v2830
      %v3025 = vadd.f32 %v2762, %v2830
      %v3026 = vadd.f32 %v2763, %v2830
      %v3027 = vadd.f32 %v2764, %v2830
      %v3028 = vadd.f32 %v2765, %v2830
      %v3029 = vadd.f32 %v2766, %v2830
      %v3030 = vadd.f32 %v2767, %v2830
      %v3031 = vadd.f32 %v2768, %v2830
      %v3032 = vadd.f32 %v2769, %v2830
      %v3033 = vadd.f32 %v2770, %v2830
      %v3034 = vadd.f32 %v2771, %v2830
      %v3035 = vadd.f32 %v2772, %v2830
      %v3036 = vadd.f32 %v2773, %v2830
      %v3037 = vadd.f32 %v2774, %v2830
      %v3038 = vadd.f32 %v2775, %v2830
      %v3039 = vadd.f32 %v2776, %v2830
      %v3040 = vadd.f32 %v2777, %v2830
      %v3041 = vadd.f32 %v2778, %v2830
      %v3042 = vadd.f32 %v2779, %v2830
      %v3043 = vadd.f32 %v2780, %v2830
      %v3044 = vadd.f32 %v2781, %v2830
      %v3045 = vadd.f32 %v2782, %v2830
      %v3046 = vadd.f32 %v2783, %v2830
      %v3047 = vadd.f32 %v2784, %v2830
      %v3048 = vadd.f32 %v2785, %v2830
      %v3049 = vadd.f32 %v2786, %v2830
      %v3050 = vadd.f32 %v2787, %v2830
      %v3051 = vadd.f32 %v2788, %v2830
      %v3052 = vadd.f32 %v2789, %v2830
      %v3053 = vadd.f32 %v2790, %v2830
      %v3054 = vadd.f32 %v2791, %v2830
      %v3055 = vadd.f32 %v2792, %v2830
      %v3056 = vadd.f32 %v2793, %v2830
      %v3057 = vadd.f32 %v2794, %v2830
      %v3058 = vadd.f32 %v2795, %v2830
      %v3059 = vadd.f32 %v2796, %v2830
      %v3060 = vadd.f32 %v2797, %v2830
      %v3061 = vadd.f32 %v2798, %v2830
      %v3062 = vadd.f32 %v2799, %v2830
      %v3063 = vadd.f32 %v2800, %v2830
      %v3064 = vadd.f32 %v2801, %v2830
      %v3065 = vadd.f32 %v2802, %v2830
      %v3066 = vadd.f32 %v2803, %v2830
      %v3067 = vadd.f32 %v2804, %v2830
      %v3068 = vadd.f32 %v2805, %v2830
      %v3069 = vadd.f32 %v2806, %v2830
      %v3070 = vadd.f32 %v2807, %v2830
      %v3071 = vadd.f32 %v2808, %v2830
      %v3072 = vadd.f32 %v2809, %v2830
      %v3073 = vadd.f32 %v2810, %v2830
      %v3074 = vadd.f32 %v2811, %v2830
      %v3075 = vadd.f32 %v2812, %v2830
      %v3076 = vadd.f32 %v2813, %v2830
      %v3077 = vadd.f32 %v2814, %v2830
      %v3078 = vadd.f32 %v2815, %v2830
      %v3079 = vadd.f32 %v2816, %v2830
      %v3080 = vadd.f32 %v2817, %v2830
      %v3081 = vadd.f32 %v2818, %v2830
      %v3082 = vadd.f32 %v2819, %v2830
      %v3083 = vadd.f32 %v2820, %v2830
      %v3084 = vadd.f32 %v2821, %v2830
      %v3085 = vadd.f32 %v2822, %v2830
      %v3086 = vadd.f32 %v2823, %v2830
      %v3087 = vadd.f32 %v2824, %v2830
      %v3088 = vmax.f32 %v2832, 0.0
      %v3089 = vmax.f32 %v2833, 0.0
      %v3090 = vmax.f32 %v2834, 0.0
      %v3091 = vmax.f32 %v2835, 0.0
      %v3092 = vmax.f32 %v2836, 0.0
      %v3093 = vmax.f32 %v2837, 0.0
      %v3094 = vmax.f32 %v2838, 0.0
      %v3095 = vmax.f32 %v2839, 0.0
      %v3096 = vmax.f32 %v2840, 0.0
      %v3097 = vmax.f32 %v2841, 0.0
      %v3098 = vmax.f32 %v2842, 0.0
      %v3099 = vmax.f32 %v2843, 0.0
      %v3100 = vmax.f32 %v2844, 0.0
      %v3101 = vmax.f32 %v2845, 0.0
      %v3102 = vmax.f32 %v2846, 0.0
      %v3103 = vmax.f32 %v2847, 0.0
      %v3104 = vmax.f32 %v2848, 0.0
      %v3105 = vmax.f32 %v2849, 0.0
      %v3106 = vmax.f32 %v2850, 0.0
      %v3107 = vmax.f32 %v2851, 0.0
      %v3108 = vmax.f32 %v2852, 0.0
      %v3109 = vmax.f32 %v2853, 0.0
      %v3110 = vmax.f32 %v2854, 0.0
      %v3111 = vmax.f32 %v2855, 0.0
      %v3112 = vmax.f32 %v2856, 0.0
      %v3113 = vmax.f32 %v2857, 0.0
      %v3114 = vmax.f32 %v2858, 0.0
      %v3115 = vmax.f32 %v2859, 0.0
      %v3116 = vmax.f32 %v2860, 0.0
      %v3117 = vmax.f32 %v2861, 0.0
      %v3118 = vmax.f32 %v2862, 0.0
      %v3119 = vmax.f32 %v2863, 0.0
      %v3120 = vmax.f32 %v2864, 0.0
      %v3121 = vmax.f32 %v2865, 0.0
      %v3122 = vmax.f32 %v2866, 0.0
      %v3123 = vmax.f32 %v2867, 0.0
      %v3124 = vmax.f32 %v2868, 0.0
      %v3125 = vmax.f32 %v2869, 0.0
      %v3126 = vmax.f32 %v2870, 0.0
      %v3127 = vmax.f32 %v2871, 0.0
      %v3128 = vmax.f32 %v2872, 0.0
      %v3129 = vmax.f32 %v2873, 0.0
      %v3130 = vmax.f32 %v2874, 0.0
      %v3131 = vmax.f32 %v2875, 0.0
      %v3132 = vmax.f32 %v2876, 0.0
      %v3133 = vmax.f32 %v2877, 0.0
      %v3134 = vmax.f32 %v2878, 0.0
      %v3135 = vmax.f32 %v2879, 0.0
      %v3136 = vmax.f32 %v2880, 0.0
      %v3137 = vmax.f32 %v2881, 0.0
      %v3138 = vmax.f32 %v2882, 0.0
      %v3139 = vmax.f32 %v2883, 0.0
      %v3140 = vmax.f32 %v2884, 0.0
      %v3141 = vmax.f32 %v2885, 0.0
      %v3142 = vmax.f32 %v2886, 0.0
      %v3143 = vmax.f32 %v2887, 0.0
      %v3144 = vmax.f32 %v2888, 0.0
      %v3145 = vmax.f32 %v2889, 0.0
      %v3146 = vmax.f32 %v2890, 0.0
      %v3147 = vmax.f32 %v2891, 0.0
      %v3148 = vmax.f32 %v2892, 0.0
      %v3149 = vmax.f32 %v2893, 0.0
      %v3150 = vmax.f32 %v2894, 0.0
      %v3151 = vmax.f32 %v2895, 0.0
      %v3152 = vmax.f32 %v2896, 0.0
      %v3153 = vmax.f32 %v2897, 0.0
      %v3154 = vmax.f32 %v2898, 0.0
      %v3155 = vmax.f32 %v2899, 0.0
      %v3156 = vmax.f32 %v2900, 0.0
      %v3157 = vmax.f32 %v2901, 0.0
      %v3158 = vmax.f32 %v2902, 0.0
      %v3159 = vmax.f32 %v2903, 0.0
      %v3160 = vmax.f32 %v2904, 0.0
      %v3161 = vmax.f32 %v2905, 0.0
      %v3162 = vmax.f32 %v2906, 0.0
      %v3163 = vmax.f32 %v2907, 0.0
      %v3164 = vmax.f32 %v2908, 0.0
      %v3165 = vmax.f32 %v2909, 0.0
      %v3166 = vmax.f32 %v2910, 0.0
      %v3167 = vmax.f32 %v2911, 0.0
      %v3168 = vmax.f32 %v2912, 0.0
      %v3169 = vmax.f32 %v2913, 0.0
      %v3170 = vmax.f32 %v2914, 0.0
      %v3171 = vmax.f32 %v2915, 0.0
      %v3172 = vmax.f32 %v2916, 0.0
      %v3173 = vmax.f32 %v2917, 0.0
      %v3174 = vmax.f32 %v2918, 0.0
      %v3175 = vmax.f32 %v2919, 0.0
      %v3176 = vmax.f32 %v2920, 0.0
      %v3177 = vmax.f32 %v2921, 0.0
      %v3178 = vmax.f32 %v2922, 0.0
      %v3179 = vmax.f32 %v2923, 0.0
      %v3180 = vmax.f32 %v2924, 0.0
      %v3181 = vmax.f32 %v2925, 0.0
      %v3182 = vmax.f32 %v2926, 0.0
      %v3183 = vmax.f32 %v2927, 0.0
      %v3184 = vmax.f32 %v2928, 0.0
      %v3185 = vmax.f32 %v2929, 0.0
      %v3186 = vmax.f32 %v2930, 0.0
      %v3187 = vmax.f32 %v2931, 0.0
      %v3188 = vmax.f32 %v2932, 0.0
      %v3189 = vmax.f32 %v2933, 0.0
      %v3190 = vmax.f32 %v2934, 0.0
      %v3191 = vmax.f32 %v2935, 0.0
      %v3192 = vmax.f32 %v2936, 0.0
      %v3193 = vmax.f32 %v2937, 0.0
      %v3194 = vmax.f32 %v2938, 0.0
      %v3195 = vmax.f32 %v2939, 0.0
      %v3196 = vmax.f32 %v2940, 0.0
      %v3197 = vmax.f32 %v2941, 0.0
      %v3198 = vmax.f32 %v2942, 0.0
      %v3199 = vmax.f32 %v2943, 0.0
      %v3200 = vmax.f32 %v2944, 0.0
      %v3201 = vmax.f32 %v2945, 0.0
      %v3202 = vmax.f32 %v2946, 0.0
      %v3203 = vmax.f32 %v2947, 0.0
      %v3204 = vmax.f32 %v2948, 0.0
      %v3205 = vmax.f32 %v2949, 0.0
      %v3206 = vmax.f32 %v2950, 0.0
      %v3207 = vmax.f32 %v2951, 0.0
      %v3208 = vmax.f32 %v2952, 0.0
      %v3209 = vmax.f32 %v2953, 0.0
      %v3210 = vmax.f32 %v2954, 0.0
      %v3211 = vmax.f32 %v2955, 0.0
      %v3212 = vmax.f32 %v2956, 0.0
      %v3213 = vmax.f32 %v2957, 0.0
      %v3214 = vmax.f32 %v2958, 0.0
      %v3215 = vmax.f32 %v2959, 0.0
      %v3216 = vmax.f32 %v2960, 0.0
      %v3217 = vmax.f32 %v2961, 0.0
      %v3218 = vmax.f32 %v2962, 0.0
      %v3219 = vmax.f32 %v2963, 0.0
      %v3220 = vmax.f32 %v2964, 0.0
      %v3221 = vmax.f32 %v2965, 0.0
      %v3222 = vmax.f32 %v2966, 0.0
      %v3223 = vmax.f32 %v2967, 0.0
      %v3224 = vmax.f32 %v2968, 0.0
      %v3225 = vmax.f32 %v2969, 0.0
      %v3226 = vmax.f32 %v2970, 0.0
      %v3227 = vmax.f32 %v2971, 0.0
      %v3228 = vmax.f32 %v2972, 0.0
      %v3229 = vmax.f32 %v2973, 0.0
      %v3230 = vmax.f32 %v2974, 0.0
      %v3231 = vmax.f32 %v2975, 0.0
      %v3232 = vmax.f32 %v2976, 0.0
      %v3233 = vmax.f32 %v2977, 0.0
      %v3234 = vmax.f32 %v2978, 0.0
      %v3235 = vmax.f32 %v2979, 0.0
      %v3236 = vmax.f32 %v2980, 0.0
      %v3237 = vmax.f32 %v2981, 0.0
      %v3238 = vmax.f32 %v2982, 0.0
      %v3239 = vmax.f32 %v2983, 0.0
      %v3240 = vmax.f32 %v2984, 0.0
      %v3241 = vmax.f32 %v2985, 0.0
      %v3242 = vmax.f32 %v2986, 0.0
      %v3243 = vmax.f32 %v2987, 0.0
      %v3244 = vmax.f32 %v2988, 0.0
      %v3245 = vmax.f32 %v2989, 0.0
      %v3246 = vmax.f32 %v2990, 0.0
      %v3247 = vmax.f32 %v2991, 0.0
      %v3248 = vmax.f32 %v2992, 0.0
      %v3249 = vmax.f32 %v2993, 0.0
      %v3250 = vmax.f32 %v2994, 0.0
      %v3251 = vmax.f32 %v2995, 0.0
      %v3252 = vmax.f32 %v2996, 0.0
      %v3253 = vmax.f32 %v2997, 0.0
      %v3254 = vmax.f32 %v2998, 0.0
      %v3255 = vmax.f32 %v2999, 0.0
      %v3256 = vmax.f32 %v3000, 0.0
      %v3257 = vmax.f32 %v3001, 0.0
      %v3258 = vmax.f32 %v3002, 0.0
      %v3259 = vmax.f32 %v3003, 0.0
      %v3260 = vmax.f32 %v3004, 0.0
      %v3261 = vmax.f32 %v3005, 0.0
      %v3262 = vmax.f32 %v3006, 0.0
      %v3263 = vmax.f32 %v3007, 0.0
      %v3264 = vmax.f32 %v3008, 0.0
      %v3265 = vmax.f32 %v3009, 0.0
      %v3266 = vmax.f32 %v3010, 0.0
      %v3267 = vmax.f32 %v3011, 0.0
      %v3268 = vmax.f32 %v3012, 0.0
      %v3269 = vmax.f32 %v3013, 0.0
      %v3270 = vmax.f32 %v3014, 0.0
      %v3271 = vmax.f32 %v3015, 0.0
      %v3272 = vmax.f32 %v3016, 0.0
      %v3273 = vmax.f32 %v3017, 0.0
      %v3274 = vmax.f32 %v3018, 0.0
      %v3275 = vmax.f32 %v3019, 0.0
      %v3276 = vmax.f32 %v3020, 0.0
      %v3277 = vmax.f32 %v3021, 0.0
      %v3278 = vmax.f32 %v3022, 0.0
      %v3279 = vmax.f32 %v3023, 0.0
      %v3280 = vmax.f32 %v3024, 0.0
      %v3281 = vmax.f32 %v3025, 0.0
      %v3282 = vmax.f32 %v3026, 0.0
      %v3283 = vmax.f32 %v3027, 0.0
      %v3284 = vmax.f32 %v3028, 0.0
      %v3285 = vmax.f32 %v3029, 0.0
      %v3286 = vmax.f32 %v3030, 0.0
      %v3287 = vmax.f32 %v3031, 0.0
      %v3288 = vmax.f32 %v3032, 0.0
      %v3289 = vmax.f32 %v3033, 0.0
      %v3290 = vmax.f32 %v3034, 0.0
      %v3291 = vmax.f32 %v3035, 0.0
      %v3292 = vmax.f32 %v3036, 0.0
      %v3293 = vmax.f32 %v3037, 0.0
      %v3294 = vmax.f32 %v3038, 0.0
      %v3295 = vmax.f32 %v3039, 0.0
      %v3296 = vmax.f32 %v3040, 0.0
      %v3297 = vmax.f32 %v3041, 0.0
      %v3298 = vmax.f32 %v3042, 0.0
      %v3299 = vmax.f32 %v3043, 0.0
      %v3300 = vmax.f32 %v3044, 0.0
      %v3301 = vmax.f32 %v3045, 0.0
      %v3302 = vmax.f32 %v3046, 0.0
      %v3303 = vmax.f32 %v3047, 0.0
      %v3304 = vmax.f32 %v3048, 0.0
      %v3305 = vmax.f32 %v3049, 0.0
      %v3306 = vmax.f32 %v3050, 0.0
      %v3307 = vmax.f32 %v3051, 0.0
      %v3308 = vmax.f32 %v3052, 0.0
      %v3309 = vmax.f32 %v3053, 0.0
      %v3310 = vmax.f32 %v3054, 0.0
      %v3311 = vmax.f32 %v3055, 0.0
      %v3312 = vmax.f32 %v3056, 0.0
      %v3313 = vmax.f32 %v3057, 0.0
      %v3314 = vmax.f32 %v3058, 0.0
      %v3315 = vmax.f32 %v3059, 0.0
      %v3316 = vmax.f32 %v3060, 0.0
      %v3317 = vmax.f32 %v3061, 0.0
      %v3318 = vmax.f32 %v3062, 0.0
      %v3319 = vmax.f32 %v3063, 0.0
      %v3320 = vmax.f32 %v3064, 0.0
      %v3321 = vmax.f32 %v3065, 0.0
      %v3322 = vmax.f32 %v3066, 0.0
      %v3323 = vmax.f32 %v3067, 0.0
      %v3324 = vmax.f32 %v3068, 0.0
      %v3325 = vmax.f32 %v3069, 0.0
      %v3326 = vmax.f32 %v3070, 0.0
      %v3327 = vmax.f32 %v3071, 0.0
      %v3328 = vmax.f32 %v3072, 0.0
      %v3329 = vmax.f32 %v3073, 0.0
      %v3330 = vmax.f32 %v3074, 0.0
      %v3331 = vmax.f32 %v3075, 0.0
      %v3332 = vmax.f32 %v3076, 0.0
      %v3333 = vmax.f32 %v3077, 0.0
      %v3334 = vmax.f32 %v3078, 0.0
      %v3335 = vmax.f32 %v3079, 0.0
      %v3336 = vmax.f32 %v3080, 0.0
      %v3337 = vmax.f32 %v3081, 0.0
      %v3338 = vmax.f32 %v3082, 0.0
      %v3339 = vmax.f32 %v3083, 0.0
      %v3340 = vmax.f32 %v3084, 0.0
      %v3341 = vmax.f32 %v3085, 0.0
      %v3342 = vmax.f32 %v3086, 0.0
      %v3343 = vmax.f32 %v3087, 0.0
      %v3344 = vpack.c.bf16 %v3089, %v3088
      %v3345 = vpack.c.bf16 %v3091, %v3090
      %v3346 = vpack.c.bf16 %v3093, %v3092
      %v3347 = vpack.c.bf16 %v3095, %v3094
      %v3348 = vpack.c.bf16 %v3097, %v3096
      %v3349 = vpack.c.bf16 %v3099, %v3098
      %v3350 = vpack.c.bf16 %v3101, %v3100
      %v3351 = vpack.c.bf16 %v3103, %v3102
      %v3352 = vpack.c.bf16 %v3105, %v3104
      %v3353 = vpack.c.bf16 %v3107, %v3106
      %v3354 = vpack.c.bf16 %v3109, %v3108
      %v3355 = vpack.c.bf16 %v3111, %v3110
      %v3356 = vpack.c.bf16 %v3113, %v3112
      %v3357 = vpack.c.bf16 %v3115, %v3114
      %v3358 = vpack.c.bf16 %v3117, %v3116
      %v3359 = vpack.c.bf16 %v3119, %v3118
      %v3360 = vpack.c.bf16 %v3121, %v3120
      %v3361 = vpack.c.bf16 %v3123, %v3122
      %v3362 = vpack.c.bf16 %v3125, %v3124
      %v3363 = vpack.c.bf16 %v3127, %v3126
      %v3364 = vpack.c.bf16 %v3129, %v3128
      %v3365 = vpack.c.bf16 %v3131, %v3130
      %v3366 = vpack.c.bf16 %v3133, %v3132
      %v3367 = vpack.c.bf16 %v3135, %v3134
      %v3368 = vpack.c.bf16 %v3137, %v3136
      %v3369 = vpack.c.bf16 %v3139, %v3138
      %v3370 = vpack.c.bf16 %v3141, %v3140
      %v3371 = vpack.c.bf16 %v3143, %v3142
      %v3372 = vpack.c.bf16 %v3145, %v3144
      %v3373 = vpack.c.bf16 %v3147, %v3146
      %v3374 = vpack.c.bf16 %v3149, %v3148
      %v3375 = vpack.c.bf16 %v3151, %v3150
      %v3376 = vpack.c.bf16 %v3153, %v3152
      %v3377 = vpack.c.bf16 %v3155, %v3154
      %v3378 = vpack.c.bf16 %v3157, %v3156
      %v3379 = vpack.c.bf16 %v3159, %v3158
      %v3380 = vpack.c.bf16 %v3161, %v3160
      %v3381 = vpack.c.bf16 %v3163, %v3162
      %v3382 = vpack.c.bf16 %v3165, %v3164
      %v3383 = vpack.c.bf16 %v3167, %v3166
      %v3384 = vpack.c.bf16 %v3169, %v3168
      %v3385 = vpack.c.bf16 %v3171, %v3170
      %v3386 = vpack.c.bf16 %v3173, %v3172
      %v3387 = vpack.c.bf16 %v3175, %v3174
      %v3388 = vpack.c.bf16 %v3177, %v3176
      %v3389 = vpack.c.bf16 %v3179, %v3178
      %v3390 = vpack.c.bf16 %v3181, %v3180
      %v3391 = vpack.c.bf16 %v3183, %v3182
      %v3392 = vpack.c.bf16 %v3185, %v3184
      %v3393 = vpack.c.bf16 %v3187, %v3186
      %v3394 = vpack.c.bf16 %v3189, %v3188
      %v3395 = vpack.c.bf16 %v3191, %v3190
      %v3396 = vpack.c.bf16 %v3193, %v3192
      %v3397 = vpack.c.bf16 %v3195, %v3194
      %v3398 = vpack.c.bf16 %v3197, %v3196
      %v3399 = vpack.c.bf16 %v3199, %v3198
      %v3400 = vpack.c.bf16 %v3201, %v3200
      %v3401 = vpack.c.bf16 %v3203, %v3202
      %v3402 = vpack.c.bf16 %v3205, %v3204
      %v3403 = vpack.c.bf16 %v3207, %v3206
      %v3404 = vpack.c.bf16 %v3209, %v3208
      %v3405 = vpack.c.bf16 %v3211, %v3210
      %v3406 = vpack.c.bf16 %v3213, %v3212
      %v3407 = vpack.c.bf16 %v3215, %v3214
      %v3408 = vpack.c.bf16 %v3217, %v3216
      %v3409 = vpack.c.bf16 %v3219, %v3218
      %v3410 = vpack.c.bf16 %v3221, %v3220
      %v3411 = vpack.c.bf16 %v3223, %v3222
      %v3412 = vpack.c.bf16 %v3225, %v3224
      %v3413 = vpack.c.bf16 %v3227, %v3226
      %v3414 = vpack.c.bf16 %v3229, %v3228
      %v3415 = vpack.c.bf16 %v3231, %v3230
      %v3416 = vpack.c.bf16 %v3233, %v3232
      %v3417 = vpack.c.bf16 %v3235, %v3234
      %v3418 = vpack.c.bf16 %v3237, %v3236
      %v3419 = vpack.c.bf16 %v3239, %v3238
      %v3420 = vpack.c.bf16 %v3241, %v3240
      %v3421 = vpack.c.bf16 %v3243, %v3242
      %v3422 = vpack.c.bf16 %v3245, %v3244
      %v3423 = vpack.c.bf16 %v3247, %v3246
      %v3424 = vpack.c.bf16 %v3249, %v3248
      %v3425 = vpack.c.bf16 %v3251, %v3250
      %v3426 = vpack.c.bf16 %v3253, %v3252
      %v3427 = vpack.c.bf16 %v3255, %v3254
      %v3428 = vpack.c.bf16 %v3257, %v3256
      %v3429 = vpack.c.bf16 %v3259, %v3258
      %v3430 = vpack.c.bf16 %v3261, %v3260
      %v3431 = vpack.c.bf16 %v3263, %v3262
      %v3432 = vpack.c.bf16 %v3265, %v3264
      %v3433 = vpack.c.bf16 %v3267, %v3266
      %v3434 = vpack.c.bf16 %v3269, %v3268
      %v3435 = vpack.c.bf16 %v3271, %v3270
      %v3436 = vpack.c.bf16 %v3273, %v3272
      %v3437 = vpack.c.bf16 %v3275, %v3274
      %v3438 = vpack.c.bf16 %v3277, %v3276
      %v3439 = vpack.c.bf16 %v3279, %v3278
      %v3440 = vpack.c.bf16 %v3281, %v3280
      %v3441 = vpack.c.bf16 %v3283, %v3282
      %v3442 = vpack.c.bf16 %v3285, %v3284
      %v3443 = vpack.c.bf16 %v3287, %v3286
      %v3444 = vpack.c.bf16 %v3289, %v3288
      %v3445 = vpack.c.bf16 %v3291, %v3290
      %v3446 = vpack.c.bf16 %v3293, %v3292
      %v3447 = vpack.c.bf16 %v3295, %v3294
      %v3448 = vpack.c.bf16 %v3297, %v3296
      %v3449 = vpack.c.bf16 %v3299, %v3298
      %v3450 = vpack.c.bf16 %v3301, %v3300
      %v3451 = vpack.c.bf16 %v3303, %v3302
      %v3452 = vpack.c.bf16 %v3305, %v3304
      %v3453 = vpack.c.bf16 %v3307, %v3306
      %v3454 = vpack.c.bf16 %v3309, %v3308
      %v3455 = vpack.c.bf16 %v3311, %v3310
      %v3456 = vpack.c.bf16 %v3313, %v3312
      %v3457 = vpack.c.bf16 %v3315, %v3314
      %v3458 = vpack.c.bf16 %v3317, %v3316
      %v3459 = vpack.c.bf16 %v3319, %v3318
      %v3460 = vpack.c.bf16 %v3321, %v3320
      %v3461 = vpack.c.bf16 %v3323, %v3322
      %v3462 = vpack.c.bf16 %v3325, %v3324
      %v3463 = vpack.c.bf16 %v3327, %v3326
      %v3464 = vpack.c.bf16 %v3329, %v3328
      %v3465 = vpack.c.bf16 %v3331, %v3330
      %v3466 = vpack.c.bf16 %v3333, %v3332
      %v3467 = vpack.c.bf16 %v3335, %v3334
      %v3468 = vpack.c.bf16 %v3337, %v3336
      %v3469 = vpack.c.bf16 %v3339, %v3338
      %v3470 = vpack.c.bf16 %v3341, %v3340
      %v3471 = vpack.c.bf16 %v3343, %v3342
      %v3600 = vunpack.c.l.b16 %v3344
      %v3601 = vunpack.c.h.b16 %v3344
      %v3602 = vunpack.c.l.b16 %v3345
      %v3603 = vunpack.c.h.b16 %v3345
      %v3604 = vunpack.c.l.b16 %v3346
      %v3605 = vunpack.c.h.b16 %v3346
      %v3606 = vunpack.c.l.b16 %v3347
      %v3607 = vunpack.c.h.b16 %v3347
      %v3608 = vunpack.c.l.b16 %v3348
      %v3609 = vunpack.c.h.b16 %v3348
      %v3610 = vunpack.c.l.b16 %v3349
      %v3611 = vunpack.c.h.b16 %v3349
      %v3612 = vunpack.c.l.b16 %v3350
      %v3613 = vunpack.c.h.b16 %v3350
      %v3614 = vunpack.c.l.b16 %v3351
      %v3615 = vunpack.c.h.b16 %v3351
      %v3616 = vunpack.c.l.b16 %v3352
      %v3617 = vunpack.c.h.b16 %v3352
      %v3618 = vunpack.c.l.b16 %v3353
      %v3619 = vunpack.c.h.b16 %v3353
      %v3620 = vunpack.c.l.b16 %v3354
      %v3621 = vunpack.c.h.b16 %v3354
      %v3622 = vunpack.c.l.b16 %v3355
      %v3623 = vunpack.c.h.b16 %v3355
      %v3624 = vunpack.c.l.b16 %v3356
      %v3625 = vunpack.c.h.b16 %v3356
      %v3626 = vunpack.c.l.b16 %v3357
      %v3627 = vunpack.c.h.b16 %v3357
      %v3628 = vunpack.c.l.b16 %v3358
      %v3629 = vunpack.c.h.b16 %v3358
      %v3630 = vunpack.c.l.b16 %v3359
      %v3631 = vunpack.c.h.b16 %v3359
      %v3632 = vunpack.c.l.b16 %v3360
      %v3633 = vunpack.c.h.b16 %v3360
      %v3634 = vunpack.c.l.b16 %v3361
      %v3635 = vunpack.c.h.b16 %v3361
      %v3636 = vunpack.c.l.b16 %v3362
      %v3637 = vunpack.c.h.b16 %v3362
      %v3638 = vunpack.c.l.b16 %v3363
      %v3639 = vunpack.c.h.b16 %v3363
      %v3640 = vunpack.c.l.b16 %v3364
      %v3641 = vunpack.c.h.b16 %v3364
      %v3642 = vunpack.c.l.b16 %v3365
      %v3643 = vunpack.c.h.b16 %v3365
      %v3644 = vunpack.c.l.b16 %v3366
      %v3645 = vunpack.c.h.b16 %v3366
      %v3646 = vunpack.c.l.b16 %v3367
      %v3647 = vunpack.c.h.b16 %v3367
      %v3648 = vunpack.c.l.b16 %v3368
      %v3649 = vunpack.c.h.b16 %v3368
      %v3650 = vunpack.c.l.b16 %v3369
      %v3651 = vunpack.c.h.b16 %v3369
      %v3652 = vunpack.c.l.b16 %v3370
      %v3653 = vunpack.c.h.b16 %v3370
      %v3654 = vunpack.c.l.b16 %v3371
      %v3655 = vunpack.c.h.b16 %v3371
      %v3656 = vunpack.c.l.b16 %v3372
      %v3657 = vunpack.c.h.b16 %v3372
      %v3658 = vunpack.c.l.b16 %v3373
      %v3659 = vunpack.c.h.b16 %v3373
      %v3660 = vunpack.c.l.b16 %v3374
      %v3661 = vunpack.c.h.b16 %v3374
      %v3662 = vunpack.c.l.b16 %v3375
      %v3663 = vunpack.c.h.b16 %v3375
      %v3664 = vunpack.c.l.b16 %v3376
      %v3665 = vunpack.c.h.b16 %v3376
      %v3666 = vunpack.c.l.b16 %v3377
      %v3667 = vunpack.c.h.b16 %v3377
      %v3668 = vunpack.c.l.b16 %v3378
      %v3669 = vunpack.c.h.b16 %v3378
      %v3670 = vunpack.c.l.b16 %v3379
      %v3671 = vunpack.c.h.b16 %v3379
      %v3672 = vunpack.c.l.b16 %v3380
      %v3673 = vunpack.c.h.b16 %v3380
      %v3674 = vunpack.c.l.b16 %v3381
      %v3675 = vunpack.c.h.b16 %v3381
      %v3676 = vunpack.c.l.b16 %v3382
      %v3677 = vunpack.c.h.b16 %v3382
      %v3678 = vunpack.c.l.b16 %v3383
      %v3679 = vunpack.c.h.b16 %v3383
      %v3680 = vunpack.c.l.b16 %v3384
      %v3681 = vunpack.c.h.b16 %v3384
      %v3682 = vunpack.c.l.b16 %v3385
      %v3683 = vunpack.c.h.b16 %v3385
      %v3684 = vunpack.c.l.b16 %v3386
      %v3685 = vunpack.c.h.b16 %v3386
      %v3686 = vunpack.c.l.b16 %v3387
      %v3687 = vunpack.c.h.b16 %v3387
      %v3688 = vunpack.c.l.b16 %v3388
      %v3689 = vunpack.c.h.b16 %v3388
      %v3690 = vunpack.c.l.b16 %v3389
      %v3691 = vunpack.c.h.b16 %v3389
      %v3692 = vunpack.c.l.b16 %v3390
      %v3693 = vunpack.c.h.b16 %v3390
      %v3694 = vunpack.c.l.b16 %v3391
      %v3695 = vunpack.c.h.b16 %v3391
      %v3696 = vunpack.c.l.b16 %v3392
      %v3697 = vunpack.c.h.b16 %v3392
      %v3698 = vunpack.c.l.b16 %v3393
      %v3699 = vunpack.c.h.b16 %v3393
      %v3700 = vunpack.c.l.b16 %v3394
      %v3701 = vunpack.c.h.b16 %v3394
      %v3702 = vunpack.c.l.b16 %v3395
      %v3703 = vunpack.c.h.b16 %v3395
      %v3704 = vunpack.c.l.b16 %v3396
      %v3705 = vunpack.c.h.b16 %v3396
      %v3706 = vunpack.c.l.b16 %v3397
      %v3707 = vunpack.c.h.b16 %v3397
      %v3708 = vunpack.c.l.b16 %v3398
      %v3709 = vunpack.c.h.b16 %v3398
      %v3710 = vunpack.c.l.b16 %v3399
      %v3711 = vunpack.c.h.b16 %v3399
      %v3712 = vunpack.c.l.b16 %v3400
      %v3713 = vunpack.c.h.b16 %v3400
      %v3714 = vunpack.c.l.b16 %v3401
      %v3715 = vunpack.c.h.b16 %v3401
      %v3716 = vunpack.c.l.b16 %v3402
      %v3717 = vunpack.c.h.b16 %v3402
      %v3718 = vunpack.c.l.b16 %v3403
      %v3719 = vunpack.c.h.b16 %v3403
      %v3720 = vunpack.c.l.b16 %v3404
      %v3721 = vunpack.c.h.b16 %v3404
      %v3722 = vunpack.c.l.b16 %v3405
      %v3723 = vunpack.c.h.b16 %v3405
      %v3724 = vunpack.c.l.b16 %v3406
      %v3725 = vunpack.c.h.b16 %v3406
      %v3726 = vunpack.c.l.b16 %v3407
      %v3727 = vunpack.c.h.b16 %v3407
      %v3728 = vunpack.c.l.b16 %v3408
      %v3729 = vunpack.c.h.b16 %v3408
      %v3730 = vunpack.c.l.b16 %v3409
      %v3731 = vunpack.c.h.b16 %v3409
      %v3732 = vunpack.c.l.b16 %v3410
      %v3733 = vunpack.c.h.b16 %v3410
      %v3734 = vunpack.c.l.b16 %v3411
      %v3735 = vunpack.c.h.b16 %v3411
      %v3736 = vunpack.c.l.b16 %v3412
      %v3737 = vunpack.c.h.b16 %v3412
      %v3738 = vunpack.c.l.b16 %v3413
      %v3739 = vunpack.c.h.b16 %v3413
      %v3740 = vunpack.c.l.b16 %v3414
      %v3741 = vunpack.c.h.b16 %v3414
      %v3742 = vunpack.c.l.b16 %v3415
      %v3743 = vunpack.c.h.b16 %v3415
      %v3744 = vunpack.c.l.b16 %v3416
      %v3745 = vunpack.c.h.b16 %v3416
      %v3746 = vunpack.c.l.b16 %v3417
      %v3747 = vunpack.c.h.b16 %v3417
      %v3748 = vunpack.c.l.b16 %v3418
      %v3749 = vunpack.c.h.b16 %v3418
      %v3750 = vunpack.c.l.b16 %v3419
      %v3751 = vunpack.c.h.b16 %v3419
      %v3752 = vunpack.c.l.b16 %v3420
      %v3753 = vunpack.c.h.b16 %v3420
      %v3754 = vunpack.c.l.b16 %v3421
      %v3755 = vunpack.c.h.b16 %v3421
      %v3756 = vunpack.c.l.b16 %v3422
      %v3757 = vunpack.c.h.b16 %v3422
      %v3758 = vunpack.c.l.b16 %v3423
      %v3759 = vunpack.c.h.b16 %v3423
      %v3760 = vunpack.c.l.b16 %v3424
      %v3761 = vunpack.c.h.b16 %v3424
      %v3762 = vunpack.c.l.b16 %v3425
      %v3763 = vunpack.c.h.b16 %v3425
      %v3764 = vunpack.c.l.b16 %v3426
      %v3765 = vunpack.c.h.b16 %v3426
      %v3766 = vunpack.c.l.b16 %v3427
      %v3767 = vunpack.c.h.b16 %v3427
      %v3768 = vunpack.c.l.b16 %v3428
      %v3769 = vunpack.c.h.b16 %v3428
      %v3770 = vunpack.c.l.b16 %v3429
      %v3771 = vunpack.c.h.b16 %v3429
      %v3772 = vunpack.c.l.b16 %v3430
      %v3773 = vunpack.c.h.b16 %v3430
      %v3774 = vunpack.c.l.b16 %v3431
      %v3775 = vunpack.c.h.b16 %v3431
      %v3776 = vunpack.c.l.b16 %v3432
      %v3777 = vunpack.c.h.b16 %v3432
      %v3778 = vunpack.c.l.b16 %v3433
      %v3779 = vunpack.c.h.b16 %v3433
      %v3780 = vunpack.c.l.b16 %v3434
      %v3781 = vunpack.c.h.b16 %v3434
      %v3782 = vunpack.c.l.b16 %v3435
      %v3783 = vunpack.c.h.b16 %v3435
      %v3784 = vunpack.c.l.b16 %v3436
      %v3785 = vunpack.c.h.b16 %v3436
      %v3786 = vunpack.c.l.b16 %v3437
      %v3787 = vunpack.c.h.b16 %v3437
      %v3788 = vunpack.c.l.b16 %v3438
      %v3789 = vunpack.c.h.b16 %v3438
      %v3790 = vunpack.c.l.b16 %v3439
      %v3791 = vunpack.c.h.b16 %v3439
      %v3792 = vunpack.c.l.b16 %v3440
      %v3793 = vunpack.c.h.b16 %v3440
      %v3794 = vunpack.c.l.b16 %v3441
      %v3795 = vunpack.c.h.b16 %v3441
      %v3796 = vunpack.c.l.b16 %v3442
      %v3797 = vunpack.c.h.b16 %v3442
      %v3798 = vunpack.c.l.b16 %v3443
      %v3799 = vunpack.c.h.b16 %v3443
      %v3800 = vunpack.c.l.b16 %v3444
      %v3801 = vunpack.c.h.b16 %v3444
      %v3802 = vunpack.c.l.b16 %v3445
      %v3803 = vunpack.c.h.b16 %v3445
      %v3804 = vunpack.c.l.b16 %v3446
      %v3805 = vunpack.c.h.b16 %v3446
      %v3806 = vunpack.c.l.b16 %v3447
      %v3807 = vunpack.c.h.b16 %v3447
      %v3808 = vunpack.c.l.b16 %v3448
      %v3809 = vunpack.c.h.b16 %v3448
      %v3810 = vunpack.c.l.b16 %v3449
      %v3811 = vunpack.c.h.b16 %v3449
      %v3812 = vunpack.c.l.b16 %v3450
      %v3813 = vunpack.c.h.b16 %v3450
      %v3814 = vunpack.c.l.b16 %v3451
      %v3815 = vunpack.c.h.b16 %v3451
      %v3816 = vunpack.c.l.b16 %v3452
      %v3817 = vunpack.c.h.b16 %v3452
      %v3818 = vunpack.c.l.b16 %v3453
      %v3819 = vunpack.c.h.b16 %v3453
      %v3820 = vunpack.c.l.b16 %v3454
      %v3821 = vunpack.c.h.b16 %v3454
      %v3822 = vunpack.c.l.b16 %v3455
      %v3823 = vunpack.c.h.b16 %v3455
      %v3824 = vunpack.c.l.b16 %v3456
      %v3825 = vunpack.c.h.b16 %v3456
      %v3826 = vunpack.c.l.b16 %v3457
      %v3827 = vunpack.c.h.b16 %v3457
      %v3828 = vunpack.c.l.b16 %v3458
      %v3829 = vunpack.c.h.b16 %v3458
      %v3830 = vunpack.c.l.b16 %v3459
      %v3831 = vunpack.c.h.b16 %v3459
      %v3832 = vunpack.c.l.b16 %v3460
      %v3833 = vunpack.c.h.b16 %v3460
      %v3834 = vunpack.c.l.b16 %v3461
      %v3835 = vunpack.c.h.b16 %v3461
      %v3836 = vunpack.c.l.b16 %v3462
      %v3837 = vunpack.c.h.b16 %v3462
      %v3838 = vunpack.c.l.b16 %v3463
      %v3839 = vunpack.c.h.b16 %v3463
      %v3840 = vunpack.c.l.b16 %v3464
      %v3841 = vunpack.c.h.b16 %v3464
      %v3842 = vunpack.c.l.b16 %v3465
      %v3843 = vunpack.c.h.b16 %v3465
      %v3844 = vunpack.c.l.b16 %v3466
      %v3845 = vunpack.c.h.b16 %v3466
      %v3846 = vunpack.c.l.b16 %v3467
      %v3847 = vunpack.c.h.b16 %v3467
      %v3848 = vunpack.c.l.b16 %v3468
      %v3849 = vunpack.c.h.b16 %v3468
      %v3850 = vunpack.c.l.b16 %v3469
      %v3851 = vunpack.c.h.b16 %v3469
      %v3852 = vunpack.c.l.b16 %v3470
      %v3853 = vunpack.c.h.b16 %v3470
      %v3854 = vunpack.c.l.b16 %v3471
      %v3855 = vunpack.c.h.b16 %v3471
      %v3856 = vpack.c.b16 %v3600, %v3600
      %v3857 = vpack.c.b16 %v3601, %v3601
      %v3858 = vpack.c.b16 %v3602, %v3602
      %v3859 = vpack.c.b16 %v3603, %v3603
      %v3860 = vpack.c.b16 %v3604, %v3604
      %v3861 = vpack.c.b16 %v3605, %v3605
      %v3862 = vpack.c.b16 %v3606, %v3606
      %v3863 = vpack.c.b16 %v3607, %v3607
      %v3864 = vpack.c.b16 %v3608, %v3608
      %v3865 = vpack.c.b16 %v3609, %v3609
      %v3866 = vpack.c.b16 %v3610, %v3610
      %v3867 = vpack.c.b16 %v3611, %v3611
      %v3868 = vpack.c.b16 %v3612, %v3612
      %v3869 = vpack.c.b16 %v3613, %v3613
      %v3870 = vpack.c.b16 %v3614, %v3614
      %v3871 = vpack.c.b16 %v3615, %v3615
      %v3872 = vpack.c.b16 %v3616, %v3616
      %v3873 = vpack.c.b16 %v3617, %v3617
      %v3874 = vpack.c.b16 %v3618, %v3618
      %v3875 = vpack.c.b16 %v3619, %v3619
      %v3876 = vpack.c.b16 %v3620, %v3620
      %v3877 = vpack.c.b16 %v3621, %v3621
      %v3878 = vpack.c.b16 %v3622, %v3622
      %v3879 = vpack.c.b16 %v3623, %v3623
      %v3880 = vpack.c.b16 %v3624, %v3624
      %v3881 = vpack.c.b16 %v3625, %v3625
      %v3882 = vpack.c.b16 %v3626, %v3626
      %v3883 = vpack.c.b16 %v3627, %v3627
      %v3884 = vpack.c.b16 %v3628, %v3628
      %v3885 = vpack.c.b16 %v3629, %v3629
      %v3886 = vpack.c.b16 %v3630, %v3630
      %v3887 = vpack.c.b16 %v3631, %v3631
      %v3888 = vpack.c.b16 %v3632, %v3632
      %v3889 = vpack.c.b16 %v3633, %v3633
      %v3890 = vpack.c.b16 %v3634, %v3634
      %v3891 = vpack.c.b16 %v3635, %v3635
      %v3892 = vpack.c.b16 %v3636, %v3636
      %v3893 = vpack.c.b16 %v3637, %v3637
      %v3894 = vpack.c.b16 %v3638, %v3638
      %v3895 = vpack.c.b16 %v3639, %v3639
      %v3896 = vpack.c.b16 %v3640, %v3640
      %v3897 = vpack.c.b16 %v3641, %v3641
      %v3898 = vpack.c.b16 %v3642, %v3642
      %v3899 = vpack.c.b16 %v3643, %v3643
      %v3900 = vpack.c.b16 %v3644, %v3644
      %v3901 = vpack.c.b16 %v3645, %v3645
      %v3902 = vpack.c.b16 %v3646, %v3646
      %v3903 = vpack.c.b16 %v3647, %v3647
      %v3904 = vpack.c.b16 %v3648, %v3648
      %v3905 = vpack.c.b16 %v3649, %v3649
      %v3906 = vpack.c.b16 %v3650, %v3650
      %v3907 = vpack.c.b16 %v3651, %v3651
      %v3908 = vpack.c.b16 %v3652, %v3652
      %v3909 = vpack.c.b16 %v3653, %v3653
      %v3910 = vpack.c.b16 %v3654, %v3654
      %v3911 = vpack.c.b16 %v3655, %v3655
      %v3912 = vpack.c.b16 %v3656, %v3656
      %v3913 = vpack.c.b16 %v3657, %v3657
      %v3914 = vpack.c.b16 %v3658, %v3658
      %v3915 = vpack.c.b16 %v3659, %v3659
      %v3916 = vpack.c.b16 %v3660, %v3660
      %v3917 = vpack.c.b16 %v3661, %v3661
      %v3918 = vpack.c.b16 %v3662, %v3662
      %v3919 = vpack.c.b16 %v3663, %v3663
      %v3920 = vpack.c.b16 %v3664, %v3664
      %v3921 = vpack.c.b16 %v3665, %v3665
      %v3922 = vpack.c.b16 %v3666, %v3666
      %v3923 = vpack.c.b16 %v3667, %v3667
      %v3924 = vpack.c.b16 %v3668, %v3668
      %v3925 = vpack.c.b16 %v3669, %v3669
      %v3926 = vpack.c.b16 %v3670, %v3670
      %v3927 = vpack.c.b16 %v3671, %v3671
      %v3928 = vpack.c.b16 %v3672, %v3672
      %v3929 = vpack.c.b16 %v3673, %v3673
      %v3930 = vpack.c.b16 %v3674, %v3674
      %v3931 = vpack.c.b16 %v3675, %v3675
      %v3932 = vpack.c.b16 %v3676, %v3676
      %v3933 = vpack.c.b16 %v3677, %v3677
      %v3934 = vpack.c.b16 %v3678, %v3678
      %v3935 = vpack.c.b16 %v3679, %v3679
      %v3936 = vpack.c.b16 %v3680, %v3680
      %v3937 = vpack.c.b16 %v3681, %v3681
      %v3938 = vpack.c.b16 %v3682, %v3682
      %v3939 = vpack.c.b16 %v3683, %v3683
      %v3940 = vpack.c.b16 %v3684, %v3684
      %v3941 = vpack.c.b16 %v3685, %v3685
      %v3942 = vpack.c.b16 %v3686, %v3686
      %v3943 = vpack.c.b16 %v3687, %v3687
      %v3944 = vpack.c.b16 %v3688, %v3688
      %v3945 = vpack.c.b16 %v3689, %v3689
      %v3946 = vpack.c.b16 %v3690, %v3690
      %v3947 = vpack.c.b16 %v3691, %v3691
      %v3948 = vpack.c.b16 %v3692, %v3692
      %v3949 = vpack.c.b16 %v3693, %v3693
      %v3950 = vpack.c.b16 %v3694, %v3694
      %v3951 = vpack.c.b16 %v3695, %v3695
      %v3952 = vpack.c.b16 %v3696, %v3696
      %v3953 = vpack.c.b16 %v3697, %v3697
      %v3954 = vpack.c.b16 %v3698, %v3698
      %v3955 = vpack.c.b16 %v3699, %v3699
      %v3956 = vpack.c.b16 %v3700, %v3700
      %v3957 = vpack.c.b16 %v3701, %v3701
      %v3958 = vpack.c.b16 %v3702, %v3702
      %v3959 = vpack.c.b16 %v3703, %v3703
      %v3960 = vpack.c.b16 %v3704, %v3704
      %v3961 = vpack.c.b16 %v3705, %v3705
      %v3962 = vpack.c.b16 %v3706, %v3706
      %v3963 = vpack.c.b16 %v3707, %v3707
      %v3964 = vpack.c.b16 %v3708, %v3708
      %v3965 = vpack.c.b16 %v3709, %v3709
      %v3966 = vpack.c.b16 %v3710, %v3710
      %v3967 = vpack.c.b16 %v3711, %v3711
      %v3968 = vpack.c.b16 %v3712, %v3712
      %v3969 = vpack.c.b16 %v3713, %v3713
      %v3970 = vpack.c.b16 %v3714, %v3714
      %v3971 = vpack.c.b16 %v3715, %v3715
      %v3972 = vpack.c.b16 %v3716, %v3716
      %v3973 = vpack.c.b16 %v3717, %v3717
      %v3974 = vpack.c.b16 %v3718, %v3718
      %v3975 = vpack.c.b16 %v3719, %v3719
      %v3976 = vpack.c.b16 %v3720, %v3720
      %v3977 = vpack.c.b16 %v3721, %v3721
      %v3978 = vpack.c.b16 %v3722, %v3722
      %v3979 = vpack.c.b16 %v3723, %v3723
      %v3980 = vpack.c.b16 %v3724, %v3724
      %v3981 = vpack.c.b16 %v3725, %v3725
      %v3982 = vpack.c.b16 %v3726, %v3726
      %v3983 = vpack.c.b16 %v3727, %v3727
      %v3984 = vpack.c.b16 %v3728, %v3728
      %v3985 = vpack.c.b16 %v3729, %v3729
      %v3986 = vpack.c.b16 %v3730, %v3730
      %v3987 = vpack.c.b16 %v3731, %v3731
      %v3988 = vpack.c.b16 %v3732, %v3732
      %v3989 = vpack.c.b16 %v3733, %v3733
      %v3990 = vpack.c.b16 %v3734, %v3734
      %v3991 = vpack.c.b16 %v3735, %v3735
      %v3992 = vpack.c.b16 %v3736, %v3736
      %v3993 = vpack.c.b16 %v3737, %v3737
      %v3994 = vpack.c.b16 %v3738, %v3738
      %v3995 = vpack.c.b16 %v3739, %v3739
      %v3996 = vpack.c.b16 %v3740, %v3740
      %v3997 = vpack.c.b16 %v3741, %v3741
      %v3998 = vpack.c.b16 %v3742, %v3742
      %v3999 = vpack.c.b16 %v3743, %v3743
      %v4000 = vpack.c.b16 %v3744, %v3744
      %v4001 = vpack.c.b16 %v3745, %v3745
      %v4002 = vpack.c.b16 %v3746, %v3746
      %v4003 = vpack.c.b16 %v3747, %v3747
      %v4004 = vpack.c.b16 %v3748, %v3748
      %v4005 = vpack.c.b16 %v3749, %v3749
      %v4006 = vpack.c.b16 %v3750, %v3750
      %v4007 = vpack.c.b16 %v3751, %v3751
      %v4008 = vpack.c.b16 %v3752, %v3752
      %v4009 = vpack.c.b16 %v3753, %v3753
      %v4010 = vpack.c.b16 %v3754, %v3754
      %v4011 = vpack.c.b16 %v3755, %v3755
      %v4012 = vpack.c.b16 %v3756, %v3756
      %v4013 = vpack.c.b16 %v3757, %v3757
      %v4014 = vpack.c.b16 %v3758, %v3758
      %v4015 = vpack.c.b16 %v3759, %v3759
      %v4016 = vpack.c.b16 %v3760, %v3760
      %v4017 = vpack.c.b16 %v3761, %v3761
      %v4018 = vpack.c.b16 %v3762, %v3762
      %v4019 = vpack.c.b16 %v3763, %v3763
      %v4020 = vpack.c.b16 %v3764, %v3764
      %v4021 = vpack.c.b16 %v3765, %v3765
      %v4022 = vpack.c.b16 %v3766, %v3766
      %v4023 = vpack.c.b16 %v3767, %v3767
      %v4024 = vpack.c.b16 %v3768, %v3768
      %v4025 = vpack.c.b16 %v3769, %v3769
      %v4026 = vpack.c.b16 %v3770, %v3770
      %v4027 = vpack.c.b16 %v3771, %v3771
      %v4028 = vpack.c.b16 %v3772, %v3772
      %v4029 = vpack.c.b16 %v3773, %v3773
      %v4030 = vpack.c.b16 %v3774, %v3774
      %v4031 = vpack.c.b16 %v3775, %v3775
      %v4032 = vpack.c.b16 %v3776, %v3776
      %v4033 = vpack.c.b16 %v3777, %v3777
      %v4034 = vpack.c.b16 %v3778, %v3778
      %v4035 = vpack.c.b16 %v3779, %v3779
      %v4036 = vpack.c.b16 %v3780, %v3780
      %v4037 = vpack.c.b16 %v3781, %v3781
      %v4038 = vpack.c.b16 %v3782, %v3782
      %v4039 = vpack.c.b16 %v3783, %v3783
      %v4040 = vpack.c.b16 %v3784, %v3784
      %v4041 = vpack.c.b16 %v3785, %v3785
      %v4042 = vpack.c.b16 %v3786, %v3786
      %v4043 = vpack.c.b16 %v3787, %v3787
      %v4044 = vpack.c.b16 %v3788, %v3788
      %v4045 = vpack.c.b16 %v3789, %v3789
      %v4046 = vpack.c.b16 %v3790, %v3790
      %v4047 = vpack.c.b16 %v3791, %v3791
      %v4048 = vpack.c.b16 %v3792, %v3792
      %v4049 = vpack.c.b16 %v3793, %v3793
      %v4050 = vpack.c.b16 %v3794, %v3794
      %v4051 = vpack.c.b16 %v3795, %v3795
      %v4052 = vpack.c.b16 %v3796, %v3796
      %v4053 = vpack.c.b16 %v3797, %v3797
      %v4054 = vpack.c.b16 %v3798, %v3798
      %v4055 = vpack.c.b16 %v3799, %v3799
      %v4056 = vpack.c.b16 %v3800, %v3800
      %v4057 = vpack.c.b16 %v3801, %v3801
      %v4058 = vpack.c.b16 %v3802, %v3802
      %v4059 = vpack.c.b16 %v3803, %v3803
      %v4060 = vpack.c.b16 %v3804, %v3804
      %v4061 = vpack.c.b16 %v3805, %v3805
      %v4062 = vpack.c.b16 %v3806, %v3806
      %v4063 = vpack.c.b16 %v3807, %v3807
      %v4064 = vpack.c.b16 %v3808, %v3808
      %v4065 = vpack.c.b16 %v3809, %v3809
      %v4066 = vpack.c.b16 %v3810, %v3810
      %v4067 = vpack.c.b16 %v3811, %v3811
      %v4068 = vpack.c.b16 %v3812, %v3812
      %v4069 = vpack.c.b16 %v3813, %v3813
      %v4070 = vpack.c.b16 %v3814, %v3814
      %v4071 = vpack.c.b16 %v3815, %v3815
      %v4072 = vpack.c.b16 %v3816, %v3816
      %v4073 = vpack.c.b16 %v3817, %v3817
      %v4074 = vpack.c.b16 %v3818, %v3818
      %v4075 = vpack.c.b16 %v3819, %v3819
      %v4076 = vpack.c.b16 %v3820, %v3820
      %v4077 = vpack.c.b16 %v3821, %v3821
      %v4078 = vpack.c.b16 %v3822, %v3822
      %v4079 = vpack.c.b16 %v3823, %v3823
      %v4080 = vpack.c.b16 %v3824, %v3824
      %v4081 = vpack.c.b16 %v3825, %v3825
      %v4082 = vpack.c.b16 %v3826, %v3826
      %v4083 = vpack.c.b16 %v3827, %v3827
      %v4084 = vpack.c.b16 %v3828, %v3828
      %v4085 = vpack.c.b16 %v3829, %v3829
      %v4086 = vpack.c.b16 %v3830, %v3830
      %v4087 = vpack.c.b16 %v3831, %v3831
      %v4088 = vpack.c.b16 %v3832, %v3832
      %v4089 = vpack.c.b16 %v3833, %v3833
      %v4090 = vpack.c.b16 %v3834, %v3834
      %v4091 = vpack.c.b16 %v3835, %v3835
      %v4092 = vpack.c.b16 %v3836, %v3836
      %v4093 = vpack.c.b16 %v3837, %v3837
      %v4094 = vpack.c.b16 %v3838, %v3838
      %v4095 = vpack.c.b16 %v3839, %v3839
      %v4096 = vpack.c.b16 %v3840, %v3840
      %v4097 = vpack.c.b16 %v3841, %v3841
      %v4098 = vpack.c.b16 %v3842, %v3842
      %v4099 = vpack.c.b16 %v3843, %v3843
      %v4100 = vpack.c.b16 %v3844, %v3844
      %v4101 = vpack.c.b16 %v3845, %v3845
      %v4102 = vpack.c.b16 %v3846, %v3846
      %v4103 = vpack.c.b16 %v3847, %v3847
      %v4104 = vpack.c.b16 %v3848, %v3848
      %v4105 = vpack.c.b16 %v3849, %v3849
      %v4106 = vpack.c.b16 %v3850, %v3850
      %v4107 = vpack.c.b16 %v3851, %v3851
      %v4108 = vpack.c.b16 %v3852, %v3852
      %v4109 = vpack.c.b16 %v3853, %v3853
      %v4110 = vpack.c.b16 %v3854, %v3854
      %v4111 = vpack.c.b16 %v3855, %v3855
      %vm4368 = vcmask 257024
      %4369 = vst.msk [vmem:[%s199] sm:$0xf] %vm4368, %v3856
      %4370 = vst.msk [vmem:[%s199 + $0x4] sm:$0xf] %vm4368, %v3857
      %4371 = vst.msk [vmem:[%s199 + $0x8] sm:$0xf] %vm4368, %v3858
      %4372 = vst.msk [vmem:[%s199 + $0xc] sm:$0xf] %vm4368, %v3859
      %4373 = vst.msk [vmem:[%s199 + $0x10] sm:$0xf] %vm4368, %v3860
      %4374 = vst.msk [vmem:[%s199 + $0x14] sm:$0xf] %vm4368, %v3861
      %4375 = vst.msk [vmem:[%s199 + $0x18] sm:$0xf] %vm4368, %v3862
      %4376 = vst.msk [vmem:[%s199 + $0x1c] sm:$0xf] %vm4368, %v3863
      %4377 = vst.msk [vmem:[%s199 + $0x20] sm:$0xf] %vm4368, %v3864
      %4378 = vst.msk [vmem:[%s199 + $0x24] sm:$0xf] %vm4368, %v3865
      %4379 = vst.msk [vmem:[%s199 + $0x28] sm:$0xf] %vm4368, %v3866
      %4380 = vst.msk [vmem:[%s199 + $0x2c] sm:$0xf] %vm4368, %v3867
      %4381 = vst.msk [vmem:[%s199 + $0x30] sm:$0xf] %vm4368, %v3868
      %4382 = vst.msk [vmem:[%s199 + $0x34] sm:$0xf] %vm4368, %v3869
      %4383 = vst.msk [vmem:[%s199 + $0x38] sm:$0xf] %vm4368, %v3870
      %4384 = vst.msk [vmem:[%s199 + $0x3c] sm:$0xf] %vm4368, %v3871
      %4385 = vst.msk [vmem:[%s199 + $0x40] sm:$0xf] %vm4368, %v3872
      %4386 = vst.msk [vmem:[%s199 + $0x44] sm:$0xf] %vm4368, %v3873
      %4387 = vst.msk [vmem:[%s199 + $0x48] sm:$0xf] %vm4368, %v3874
      %4388 = vst.msk [vmem:[%s199 + $0x4c] sm:$0xf] %vm4368, %v3875
      %4389 = vst.msk [vmem:[%s199 + $0x50] sm:$0xf] %vm4368, %v3876
      %4390 = vst.msk [vmem:[%s199 + $0x54] sm:$0xf] %vm4368, %v3877
      %4391 = vst.msk [vmem:[%s199 + $0x58] sm:$0xf] %vm4368, %v3878
      %4392 = vst.msk [vmem:[%s199 + $0x5c] sm:$0xf] %vm4368, %v3879
      %4393 = vst.msk [vmem:[%s199 + $0x60] sm:$0xf] %vm4368, %v3880
      %4394 = vst.msk [vmem:[%s199 + $0x64] sm:$0xf] %vm4368, %v3881
      %4395 = vst.msk [vmem:[%s199 + $0x68] sm:$0xf] %vm4368, %v3882
      %4396 = vst.msk [vmem:[%s199 + $0x6c] sm:$0xf] %vm4368, %v3883
      %4397 = vst.msk [vmem:[%s199 + $0x70] sm:$0xf] %vm4368, %v3884
      %4398 = vst.msk [vmem:[%s199 + $0x74] sm:$0xf] %vm4368, %v3885
      %4399 = vst.msk [vmem:[%s199 + $0x78] sm:$0xf] %vm4368, %v3886
      %4400 = vst.msk [vmem:[%s199 + $0x7c] sm:$0xf] %vm4368, %v3887
      %4401 = vst.msk [vmem:[%s199 + $0x80] sm:$0xf] %vm4368, %v3888
      %4402 = vst.msk [vmem:[%s199 + $0x84] sm:$0xf] %vm4368, %v3889
      %4403 = vst.msk [vmem:[%s199 + $0x88] sm:$0xf] %vm4368, %v3890
      %4404 = vst.msk [vmem:[%s199 + $0x8c] sm:$0xf] %vm4368, %v3891
      %4405 = vst.msk [vmem:[%s199 + $0x90] sm:$0xf] %vm4368, %v3892
      %4406 = vst.msk [vmem:[%s199 + $0x94] sm:$0xf] %vm4368, %v3893
      %4407 = vst.msk [vmem:[%s199 + $0x98] sm:$0xf] %vm4368, %v3894
      %4408 = vst.msk [vmem:[%s199 + $0x9c] sm:$0xf] %vm4368, %v3895
      %4409 = vst.msk [vmem:[%s199 + $0xa0] sm:$0xf] %vm4368, %v3896
      %4410 = vst.msk [vmem:[%s199 + $0xa4] sm:$0xf] %vm4368, %v3897
      %4411 = vst.msk [vmem:[%s199 + $0xa8] sm:$0xf] %vm4368, %v3898
      %4412 = vst.msk [vmem:[%s199 + $0xac] sm:$0xf] %vm4368, %v3899
      %4413 = vst.msk [vmem:[%s199 + $0xb0] sm:$0xf] %vm4368, %v3900
      %4414 = vst.msk [vmem:[%s199 + $0xb4] sm:$0xf] %vm4368, %v3901
      %4415 = vst.msk [vmem:[%s199 + $0xb8] sm:$0xf] %vm4368, %v3902
      %4416 = vst.msk [vmem:[%s199 + $0xbc] sm:$0xf] %vm4368, %v3903
      %4417 = vst.msk [vmem:[%s199 + $0xc0] sm:$0xf] %vm4368, %v3904
      %4418 = vst.msk [vmem:[%s199 + $0xc4] sm:$0xf] %vm4368, %v3905
      %4419 = vst.msk [vmem:[%s199 + $0xc8] sm:$0xf] %vm4368, %v3906
      %4420 = vst.msk [vmem:[%s199 + $0xcc] sm:$0xf] %vm4368, %v3907
      %4421 = vst.msk [vmem:[%s199 + $0xd0] sm:$0xf] %vm4368, %v3908
      %4422 = vst.msk [vmem:[%s199 + $0xd4] sm:$0xf] %vm4368, %v3909
      %4423 = vst.msk [vmem:[%s199 + $0xd8] sm:$0xf] %vm4368, %v3910
      %4424 = vst.msk [vmem:[%s199 + $0xdc] sm:$0xf] %vm4368, %v3911
      %4425 = vst.msk [vmem:[%s199 + $0xe0] sm:$0xf] %vm4368, %v3912
      %4426 = vst.msk [vmem:[%s199 + $0xe4] sm:$0xf] %vm4368, %v3913
      %4427 = vst.msk [vmem:[%s199 + $0xe8] sm:$0xf] %vm4368, %v3914
      %4428 = vst.msk [vmem:[%s199 + $0xec] sm:$0xf] %vm4368, %v3915
      %4429 = vst.msk [vmem:[%s199 + $0xf0] sm:$0xf] %vm4368, %v3916
      %4430 = vst.msk [vmem:[%s199 + $0xf4] sm:$0xf] %vm4368, %v3917
      %4431 = vst.msk [vmem:[%s199 + $0xf8] sm:$0xf] %vm4368, %v3918
      %4432 = vst.msk [vmem:[%s199 + $0xfc] sm:$0xf] %vm4368, %v3919
      %4433 = vst.msk [vmem:[%s199 + $0x100] sm:$0xf] %vm4368, %v3920
      %4434 = vst.msk [vmem:[%s199 + $0x104] sm:$0xf] %vm4368, %v3921
      %4435 = vst.msk [vmem:[%s199 + $0x108] sm:$0xf] %vm4368, %v3922
      %4436 = vst.msk [vmem:[%s199 + $0x10c] sm:$0xf] %vm4368, %v3923
      %4437 = vst.msk [vmem:[%s199 + $0x110] sm:$0xf] %vm4368, %v3924
      %4438 = vst.msk [vmem:[%s199 + $0x114] sm:$0xf] %vm4368, %v3925
      %4439 = vst.msk [vmem:[%s199 + $0x118] sm:$0xf] %vm4368, %v3926
      %4440 = vst.msk [vmem:[%s199 + $0x11c] sm:$0xf] %vm4368, %v3927
      %4441 = vst.msk [vmem:[%s199 + $0x120] sm:$0xf] %vm4368, %v3928
      %4442 = vst.msk [vmem:[%s199 + $0x124] sm:$0xf] %vm4368, %v3929
      %4443 = vst.msk [vmem:[%s199 + $0x128] sm:$0xf] %vm4368, %v3930
      %4444 = vst.msk [vmem:[%s199 + $0x12c] sm:$0xf] %vm4368, %v3931
      %4445 = vst.msk [vmem:[%s199 + $0x130] sm:$0xf] %vm4368, %v3932
      %4446 = vst.msk [vmem:[%s199 + $0x134] sm:$0xf] %vm4368, %v3933
      %4447 = vst.msk [vmem:[%s199 + $0x138] sm:$0xf] %vm4368, %v3934
      %4448 = vst.msk [vmem:[%s199 + $0x13c] sm:$0xf] %vm4368, %v3935
      %4449 = vst.msk [vmem:[%s199 + $0x140] sm:$0xf] %vm4368, %v3936
      %4450 = vst.msk [vmem:[%s199 + $0x144] sm:$0xf] %vm4368, %v3937
      %4451 = vst.msk [vmem:[%s199 + $0x148] sm:$0xf] %vm4368, %v3938
      %4452 = vst.msk [vmem:[%s199 + $0x14c] sm:$0xf] %vm4368, %v3939
      %4453 = vst.msk [vmem:[%s199 + $0x150] sm:$0xf] %vm4368, %v3940
      %4454 = vst.msk [vmem:[%s199 + $0x154] sm:$0xf] %vm4368, %v3941
      %4455 = vst.msk [vmem:[%s199 + $0x158] sm:$0xf] %vm4368, %v3942
      %4456 = vst.msk [vmem:[%s199 + $0x15c] sm:$0xf] %vm4368, %v3943
      %4457 = vst.msk [vmem:[%s199 + $0x160] sm:$0xf] %vm4368, %v3944
      %4458 = vst.msk [vmem:[%s199 + $0x164] sm:$0xf] %vm4368, %v3945
      %4459 = vst.msk [vmem:[%s199 + $0x168] sm:$0xf] %vm4368, %v3946
      %4460 = vst.msk [vmem:[%s199 + $0x16c] sm:$0xf] %vm4368, %v3947
      %4461 = vst.msk [vmem:[%s199 + $0x170] sm:$0xf] %vm4368, %v3948
      %4462 = vst.msk [vmem:[%s199 + $0x174] sm:$0xf] %vm4368, %v3949
      %4463 = vst.msk [vmem:[%s199 + $0x178] sm:$0xf] %vm4368, %v3950
      %4464 = vst.msk [vmem:[%s199 + $0x17c] sm:$0xf] %vm4368, %v3951
      %4465 = vst.msk [vmem:[%s199 + $0x180] sm:$0xf] %vm4368, %v3952
      %4466 = vst.msk [vmem:[%s199 + $0x184] sm:$0xf] %vm4368, %v3953
      %4467 = vst.msk [vmem:[%s199 + $0x188] sm:$0xf] %vm4368, %v3954
      %4468 = vst.msk [vmem:[%s199 + $0x18c] sm:$0xf] %vm4368, %v3955
      %4469 = vst.msk [vmem:[%s199 + $0x190] sm:$0xf] %vm4368, %v3956
      %4470 = vst.msk [vmem:[%s199 + $0x194] sm:$0xf] %vm4368, %v3957
      %4471 = vst.msk [vmem:[%s199 + $0x198] sm:$0xf] %vm4368, %v3958
      %4472 = vst.msk [vmem:[%s199 + $0x19c] sm:$0xf] %vm4368, %v3959
      %4473 = vst.msk [vmem:[%s199 + $0x1a0] sm:$0xf] %vm4368, %v3960
      %4474 = vst.msk [vmem:[%s199 + $0x1a4] sm:$0xf] %vm4368, %v3961
      %4475 = vst.msk [vmem:[%s199 + $0x1a8] sm:$0xf] %vm4368, %v3962
      %4476 = vst.msk [vmem:[%s199 + $0x1ac] sm:$0xf] %vm4368, %v3963
      %4477 = vst.msk [vmem:[%s199 + $0x1b0] sm:$0xf] %vm4368, %v3964
      %4478 = vst.msk [vmem:[%s199 + $0x1b4] sm:$0xf] %vm4368, %v3965
      %4479 = vst.msk [vmem:[%s199 + $0x1b8] sm:$0xf] %vm4368, %v3966
      %4480 = vst.msk [vmem:[%s199 + $0x1bc] sm:$0xf] %vm4368, %v3967
      %4481 = vst.msk [vmem:[%s199 + $0x1c0] sm:$0xf] %vm4368, %v3968
      %4482 = vst.msk [vmem:[%s199 + $0x1c4] sm:$0xf] %vm4368, %v3969
      %4483 = vst.msk [vmem:[%s199 + $0x1c8] sm:$0xf] %vm4368, %v3970
      %4484 = vst.msk [vmem:[%s199 + $0x1cc] sm:$0xf] %vm4368, %v3971
      %4485 = vst.msk [vmem:[%s199 + $0x1d0] sm:$0xf] %vm4368, %v3972
      %4486 = vst.msk [vmem:[%s199 + $0x1d4] sm:$0xf] %vm4368, %v3973
      %4487 = vst.msk [vmem:[%s199 + $0x1d8] sm:$0xf] %vm4368, %v3974
      %4488 = vst.msk [vmem:[%s199 + $0x1dc] sm:$0xf] %vm4368, %v3975
      %4489 = vst.msk [vmem:[%s199 + $0x1e0] sm:$0xf] %vm4368, %v3976
      %4490 = vst.msk [vmem:[%s199 + $0x1e4] sm:$0xf] %vm4368, %v3977
      %4491 = vst.msk [vmem:[%s199 + $0x1e8] sm:$0xf] %vm4368, %v3978
      %4492 = vst.msk [vmem:[%s199 + $0x1ec] sm:$0xf] %vm4368, %v3979
      %4493 = vst.msk [vmem:[%s199 + $0x1f0] sm:$0xf] %vm4368, %v3980
      %4494 = vst.msk [vmem:[%s199 + $0x1f4] sm:$0xf] %vm4368, %v3981
      %4495 = vst.msk [vmem:[%s199 + $0x1f8] sm:$0xf] %vm4368, %v3982
      %4496 = vst.msk [vmem:[%s199 + $0x1fc] sm:$0xf] %vm4368, %v3983
      %4497 = vst.msk [vmem:[%s199 + $0x200] sm:$0xf] %vm4368, %v3984
      %4498 = vst.msk [vmem:[%s199 + $0x204] sm:$0xf] %vm4368, %v3985
      %4499 = vst.msk [vmem:[%s199 + $0x208] sm:$0xf] %vm4368, %v3986
      %4500 = vst.msk [vmem:[%s199 + $0x20c] sm:$0xf] %vm4368, %v3987
      %4501 = vst.msk [vmem:[%s199 + $0x210] sm:$0xf] %vm4368, %v3988
      %4502 = vst.msk [vmem:[%s199 + $0x214] sm:$0xf] %vm4368, %v3989
      %4503 = vst.msk [vmem:[%s199 + $0x218] sm:$0xf] %vm4368, %v3990
      %4504 = vst.msk [vmem:[%s199 + $0x21c] sm:$0xf] %vm4368, %v3991
      %4505 = vst.msk [vmem:[%s199 + $0x220] sm:$0xf] %vm4368, %v3992
      %4506 = vst.msk [vmem:[%s199 + $0x224] sm:$0xf] %vm4368, %v3993
      %4507 = vst.msk [vmem:[%s199 + $0x228] sm:$0xf] %vm4368, %v3994
      %4508 = vst.msk [vmem:[%s199 + $0x22c] sm:$0xf] %vm4368, %v3995
      %4509 = vst.msk [vmem:[%s199 + $0x230] sm:$0xf] %vm4368, %v3996
      %4510 = vst.msk [vmem:[%s199 + $0x234] sm:$0xf] %vm4368, %v3997
      %4511 = vst.msk [vmem:[%s199 + $0x238] sm:$0xf] %vm4368, %v3998
      %4512 = vst.msk [vmem:[%s199 + $0x23c] sm:$0xf] %vm4368, %v3999
      %4513 = vst.msk [vmem:[%s199 + $0x240] sm:$0xf] %vm4368, %v4000
      %4514 = vst.msk [vmem:[%s199 + $0x244] sm:$0xf] %vm4368, %v4001
      %4515 = vst.msk [vmem:[%s199 + $0x248] sm:$0xf] %vm4368, %v4002
      %4516 = vst.msk [vmem:[%s199 + $0x24c] sm:$0xf] %vm4368, %v4003
      %4517 = vst.msk [vmem:[%s199 + $0x250] sm:$0xf] %vm4368, %v4004
      %4518 = vst.msk [vmem:[%s199 + $0x254] sm:$0xf] %vm4368, %v4005
      %4519 = vst.msk [vmem:[%s199 + $0x258] sm:$0xf] %vm4368, %v4006
      %4520 = vst.msk [vmem:[%s199 + $0x25c] sm:$0xf] %vm4368, %v4007
      %4521 = vst.msk [vmem:[%s199 + $0x260] sm:$0xf] %vm4368, %v4008
      %4522 = vst.msk [vmem:[%s199 + $0x264] sm:$0xf] %vm4368, %v4009
      %4523 = vst.msk [vmem:[%s199 + $0x268] sm:$0xf] %vm4368, %v4010
      %4524 = vst.msk [vmem:[%s199 + $0x26c] sm:$0xf] %vm4368, %v4011
      %4525 = vst.msk [vmem:[%s199 + $0x270] sm:$0xf] %vm4368, %v4012
      %4526 = vst.msk [vmem:[%s199 + $0x274] sm:$0xf] %vm4368, %v4013
      %4527 = vst.msk [vmem:[%s199 + $0x278] sm:$0xf] %vm4368, %v4014
      %4528 = vst.msk [vmem:[%s199 + $0x27c] sm:$0xf] %vm4368, %v4015
      %4529 = vst.msk [vmem:[%s199 + $0x280] sm:$0xf] %vm4368, %v4016
      %4530 = vst.msk [vmem:[%s199 + $0x284] sm:$0xf] %vm4368, %v4017
      %4531 = vst.msk [vmem:[%s199 + $0x288] sm:$0xf] %vm4368, %v4018
      %4532 = vst.msk [vmem:[%s199 + $0x28c] sm:$0xf] %vm4368, %v4019
      %4533 = vst.msk [vmem:[%s199 + $0x290] sm:$0xf] %vm4368, %v4020
      %4534 = vst.msk [vmem:[%s199 + $0x294] sm:$0xf] %vm4368, %v4021
      %4535 = vst.msk [vmem:[%s199 + $0x298] sm:$0xf] %vm4368, %v4022
      %4536 = vst.msk [vmem:[%s199 + $0x29c] sm:$0xf] %vm4368, %v4023
      %4537 = vst.msk [vmem:[%s199 + $0x2a0] sm:$0xf] %vm4368, %v4024
      %4538 = vst.msk [vmem:[%s199 + $0x2a4] sm:$0xf] %vm4368, %v4025
      %4539 = vst.msk [vmem:[%s199 + $0x2a8] sm:$0xf] %vm4368, %v4026
      %4540 = vst.msk [vmem:[%s199 + $0x2ac] sm:$0xf] %vm4368, %v4027
      %4541 = vst.msk [vmem:[%s199 + $0x2b0] sm:$0xf] %vm4368, %v4028
      %4542 = vst.msk [vmem:[%s199 + $0x2b4] sm:$0xf] %vm4368, %v4029
      %4543 = vst.msk [vmem:[%s199 + $0x2b8] sm:$0xf] %vm4368, %v4030
      %4544 = vst.msk [vmem:[%s199 + $0x2bc] sm:$0xf] %vm4368, %v4031
      %4545 = vst.msk [vmem:[%s199 + $0x2c0] sm:$0xf] %vm4368, %v4032
      %4546 = vst.msk [vmem:[%s199 + $0x2c4] sm:$0xf] %vm4368, %v4033
      %4547 = vst.msk [vmem:[%s199 + $0x2c8] sm:$0xf] %vm4368, %v4034
      %4548 = vst.msk [vmem:[%s199 + $0x2cc] sm:$0xf] %vm4368, %v4035
      %4549 = vst.msk [vmem:[%s199 + $0x2d0] sm:$0xf] %vm4368, %v4036
      %4550 = vst.msk [vmem:[%s199 + $0x2d4] sm:$0xf] %vm4368, %v4037
      %4551 = vst.msk [vmem:[%s199 + $0x2d8] sm:$0xf] %vm4368, %v4038
      %4552 = vst.msk [vmem:[%s199 + $0x2dc] sm:$0xf] %vm4368, %v4039
      %4553 = vst.msk [vmem:[%s199 + $0x2e0] sm:$0xf] %vm4368, %v4040
      %4554 = vst.msk [vmem:[%s199 + $0x2e4] sm:$0xf] %vm4368, %v4041
      %4555 = vst.msk [vmem:[%s199 + $0x2e8] sm:$0xf] %vm4368, %v4042
      %4556 = vst.msk [vmem:[%s199 + $0x2ec] sm:$0xf] %vm4368, %v4043
      %4557 = vst.msk [vmem:[%s199 + $0x2f0] sm:$0xf] %vm4368, %v4044
      %4558 = vst.msk [vmem:[%s199 + $0x2f4] sm:$0xf] %vm4368, %v4045
      %4559 = vst.msk [vmem:[%s199 + $0x2f8] sm:$0xf] %vm4368, %v4046
      %4560 = vst.msk [vmem:[%s199 + $0x2fc] sm:$0xf] %vm4368, %v4047
      %4561 = vst.msk [vmem:[%s199 + $0x300] sm:$0xf] %vm4368, %v4048
      %4562 = vst.msk [vmem:[%s199 + $0x304] sm:$0xf] %vm4368, %v4049
      %4563 = vst.msk [vmem:[%s199 + $0x308] sm:$0xf] %vm4368, %v4050
      %4564 = vst.msk [vmem:[%s199 + $0x30c] sm:$0xf] %vm4368, %v4051
      %4565 = vst.msk [vmem:[%s199 + $0x310] sm:$0xf] %vm4368, %v4052
      %4566 = vst.msk [vmem:[%s199 + $0x314] sm:$0xf] %vm4368, %v4053
      %4567 = vst.msk [vmem:[%s199 + $0x318] sm:$0xf] %vm4368, %v4054
      %4568 = vst.msk [vmem:[%s199 + $0x31c] sm:$0xf] %vm4368, %v4055
      %4569 = vst.msk [vmem:[%s199 + $0x320] sm:$0xf] %vm4368, %v4056
      %4570 = vst.msk [vmem:[%s199 + $0x324] sm:$0xf] %vm4368, %v4057
      %4571 = vst.msk [vmem:[%s199 + $0x328] sm:$0xf] %vm4368, %v4058
      %4572 = vst.msk [vmem:[%s199 + $0x32c] sm:$0xf] %vm4368, %v4059
      %4573 = vst.msk [vmem:[%s199 + $0x330] sm:$0xf] %vm4368, %v4060
      %4574 = vst.msk [vmem:[%s199 + $0x334] sm:$0xf] %vm4368, %v4061
      %4575 = vst.msk [vmem:[%s199 + $0x338] sm:$0xf] %vm4368, %v4062
      %4576 = vst.msk [vmem:[%s199 + $0x33c] sm:$0xf] %vm4368, %v4063
      %4577 = vst.msk [vmem:[%s199 + $0x340] sm:$0xf] %vm4368, %v4064
      %4578 = vst.msk [vmem:[%s199 + $0x344] sm:$0xf] %vm4368, %v4065
      %4579 = vst.msk [vmem:[%s199 + $0x348] sm:$0xf] %vm4368, %v4066
      %4580 = vst.msk [vmem:[%s199 + $0x34c] sm:$0xf] %vm4368, %v4067
      %4581 = vst.msk [vmem:[%s199 + $0x350] sm:$0xf] %vm4368, %v4068
      %4582 = vst.msk [vmem:[%s199 + $0x354] sm:$0xf] %vm4368, %v4069
      %4583 = vst.msk [vmem:[%s199 + $0x358] sm:$0xf] %vm4368, %v4070
      %4584 = vst.msk [vmem:[%s199 + $0x35c] sm:$0xf] %vm4368, %v4071
      %4585 = vst.msk [vmem:[%s199 + $0x360] sm:$0xf] %vm4368, %v4072
      %4586 = vst.msk [vmem:[%s199 + $0x364] sm:$0xf] %vm4368, %v4073
      %4587 = vst.msk [vmem:[%s199 + $0x368] sm:$0xf] %vm4368, %v4074
      %4588 = vst.msk [vmem:[%s199 + $0x36c] sm:$0xf] %vm4368, %v4075
      %4589 = vst.msk [vmem:[%s199 + $0x370] sm:$0xf] %vm4368, %v4076
      %4590 = vst.msk [vmem:[%s199 + $0x374] sm:$0xf] %vm4368, %v4077
      %4591 = vst.msk [vmem:[%s199 + $0x378] sm:$0xf] %vm4368, %v4078
      %4592 = vst.msk [vmem:[%s199 + $0x37c] sm:$0xf] %vm4368, %v4079
      %4593 = vst.msk [vmem:[%s199 + $0x380] sm:$0xf] %vm4368, %v4080
      %4594 = vst.msk [vmem:[%s199 + $0x384] sm:$0xf] %vm4368, %v4081
      %4595 = vst.msk [vmem:[%s199 + $0x388] sm:$0xf] %vm4368, %v4082
      %4596 = vst.msk [vmem:[%s199 + $0x38c] sm:$0xf] %vm4368, %v4083
      %4597 = vst.msk [vmem:[%s199 + $0x390] sm:$0xf] %vm4368, %v4084
      %4598 = vst.msk [vmem:[%s199 + $0x394] sm:$0xf] %vm4368, %v4085
      %4599 = vst.msk [vmem:[%s199 + $0x398] sm:$0xf] %vm4368, %v4086
      %4600 = vst.msk [vmem:[%s199 + $0x39c] sm:$0xf] %vm4368, %v4087
      %4601 = vst.msk [vmem:[%s199 + $0x3a0] sm:$0xf] %vm4368, %v4088
      %4602 = vst.msk [vmem:[%s199 + $0x3a4] sm:$0xf] %vm4368, %v4089
      %4603 = vst.msk [vmem:[%s199 + $0x3a8] sm:$0xf] %vm4368, %v4090
      %4604 = vst.msk [vmem:[%s199 + $0x3ac] sm:$0xf] %vm4368, %v4091
      %4605 = vst.msk [vmem:[%s199 + $0x3b0] sm:$0xf] %vm4368, %v4092
      %4606 = vst.msk [vmem:[%s199 + $0x3b4] sm:$0xf] %vm4368, %v4093
      %4607 = vst.msk [vmem:[%s199 + $0x3b8] sm:$0xf] %vm4368, %v4094
      %4608 = vst.msk [vmem:[%s199 + $0x3bc] sm:$0xf] %vm4368, %v4095
      %4609 = vst.msk [vmem:[%s199 + $0x3c0] sm:$0xf] %vm4368, %v4096
      %4610 = vst.msk [vmem:[%s199 + $0x3c4] sm:$0xf] %vm4368, %v4097
      %4611 = vst.msk [vmem:[%s199 + $0x3c8] sm:$0xf] %vm4368, %v4098
      %4612 = vst.msk [vmem:[%s199 + $0x3cc] sm:$0xf] %vm4368, %v4099
      %4613 = vst.msk [vmem:[%s199 + $0x3d0] sm:$0xf] %vm4368, %v4100
      %4614 = vst.msk [vmem:[%s199 + $0x3d4] sm:$0xf] %vm4368, %v4101
      %4615 = vst.msk [vmem:[%s199 + $0x3d8] sm:$0xf] %vm4368, %v4102
      %4616 = vst.msk [vmem:[%s199 + $0x3dc] sm:$0xf] %vm4368, %v4103
      %4617 = vst.msk [vmem:[%s199 + $0x3e0] sm:$0xf] %vm4368, %v4104
      %4618 = vst.msk [vmem:[%s199 + $0x3e4] sm:$0xf] %vm4368, %v4105
      %4619 = vst.msk [vmem:[%s199 + $0x3e8] sm:$0xf] %vm4368, %v4106
      %4620 = vst.msk [vmem:[%s199 + $0x3ec] sm:$0xf] %vm4368, %v4107
      %4621 = vst.msk [vmem:[%s199 + $0x3f0] sm:$0xf] %vm4368, %v4108
      %4622 = vst.msk [vmem:[%s199 + $0x3f4] sm:$0xf] %vm4368, %v4109
      %4623 = vst.msk [vmem:[%s199 + $0x3f8] sm:$0xf] %vm4368, %v4110
      %4624 = vst.msk [vmem:[%s199 + $0x3fc] sm:$0xf] %vm4368, %v4111
      %s4625 = smul.u32 256, %s15
      %p4626 = scmp.lt.s32.totalorder %s4625, 2047
      %s4627 = scalar_select %p4626, %s4625, 2047
      %s4628 = smul.addr %s4627, 4
      %s4629 = scalar_lea.vmem %s4, %s4628
      // Predicated region
      $region37: #{fn.1} parent=35 // pred_check
        %p4630 = pneg %p122
      $region38: #{fn.1} parent=35 // pred_check_branch
        %4632 = sbr.rel (%p4630) target = $region40
      $region39: #{fn.1} parent=35 // pred_region
        %s4633 = smul.u32 256, %s15
      $region40: #{fn.1} parent=35 // pred_fallthru
        _
    $region36: #{fn.1} parent=5 // pred_fallthru
      _
    %p4634 = scmp.le.s32.totalorder 2, %s10
    // Predicated region
    $region41: #{fn.1} parent=5 // pred_check
      %p4635 = pneg %p4634
    $region42: #{fn.1} parent=5 // pred_check_branch
      %4637 = sbr.rel (%p4635) target = $region44
    $region43: #{fn.1} parent=5 // pred_region
      %s4638 = ssub.s32 %s10, 2
      // Predicated region
      $region45: #{fn.1} parent=43 // pred_check
        %p4639 = pneg %p128
      $region46: #{fn.1} parent=43 // pred_check_branch
        %4641 = sbr.rel (%p4639) target = $region48
      $region47: #{fn.1} parent=43 // pred_region
        %s4642 = smul.u32 256, %s16
        %p4643 = scmp.lt.s32.totalorder %s4642, 2047
        %s4644 = scalar_select %p4643, %s4642, 2047
        %s4645 = smul.addr %s4644, 4
        %s4646 = scalar_lea.vmem %s4, %s4645
      $region48: #{fn.1} parent=43 // pred_fallthru
        _
    $region44: #{fn.1} parent=5 // pred_fallthru
      _
  $region6: #{fn.1} parent=0 // loop_footer
    %s14 = sadd.s32 1, %s10
  $region7: #{fn.1} parent=0 // loop_footer_branch
    %9 = sbr.rel target = $region3
  $region8: #{fn.1} parent=0 // loop_exit
    _

</llo_original>
